<compile_context>
chip_gen: v6e
topology: v6e:2x2x1
jax: 0.10.0
libtpu: 0.0.40
codegen_flags: <defaults>
</compile_context>

<pallas_src>
import jax
import jax.numpy as jnp
from jax.experimental import pallas as pl
from jax.experimental.pallas import tpu as pltpu

# Hidden-layer widths from the PyTorch module definition.
HIDDEN = [600, 550, 500, 450, 400, 350, 300, 200, 150, 100, 50, 25]


def _round_up(n, m):
    return ((n + m - 1) // m) * m


def mlp_kernel(x_ref, *refs):
    """Fused MLP forward for one batch tile.

    refs = (w0, b0, w1, b1, ..., w12, b12, out_ref)
    Weights are bf16 (MXU-native); accumulation and bias/ReLU are f32.
    """
    out_ref = refs[-1]
    params = refs[:-1]
    n_layers = len(params) // 2

    h = x_ref[...].astype(jnp.float32)
    for i in range(n_layers):
        w = params[2 * i][...]          # bf16 (in_dim, out_dim)
        b = params[2 * i + 1][...]      # f32  (1, out_dim)
        h = jnp.dot(h.astype(jnp.bfloat16), w,
                    preferred_element_type=jnp.float32) + b
        if i < n_layers - 1:
            h = jnp.maximum(h, 0.0)     # ReLU
        # nn.Dropout is identity at inference time (no-op here).
    out_ref[...] = h.astype(out_ref.dtype)


def init_params(key, in_feature, out_feature):
    """Deterministic Kaiming-uniform-like init (matches nn.Linear shapes).

    Weights are stored pre-transposed as (in_dim, out_dim) in bfloat16;
    biases as (1, out_dim) rows in float32.
    """
    dims = [in_feature] + HIDDEN + [out_feature]
    params = []
    for i in range(len(dims) - 1):
        d_in, d_out = dims[i], dims[i + 1]
        key, kw, kb = jax.random.split(key, 3)
        bound = 1.0 / float(d_in) ** 0.5
        w = jax.random.uniform(kw, (d_in, d_out), jnp.float32,
                               -bound, bound).astype(jnp.bfloat16)
        b = jax.random.uniform(kb, (1, d_out), jnp.float32, -bound, bound)
        params.append((w, b))
    return params


def base_model_forward(x, params, tile_m=128):
    batch, in_feature = x.shape
    out_feature = params[-1][0].shape[1]

    # Choose the batch tile: 128-row tiles for large batches (good MXU row
    # occupancy), otherwise one tile covering the (sublane-padded) batch.
    if batch >= tile_m:
        padded_batch = _round_up(batch, tile_m)
        tm = tile_m
    else:
        padded_batch = _round_up(batch, 8)
        tm = padded_batch
    if padded_batch != batch:
        x = jnp.pad(x, ((0, padded_batch - batch), (0, 0)))

    flat_params = []
    in_specs = [pl.BlockSpec((tm, in_feature), lambda i: (i, 0))]
    for w, b in params:
        flat_params.extend([w, b])
        # Constant index_map -> weights/biases DMA'd once, resident across tiles.
        in_specs.append(pl.BlockSpec(w.shape, lambda i: (0, 0)))
        in_specs.append(pl.BlockSpec(b.shape, lambda i: (0, 0)))

    out = pl.pallas_call(
        mlp_kernel,
        out_shape=jax.ShapeDtypeStruct((padded_batch, out_feature), jnp.float32),
        grid_spec=pltpu.PrefetchScalarGridSpec(
            num_scalar_prefetch=0,
            grid=(padded_batch // tm,),
            in_specs=in_specs,
            out_specs=pl.BlockSpec((tm, out_feature), lambda i: (i, 0)),
        ),
        compiler_params=pltpu.CompilerParams(
            dimension_semantics=("parallel",),   # shards batch across v7x's 2 TCs
            vmem_limit_bytes=24 << 20,           # ~6 MiB actually needed; v7x-safe
        ),
    )(x, *flat_params)
    return out[:batch]


def base_model_ref(x, params):
    """Pure-JAX reference with the same precision pipeline (bf16 matmuls, f32 acc)."""
    h = x.astype(jnp.float32)
    n = len(params)
    for i, (w, b) in enumerate(params):
        h = jnp.dot(h.astype(jnp.bfloat16), w,
                    preferred_element_type=jnp.float32) + b
        if i < n - 1:
            h = jnp.maximum(h, 0.0)
    return h


if __name__ == "__main__":
    in_feature = 32
    out_feature = 15

    key = jax.random.PRNGKey(0)
    key, kx = jax.random.split(key)
    params = init_params(key, in_feature, out_feature)

    # Small batch (single-tile path).
    x_small = jax.random.normal(kx, (8, in_feature), jnp.float32)
    out_small = jax.block_until_ready(base_model_forward(x_small, params))
    ref_small = base_model_ref(x_small, params)
    assert out_small.shape == (8, out_feature)
    assert jnp.allclose(out_small, ref_small, atol=1e-2, rtol=1e-2), \
        "small-batch mismatch vs reference"

    # Larger batch (multi-tile grid path with resident weights).
    key, kx2 = jax.random.split(key)
    x_big = jax.random.normal(kx2, (256, in_feature), jnp.float32)
    out_big = jax.block_until_ready(base_model_forward(x_big, params))
    ref_big = base_model_ref(x_big, params)
    assert out_big.shape == (256, out_feature)
    assert jnp.allclose(out_big, ref_big, atol=1e-2, rtol=1e-2), \
        "large-batch mismatch vs reference"

    print("KERNEL_OK")
</pallas_src>

<mosaic_0001>
module attributes {stable_mosaic.version = 11 : i64} {
  func.func @mlp_kernel(%arg0: i32, %arg1: memref<8x32xf32, #tpu.memory_space<vmem>>, %arg2: memref<32x600xbf16, #tpu.memory_space<vmem>>, %arg3: memref<1x600xf32, #tpu.memory_space<vmem>>, %arg4: memref<600x550xbf16, #tpu.memory_space<vmem>>, %arg5: memref<1x550xf32, #tpu.memory_space<vmem>>, %arg6: memref<550x500xbf16, #tpu.memory_space<vmem>>, %arg7: memref<1x500xf32, #tpu.memory_space<vmem>>, %arg8: memref<500x450xbf16, #tpu.memory_space<vmem>>, %arg9: memref<1x450xf32, #tpu.memory_space<vmem>>, %arg10: memref<450x400xbf16, #tpu.memory_space<vmem>>, %arg11: memref<1x400xf32, #tpu.memory_space<vmem>>, %arg12: memref<400x350xbf16, #tpu.memory_space<vmem>>, %arg13: memref<1x350xf32, #tpu.memory_space<vmem>>, %arg14: memref<350x300xbf16, #tpu.memory_space<vmem>>, %arg15: memref<1x300xf32, #tpu.memory_space<vmem>>, %arg16: memref<300x200xbf16, #tpu.memory_space<vmem>>, %arg17: memref<1x200xf32, #tpu.memory_space<vmem>>, %arg18: memref<200x150xbf16, #tpu.memory_space<vmem>>, %arg19: memref<1x150xf32, #tpu.memory_space<vmem>>, %arg20: memref<150x100xbf16, #tpu.memory_space<vmem>>, %arg21: memref<1x100xf32, #tpu.memory_space<vmem>>, %arg22: memref<100x50xbf16, #tpu.memory_space<vmem>>, %arg23: memref<1x50xf32, #tpu.memory_space<vmem>>, %arg24: memref<50x25xbf16, #tpu.memory_space<vmem>>, %arg25: memref<1x25xf32, #tpu.memory_space<vmem>>, %arg26: memref<25x15xbf16, #tpu.memory_space<vmem>>, %arg27: memref<1x15xf32, #tpu.memory_space<vmem>>, %arg28: memref<8x15xf32, #tpu.memory_space<vmem>>) attributes {dimension_semantics = [#tpu.dimension_semantics<parallel>], iteration_bounds = array<i64: 1>, scalar_prefetch = 0 : i64, scratch_operands = 0 : i64, tpu.core_type = #tpu.core_type<tc>, window_params = [{transform_indices = @transform_0, window_bounds = array<i64: 8, 32>}, {pipeline_mode = #tpu.pipeline_mode<synchronous>, transform_indices = @transform_1, window_bounds = array<i64: 32, 600>}, {pipeline_mode = #tpu.pipeline_mode<synchronous>, transform_indices = @transform_2, window_bounds = array<i64: 1, 600>}, {pipeline_mode = #tpu.pipeline_mode<synchronous>, transform_indices = @transform_3, window_bounds = array<i64: 600, 550>}, {pipeline_mode = #tpu.pipeline_mode<synchronous>, transform_indices = @transform_4, window_bounds = array<i64: 1, 550>}, {pipeline_mode = #tpu.pipeline_mode<synchronous>, transform_indices = @transform_5, window_bounds = array<i64: 550, 500>}, {pipeline_mode = #tpu.pipeline_mode<synchronous>, transform_indices = @transform_6, window_bounds = array<i64: 1, 500>}, {pipeline_mode = #tpu.pipeline_mode<synchronous>, transform_indices = @transform_7, window_bounds = array<i64: 500, 450>}, {pipeline_mode = #tpu.pipeline_mode<synchronous>, transform_indices = @transform_8, window_bounds = array<i64: 1, 450>}, {pipeline_mode = #tpu.pipeline_mode<synchronous>, transform_indices = @transform_9, window_bounds = array<i64: 450, 400>}, {pipeline_mode = #tpu.pipeline_mode<synchronous>, transform_indices = @transform_10, window_bounds = array<i64: 1, 400>}, {pipeline_mode = #tpu.pipeline_mode<synchronous>, transform_indices = @transform_11, window_bounds = array<i64: 400, 350>}, {pipeline_mode = #tpu.pipeline_mode<synchronous>, transform_indices = @transform_12, window_bounds = array<i64: 1, 350>}, {pipeline_mode = #tpu.pipeline_mode<synchronous>, transform_indices = @transform_13, window_bounds = array<i64: 350, 300>}, {pipeline_mode = #tpu.pipeline_mode<synchronous>, transform_indices = @transform_14, window_bounds = array<i64: 1, 300>}, {pipeline_mode = #tpu.pipeline_mode<synchronous>, transform_indices = @transform_15, window_bounds = array<i64: 300, 200>}, {pipeline_mode = #tpu.pipeline_mode<synchronous>, transform_indices = @transform_16, window_bounds = array<i64: 1, 200>}, {pipeline_mode = #tpu.pipeline_mode<synchronous>, transform_indices = @transform_17, window_bounds = array<i64: 200, 150>}, {pipeline_mode = #tpu.pipeline_mode<synchronous>, transform_indices = @transform_18, window_bounds = array<i64: 1, 150>}, {pipeline_mode = #tpu.pipeline_mode<synchronous>, transform_indices = @transform_19, window_bounds = array<i64: 150, 100>}, {pipeline_mode = #tpu.pipeline_mode<synchronous>, transform_indices = @transform_20, window_bounds = array<i64: 1, 100>}, {pipeline_mode = #tpu.pipeline_mode<synchronous>, transform_indices = @transform_21, window_bounds = array<i64: 100, 50>}, {pipeline_mode = #tpu.pipeline_mode<synchronous>, transform_indices = @transform_22, window_bounds = array<i64: 1, 50>}, {pipeline_mode = #tpu.pipeline_mode<synchronous>, transform_indices = @transform_23, window_bounds = array<i64: 50, 25>}, {pipeline_mode = #tpu.pipeline_mode<synchronous>, transform_indices = @transform_24, window_bounds = array<i64: 1, 25>}, {pipeline_mode = #tpu.pipeline_mode<synchronous>, transform_indices = @transform_25, window_bounds = array<i64: 25, 15>}, {pipeline_mode = #tpu.pipeline_mode<synchronous>, transform_indices = @transform_26, window_bounds = array<i64: 1, 15>}, {transform_indices = @transform_27, window_bounds = array<i64: 8, 15>}]} {
    %c0 = arith.constant 0 : index
    %c0_0 = arith.constant 0 : index
    %0 = vector.load %arg1[%c0, %c0_0] : memref<8x32xf32, #tpu.memory_space<vmem>>, vector<8x32xf32>
    %c0_1 = arith.constant 0 : index
    %c0_2 = arith.constant 0 : index
    %1 = vector.load %arg2[%c0_1, %c0_2] : memref<32x600xbf16, #tpu.memory_space<vmem>>, vector<32x600xbf16>
    %c0_3 = arith.constant 0 : index
    %c0_4 = arith.constant 0 : index
    %2 = vector.load %arg3[%c0_3, %c0_4] : memref<1x600xf32, #tpu.memory_space<vmem>>, vector<1x600xf32>
    %3 = arith.truncf %0 : vector<8x32xf32> to vector<8x32xbf16>
    %cst = arith.constant dense<0.000000e+00> : vector<8x600xf32>
    %4 = tpu.matmul %3, %1, %cst {dimension_numbers = #tpu.dot_dimension_numbers<[1], [0], [0], [1], [0, 0, 1, 1], [], []>} : vector<8x32xbf16>, vector<32x600xbf16>, vector<8x600xf32> -> vector<8x600xf32>
    %5 = vector.broadcast %2 : vector<1x600xf32> to vector<8x600xf32>
    %6 = arith.addf %4, %5 : vector<8x600xf32>
    %cst_5 = arith.constant 0.000000e+00 : f32
    %7 = vector.broadcast %cst_5 : f32 to vector<8x600xf32>
    %8 = arith.maximumf %6, %7 : vector<8x600xf32>
    %c0_6 = arith.constant 0 : index
    %c0_7 = arith.constant 0 : index
    %9 = vector.load %arg4[%c0_6, %c0_7] : memref<600x550xbf16, #tpu.memory_space<vmem>>, vector<600x550xbf16>
    %c0_8 = arith.constant 0 : index
    %c0_9 = arith.constant 0 : index
    %10 = vector.load %arg5[%c0_8, %c0_9] : memref<1x550xf32, #tpu.memory_space<vmem>>, vector<1x550xf32>
    %11 = arith.truncf %8 : vector<8x600xf32> to vector<8x600xbf16>
    %cst_10 = arith.constant dense<0.000000e+00> : vector<8x550xf32>
    %12 = tpu.matmul %11, %9, %cst_10 {dimension_numbers = #tpu.dot_dimension_numbers<[1], [0], [0], [1], [0, 0, 1, 1], [], []>} : vector<8x600xbf16>, vector<600x550xbf16>, vector<8x550xf32> -> vector<8x550xf32>
    %13 = vector.broadcast %10 : vector<1x550xf32> to vector<8x550xf32>
    %14 = arith.addf %12, %13 : vector<8x550xf32>
    %cst_11 = arith.constant 0.000000e+00 : f32
    %15 = vector.broadcast %cst_11 : f32 to vector<8x550xf32>
    %16 = arith.maximumf %14, %15 : vector<8x550xf32>
    %c0_12 = arith.constant 0 : index
    %c0_13 = arith.constant 0 : index
    %17 = vector.load %arg6[%c0_12, %c0_13] : memref<550x500xbf16, #tpu.memory_space<vmem>>, vector<550x500xbf16>
    %c0_14 = arith.constant 0 : index
    %c0_15 = arith.constant 0 : index
    %18 = vector.load %arg7[%c0_14, %c0_15] : memref<1x500xf32, #tpu.memory_space<vmem>>, vector<1x500xf32>
    %19 = arith.truncf %16 : vector<8x550xf32> to vector<8x550xbf16>
    %cst_16 = arith.constant dense<0.000000e+00> : vector<8x500xf32>
    %20 = tpu.matmul %19, %17, %cst_16 {dimension_numbers = #tpu.dot_dimension_numbers<[1], [0], [0], [1], [0, 0, 1, 1], [], []>} : vector<8x550xbf16>, vector<550x500xbf16>, vector<8x500xf32> -> vector<8x500xf32>
    %21 = vector.broadcast %18 : vector<1x500xf32> to vector<8x500xf32>
    %22 = arith.addf %20, %21 : vector<8x500xf32>
    %cst_17 = arith.constant 0.000000e+00 : f32
    %23 = vector.broadcast %cst_17 : f32 to vector<8x500xf32>
    %24 = arith.maximumf %22, %23 : vector<8x500xf32>
    %c0_18 = arith.constant 0 : index
    %c0_19 = arith.constant 0 : index
    %25 = vector.load %arg8[%c0_18, %c0_19] : memref<500x450xbf16, #tpu.memory_space<vmem>>, vector<500x450xbf16>
    %c0_20 = arith.constant 0 : index
    %c0_21 = arith.constant 0 : index
    %26 = vector.load %arg9[%c0_20, %c0_21] : memref<1x450xf32, #tpu.memory_space<vmem>>, vector<1x450xf32>
    %27 = arith.truncf %24 : vector<8x500xf32> to vector<8x500xbf16>
    %cst_22 = arith.constant dense<0.000000e+00> : vector<8x450xf32>
    %28 = tpu.matmul %27, %25, %cst_22 {dimension_numbers = #tpu.dot_dimension_numbers<[1], [0], [0], [1], [0, 0, 1, 1], [], []>} : vector<8x500xbf16>, vector<500x450xbf16>, vector<8x450xf32> -> vector<8x450xf32>
    %29 = vector.broadcast %26 : vector<1x450xf32> to vector<8x450xf32>
    %30 = arith.addf %28, %29 : vector<8x450xf32>
    %cst_23 = arith.constant 0.000000e+00 : f32
    %31 = vector.broadcast %cst_23 : f32 to vector<8x450xf32>
    %32 = arith.maximumf %30, %31 : vector<8x450xf32>
    %c0_24 = arith.constant 0 : index
    %c0_25 = arith.constant 0 : index
    %33 = vector.load %arg10[%c0_24, %c0_25] : memref<450x400xbf16, #tpu.memory_space<vmem>>, vector<450x400xbf16>
    %c0_26 = arith.constant 0 : index
    %c0_27 = arith.constant 0 : index
    %34 = vector.load %arg11[%c0_26, %c0_27] : memref<1x400xf32, #tpu.memory_space<vmem>>, vector<1x400xf32>
    %35 = arith.truncf %32 : vector<8x450xf32> to vector<8x450xbf16>
    %cst_28 = arith.constant dense<0.000000e+00> : vector<8x400xf32>
    %36 = tpu.matmul %35, %33, %cst_28 {dimension_numbers = #tpu.dot_dimension_numbers<[1], [0], [0], [1], [0, 0, 1, 1], [], []>} : vector<8x450xbf16>, vector<450x400xbf16>, vector<8x400xf32> -> vector<8x400xf32>
    %37 = vector.broadcast %34 : vector<1x400xf32> to vector<8x400xf32>
    %38 = arith.addf %36, %37 : vector<8x400xf32>
    %cst_29 = arith.constant 0.000000e+00 : f32
    %39 = vector.broadcast %cst_29 : f32 to vector<8x400xf32>
    %40 = arith.maximumf %38, %39 : vector<8x400xf32>
    %c0_30 = arith.constant 0 : index
    %c0_31 = arith.constant 0 : index
    %41 = vector.load %arg12[%c0_30, %c0_31] : memref<400x350xbf16, #tpu.memory_space<vmem>>, vector<400x350xbf16>
    %c0_32 = arith.constant 0 : index
    %c0_33 = arith.constant 0 : index
    %42 = vector.load %arg13[%c0_32, %c0_33] : memref<1x350xf32, #tpu.memory_space<vmem>>, vector<1x350xf32>
    %43 = arith.truncf %40 : vector<8x400xf32> to vector<8x400xbf16>
    %cst_34 = arith.constant dense<0.000000e+00> : vector<8x350xf32>
    %44 = tpu.matmul %43, %41, %cst_34 {dimension_numbers = #tpu.dot_dimension_numbers<[1], [0], [0], [1], [0, 0, 1, 1], [], []>} : vector<8x400xbf16>, vector<400x350xbf16>, vector<8x350xf32> -> vector<8x350xf32>
    %45 = vector.broadcast %42 : vector<1x350xf32> to vector<8x350xf32>
    %46 = arith.addf %44, %45 : vector<8x350xf32>
    %cst_35 = arith.constant 0.000000e+00 : f32
    %47 = vector.broadcast %cst_35 : f32 to vector<8x350xf32>
    %48 = arith.maximumf %46, %47 : vector<8x350xf32>
    %c0_36 = arith.constant 0 : index
    %c0_37 = arith.constant 0 : index
    %49 = vector.load %arg14[%c0_36, %c0_37] : memref<350x300xbf16, #tpu.memory_space<vmem>>, vector<350x300xbf16>
    %c0_38 = arith.constant 0 : index
    %c0_39 = arith.constant 0 : index
    %50 = vector.load %arg15[%c0_38, %c0_39] : memref<1x300xf32, #tpu.memory_space<vmem>>, vector<1x300xf32>
    %51 = arith.truncf %48 : vector<8x350xf32> to vector<8x350xbf16>
    %cst_40 = arith.constant dense<0.000000e+00> : vector<8x300xf32>
    %52 = tpu.matmul %51, %49, %cst_40 {dimension_numbers = #tpu.dot_dimension_numbers<[1], [0], [0], [1], [0, 0, 1, 1], [], []>} : vector<8x350xbf16>, vector<350x300xbf16>, vector<8x300xf32> -> vector<8x300xf32>
    %53 = vector.broadcast %50 : vector<1x300xf32> to vector<8x300xf32>
    %54 = arith.addf %52, %53 : vector<8x300xf32>
    %cst_41 = arith.constant 0.000000e+00 : f32
    %55 = vector.broadcast %cst_41 : f32 to vector<8x300xf32>
    %56 = arith.maximumf %54, %55 : vector<8x300xf32>
    %c0_42 = arith.constant 0 : index
    %c0_43 = arith.constant 0 : index
    %57 = vector.load %arg16[%c0_42, %c0_43] : memref<300x200xbf16, #tpu.memory_space<vmem>>, vector<300x200xbf16>
    %c0_44 = arith.constant 0 : index
    %c0_45 = arith.constant 0 : index
    %58 = vector.load %arg17[%c0_44, %c0_45] : memref<1x200xf32, #tpu.memory_space<vmem>>, vector<1x200xf32>
    %59 = arith.truncf %56 : vector<8x300xf32> to vector<8x300xbf16>
    %cst_46 = arith.constant dense<0.000000e+00> : vector<8x200xf32>
    %60 = tpu.matmul %59, %57, %cst_46 {dimension_numbers = #tpu.dot_dimension_numbers<[1], [0], [0], [1], [0, 0, 1, 1], [], []>} : vector<8x300xbf16>, vector<300x200xbf16>, vector<8x200xf32> -> vector<8x200xf32>
    %61 = vector.broadcast %58 : vector<1x200xf32> to vector<8x200xf32>
    %62 = arith.addf %60, %61 : vector<8x200xf32>
    %cst_47 = arith.constant 0.000000e+00 : f32
    %63 = vector.broadcast %cst_47 : f32 to vector<8x200xf32>
    %64 = arith.maximumf %62, %63 : vector<8x200xf32>
    %c0_48 = arith.constant 0 : index
    %c0_49 = arith.constant 0 : index
    %65 = vector.load %arg18[%c0_48, %c0_49] : memref<200x150xbf16, #tpu.memory_space<vmem>>, vector<200x150xbf16>
    %c0_50 = arith.constant 0 : index
    %c0_51 = arith.constant 0 : index
    %66 = vector.load %arg19[%c0_50, %c0_51] : memref<1x150xf32, #tpu.memory_space<vmem>>, vector<1x150xf32>
    %67 = arith.truncf %64 : vector<8x200xf32> to vector<8x200xbf16>
    %cst_52 = arith.constant dense<0.000000e+00> : vector<8x150xf32>
    %68 = tpu.matmul %67, %65, %cst_52 {dimension_numbers = #tpu.dot_dimension_numbers<[1], [0], [0], [1], [0, 0, 1, 1], [], []>} : vector<8x200xbf16>, vector<200x150xbf16>, vector<8x150xf32> -> vector<8x150xf32>
    %69 = vector.broadcast %66 : vector<1x150xf32> to vector<8x150xf32>
    %70 = arith.addf %68, %69 : vector<8x150xf32>
    %cst_53 = arith.constant 0.000000e+00 : f32
    %71 = vector.broadcast %cst_53 : f32 to vector<8x150xf32>
    %72 = arith.maximumf %70, %71 : vector<8x150xf32>
    %c0_54 = arith.constant 0 : index
    %c0_55 = arith.constant 0 : index
    %73 = vector.load %arg20[%c0_54, %c0_55] : memref<150x100xbf16, #tpu.memory_space<vmem>>, vector<150x100xbf16>
    %c0_56 = arith.constant 0 : index
    %c0_57 = arith.constant 0 : index
    %74 = vector.load %arg21[%c0_56, %c0_57] : memref<1x100xf32, #tpu.memory_space<vmem>>, vector<1x100xf32>
    %75 = arith.truncf %72 : vector<8x150xf32> to vector<8x150xbf16>
    %cst_58 = arith.constant dense<0.000000e+00> : vector<8x100xf32>
    %76 = tpu.matmul %75, %73, %cst_58 {dimension_numbers = #tpu.dot_dimension_numbers<[1], [0], [0], [1], [0, 0, 1, 1], [], []>} : vector<8x150xbf16>, vector<150x100xbf16>, vector<8x100xf32> -> vector<8x100xf32>
    %77 = vector.broadcast %74 : vector<1x100xf32> to vector<8x100xf32>
    %78 = arith.addf %76, %77 : vector<8x100xf32>
    %cst_59 = arith.constant 0.000000e+00 : f32
    %79 = vector.broadcast %cst_59 : f32 to vector<8x100xf32>
    %80 = arith.maximumf %78, %79 : vector<8x100xf32>
    %c0_60 = arith.constant 0 : index
    %c0_61 = arith.constant 0 : index
    %81 = vector.load %arg22[%c0_60, %c0_61] : memref<100x50xbf16, #tpu.memory_space<vmem>>, vector<100x50xbf16>
    %c0_62 = arith.constant 0 : index
    %c0_63 = arith.constant 0 : index
    %82 = vector.load %arg23[%c0_62, %c0_63] : memref<1x50xf32, #tpu.memory_space<vmem>>, vector<1x50xf32>
    %83 = arith.truncf %80 : vector<8x100xf32> to vector<8x100xbf16>
    %cst_64 = arith.constant dense<0.000000e+00> : vector<8x50xf32>
    %84 = tpu.matmul %83, %81, %cst_64 {dimension_numbers = #tpu.dot_dimension_numbers<[1], [0], [0], [1], [0, 0, 1, 1], [], []>} : vector<8x100xbf16>, vector<100x50xbf16>, vector<8x50xf32> -> vector<8x50xf32>
    %85 = vector.broadcast %82 : vector<1x50xf32> to vector<8x50xf32>
    %86 = arith.addf %84, %85 : vector<8x50xf32>
    %cst_65 = arith.constant 0.000000e+00 : f32
    %87 = vector.broadcast %cst_65 : f32 to vector<8x50xf32>
    %88 = arith.maximumf %86, %87 : vector<8x50xf32>
    %c0_66 = arith.constant 0 : index
    %c0_67 = arith.constant 0 : index
    %89 = vector.load %arg24[%c0_66, %c0_67] : memref<50x25xbf16, #tpu.memory_space<vmem>>, vector<50x25xbf16>
    %c0_68 = arith.constant 0 : index
    %c0_69 = arith.constant 0 : index
    %90 = vector.load %arg25[%c0_68, %c0_69] : memref<1x25xf32, #tpu.memory_space<vmem>>, vector<1x25xf32>
    %91 = arith.truncf %88 : vector<8x50xf32> to vector<8x50xbf16>
    %cst_70 = arith.constant dense<0.000000e+00> : vector<8x25xf32>
    %92 = tpu.matmul %91, %89, %cst_70 {dimension_numbers = #tpu.dot_dimension_numbers<[1], [0], [0], [1], [0, 0, 1, 1], [], []>} : vector<8x50xbf16>, vector<50x25xbf16>, vector<8x25xf32> -> vector<8x25xf32>
    %93 = vector.broadcast %90 : vector<1x25xf32> to vector<8x25xf32>
    %94 = arith.addf %92, %93 : vector<8x25xf32>
    %cst_71 = arith.constant 0.000000e+00 : f32
    %95 = vector.broadcast %cst_71 : f32 to vector<8x25xf32>
    %96 = arith.maximumf %94, %95 : vector<8x25xf32>
    %c0_72 = arith.constant 0 : index
    %c0_73 = arith.constant 0 : index
    %97 = vector.load %arg26[%c0_72, %c0_73] : memref<25x15xbf16, #tpu.memory_space<vmem>>, vector<25x15xbf16>
    %c0_74 = arith.constant 0 : index
    %c0_75 = arith.constant 0 : index
    %98 = vector.load %arg27[%c0_74, %c0_75] : memref<1x15xf32, #tpu.memory_space<vmem>>, vector<1x15xf32>
    %99 = arith.truncf %96 : vector<8x25xf32> to vector<8x25xbf16>
    %cst_76 = arith.constant dense<0.000000e+00> : vector<8x15xf32>
    %100 = tpu.matmul %99, %97, %cst_76 {dimension_numbers = #tpu.dot_dimension_numbers<[1], [0], [0], [1], [0, 0, 1, 1], [], []>} : vector<8x25xbf16>, vector<25x15xbf16>, vector<8x15xf32> -> vector<8x15xf32>
    %101 = vector.broadcast %98 : vector<1x15xf32> to vector<8x15xf32>
    %102 = arith.addf %100, %101 : vector<8x15xf32>
    %c0_77 = arith.constant 0 : index
    %c0_78 = arith.constant 0 : index
    %103 = vector.load %arg28[%c0_77, %c0_78] : memref<8x15xf32, #tpu.memory_space<vmem>>, vector<8x15xf32>
    tpu.vector_store %arg28[%c0_77, %c0_78], %102 {strides = array<i32>} : memref<8x15xf32, #tpu.memory_space<vmem>>, vector<8x15xf32>,
    return
  }
  func.func @transform_0(%arg0: i32) -> (i32, i32) {
    %c0_i32 = arith.constant 0 : i32
    %c0_i32_0 = arith.constant 0 : i32
    return %arg0, %c0_i32 : i32, i32
  }
  func.func @transform_1(%arg0: i32) -> (i32, i32) {
    %c0_i32 = arith.constant 0 : i32
    %c0_i32_0 = arith.constant 0 : i32
    %c0_i32_1 = arith.constant 0 : i32
    return %c0_i32, %c0_i32_0 : i32, i32
  }
  func.func @transform_2(%arg0: i32) -> (i32, i32) {
    %c0_i32 = arith.constant 0 : i32
    %c0_i32_0 = arith.constant 0 : i32
    %c0_i32_1 = arith.constant 0 : i32
    return %c0_i32, %c0_i32_0 : i32, i32
  }
  func.func @transform_3(%arg0: i32) -> (i32, i32) {
    %c0_i32 = arith.constant 0 : i32
    %c0_i32_0 = arith.constant 0 : i32
    %c0_i32_1 = arith.constant 0 : i32
    return %c0_i32, %c0_i32_0 : i32, i32
  }
  func.func @transform_4(%arg0: i32) -> (i32, i32) {
    %c0_i32 = arith.constant 0 : i32
    %c0_i32_0 = arith.constant 0 : i32
    %c0_i32_1 = arith.constant 0 : i32
    return %c0_i32, %c0_i32_0 : i32, i32
  }
  func.func @transform_5(%arg0: i32) -> (i32, i32) {
    %c0_i32 = arith.constant 0 : i32
    %c0_i32_0 = arith.constant 0 : i32
    %c0_i32_1 = arith.constant 0 : i32
    return %c0_i32, %c0_i32_0 : i32, i32
  }
  func.func @transform_6(%arg0: i32) -> (i32, i32) {
    %c0_i32 = arith.constant 0 : i32
    %c0_i32_0 = arith.constant 0 : i32
    %c0_i32_1 = arith.constant 0 : i32
    return %c0_i32, %c0_i32_0 : i32, i32
  }
  func.func @transform_7(%arg0: i32) -> (i32, i32) {
    %c0_i32 = arith.constant 0 : i32
    %c0_i32_0 = arith.constant 0 : i32
    %c0_i32_1 = arith.constant 0 : i32
    return %c0_i32, %c0_i32_0 : i32, i32
  }
  func.func @transform_8(%arg0: i32) -> (i32, i32) {
    %c0_i32 = arith.constant 0 : i32
    %c0_i32_0 = arith.constant 0 : i32
    %c0_i32_1 = arith.constant 0 : i32
    return %c0_i32, %c0_i32_0 : i32, i32
  }
  func.func @transform_9(%arg0: i32) -> (i32, i32) {
    %c0_i32 = arith.constant 0 : i32
    %c0_i32_0 = arith.constant 0 : i32
    %c0_i32_1 = arith.constant 0 : i32
    return %c0_i32, %c0_i32_0 : i32, i32
  }
  func.func @transform_10(%arg0: i32) -> (i32, i32) {
    %c0_i32 = arith.constant 0 : i32
    %c0_i32_0 = arith.constant 0 : i32
    %c0_i32_1 = arith.constant 0 : i32
    return %c0_i32, %c0_i32_0 : i32, i32
  }
  func.func @transform_11(%arg0: i32) -> (i32, i32) {
    %c0_i32 = arith.constant 0 : i32
    %c0_i32_0 = arith.constant 0 : i32
    %c0_i32_1 = arith.constant 0 : i32
    return %c0_i32, %c0_i32_0 : i32, i32
  }
  func.func @transform_12(%arg0: i32) -> (i32, i32) {
    %c0_i32 = arith.constant 0 : i32
    %c0_i32_0 = arith.constant 0 : i32
    %c0_i32_1 = arith.constant 0 : i32
    return %c0_i32, %c0_i32_0 : i32, i32
  }
  func.func @transform_13(%arg0: i32) -> (i32, i32) {
    %c0_i32 = arith.constant 0 : i32
    %c0_i32_0 = arith.constant 0 : i32
    %c0_i32_1 = arith.constant 0 : i32
    return %c0_i32, %c0_i32_0 : i32, i32
  }
  func.func @transform_14(%arg0: i32) -> (i32, i32) {
    %c0_i32 = arith.constant 0 : i32
    %c0_i32_0 = arith.constant 0 : i32
    %c0_i32_1 = arith.constant 0 : i32
    return %c0_i32, %c0_i32_0 : i32, i32
  }
  func.func @transform_15(%arg0: i32) -> (i32, i32) {
    %c0_i32 = arith.constant 0 : i32
    %c0_i32_0 = arith.constant 0 : i32
    %c0_i32_1 = arith.constant 0 : i32
    return %c0_i32, %c0_i32_0 : i32, i32
  }
  func.func @transform_16(%arg0: i32) -> (i32, i32) {
    %c0_i32 = arith.constant 0 : i32
    %c0_i32_0 = arith.constant 0 : i32
    %c0_i32_1 = arith.constant 0 : i32
    return %c0_i32, %c0_i32_0 : i32, i32
  }
  func.func @transform_17(%arg0: i32) -> (i32, i32) {
    %c0_i32 = arith.constant 0 : i32
    %c0_i32_0 = arith.constant 0 : i32
    %c0_i32_1 = arith.constant 0 : i32
    return %c0_i32, %c0_i32_0 : i32, i32
  }
  func.func @transform_18(%arg0: i32) -> (i32, i32) {
    %c0_i32 = arith.constant 0 : i32
    %c0_i32_0 = arith.constant 0 : i32
    %c0_i32_1 = arith.constant 0 : i32
    return %c0_i32, %c0_i32_0 : i32, i32
  }
  func.func @transform_19(%arg0: i32) -> (i32, i32) {
    %c0_i32 = arith.constant 0 : i32
    %c0_i32_0 = arith.constant 0 : i32
    %c0_i32_1 = arith.constant 0 : i32
    return %c0_i32, %c0_i32_0 : i32, i32
  }
  func.func @transform_20(%arg0: i32) -> (i32, i32) {
    %c0_i32 = arith.constant 0 : i32
    %c0_i32_0 = arith.constant 0 : i32
    %c0_i32_1 = arith.constant 0 : i32
    return %c0_i32, %c0_i32_0 : i32, i32
  }
  func.func @transform_21(%arg0: i32) -> (i32, i32) {
    %c0_i32 = arith.constant 0 : i32
    %c0_i32_0 = arith.constant 0 : i32
    %c0_i32_1 = arith.constant 0 : i32
    return %c0_i32, %c0_i32_0 : i32, i32
  }
  func.func @transform_22(%arg0: i32) -> (i32, i32) {
    %c0_i32 = arith.constant 0 : i32
    %c0_i32_0 = arith.constant 0 : i32
    %c0_i32_1 = arith.constant 0 : i32
    return %c0_i32, %c0_i32_0 : i32, i32
  }
  func.func @transform_23(%arg0: i32) -> (i32, i32) {
    %c0_i32 = arith.constant 0 : i32
    %c0_i32_0 = arith.constant 0 : i32
    %c0_i32_1 = arith.constant 0 : i32
    return %c0_i32, %c0_i32_0 : i32, i32
  }
  func.func @transform_24(%arg0: i32) -> (i32, i32) {
    %c0_i32 = arith.constant 0 : i32
    %c0_i32_0 = arith.constant 0 : i32
    %c0_i32_1 = arith.constant 0 : i32
    return %c0_i32, %c0_i32_0 : i32, i32
  }
  func.func @transform_25(%arg0: i32) -> (i32, i32) {
    %c0_i32 = arith.constant 0 : i32
    %c0_i32_0 = arith.constant 0 : i32
    %c0_i32_1 = arith.constant 0 : i32
    return %c0_i32, %c0_i32_0 : i32, i32
  }
  func.func @transform_26(%arg0: i32) -> (i32, i32) {
    %c0_i32 = arith.constant 0 : i32
    %c0_i32_0 = arith.constant 0 : i32
    %c0_i32_1 = arith.constant 0 : i32
    return %c0_i32, %c0_i32_0 : i32, i32
  }
  func.func @transform_27(%arg0: i32) -> (i32, i32) {
    %c0_i32 = arith.constant 0 : i32
    %c0_i32_0 = arith.constant 0 : i32
    return %arg0, %c0_i32 : i32, i32
  }
}

</mosaic_0001>

<llo_original>
// kernel: tpu_custom_call.1
$region0: #{tpu_custom_call.1}
  #allocation0 [shape = 'u32[]', space=smem, size = 0x4, offset = 0x4, fixed_abs, tag = 'smem constant byte address 0x4 - core index']
  #allocation1 [shape = 'u32[144,128]{1,0:T(1,128)}', space=vmem, size = 0x12000, scoped, tag = 'internal scratch']
  %s0 = inlined_call_operand.vmem [shape: f32[8,32], index: 0, kind: input, shape index: {}]
  %s1 = inlined_call_operand.vmem [shape: bf16[32,600], index: 1, kind: input, shape index: {}]
  %s2 = inlined_call_operand.vmem [shape: f32[1,600], index: 2, kind: input, shape index: {}]
  %s3 = inlined_call_operand.vmem [shape: bf16[600,550], index: 3, kind: input, shape index: {}]
  %s4 = inlined_call_operand.vmem [shape: f32[1,550], index: 4, kind: input, shape index: {}]
  %s5 = inlined_call_operand.vmem [shape: bf16[550,500], index: 5, kind: input, shape index: {}]
  %s6 = inlined_call_operand.vmem [shape: f32[1,500], index: 6, kind: input, shape index: {}]
  %s7 = inlined_call_operand.vmem [shape: bf16[500,450], index: 7, kind: input, shape index: {}]
  %s8 = inlined_call_operand.vmem [shape: f32[1,450], index: 8, kind: input, shape index: {}]
  %s9 = inlined_call_operand.vmem [shape: bf16[450,400], index: 9, kind: input, shape index: {}]
  %s10 = inlined_call_operand.vmem [shape: f32[1,400], index: 10, kind: input, shape index: {}]
  %s11 = inlined_call_operand.vmem [shape: bf16[400,350], index: 11, kind: input, shape index: {}]
  %s12 = inlined_call_operand.vmem [shape: f32[1,350], index: 12, kind: input, shape index: {}]
  %s13 = inlined_call_operand.vmem [shape: bf16[350,300], index: 13, kind: input, shape index: {}]
  %s14 = inlined_call_operand.vmem [shape: f32[1,300], index: 14, kind: input, shape index: {}]
  %s15 = inlined_call_operand.vmem [shape: bf16[300,200], index: 15, kind: input, shape index: {}]
  %s16 = inlined_call_operand.vmem [shape: f32[1,200], index: 16, kind: input, shape index: {}]
  %s17 = inlined_call_operand.vmem [shape: bf16[200,150], index: 17, kind: input, shape index: {}]
  %s18 = inlined_call_operand.vmem [shape: f32[1,150], index: 18, kind: input, shape index: {}]
  %s19 = inlined_call_operand.vmem [shape: bf16[150,100], index: 19, kind: input, shape index: {}]
  %s20 = inlined_call_operand.vmem [shape: f32[1,100], index: 20, kind: input, shape index: {}]
  %s21 = inlined_call_operand.vmem [shape: bf16[100,50], index: 21, kind: input, shape index: {}]
  %s22 = inlined_call_operand.vmem [shape: f32[1,50], index: 22, kind: input, shape index: {}]
  %s23 = inlined_call_operand.vmem [shape: bf16[50,25], index: 23, kind: input, shape index: {}]
  %s24 = inlined_call_operand.vmem [shape: f32[1,25], index: 24, kind: input, shape index: {}]
  %s25 = inlined_call_operand.vmem [shape: bf16[25,15], index: 25, kind: input, shape index: {}]
  %s26 = inlined_call_operand.vmem [shape: f32[1,15], index: 26, kind: input, shape index: {}]
  %s27 = inlined_call_operand.hbm [shape: f32[8,15], index: 27, kind: output, shape index: {}]
  %s28 = sld [smem:[#allocation0]]
  $region118: #{tpu_custom_call.1} parent=0
    _
  %s30 = ssub.s32 1, %s28
  %s31 = scalar_select 0, %s30, %s28
  $region1: #{tpu_custom_call.1} parent=0
    #allocation2 [shape = 'u8[4096]{0}', space=vmem, size = 0x1000, scoped, tag = 'output window, operand 0, single buffered']
    #allocation3 [shape = 's32[1]{0}', space=sflag, size = 0x4, scoped, tag = 'scoped memory for tpu_custom_call.1']
    %32 = vsyncpa [#allocation3], 0
    // Predicated region
    $region2: #{tpu_custom_call.1} parent=1 // pred_check
      _
    $region3: #{tpu_custom_call.1} parent=1 // pred_check_branch
      %34 = sbr.rel (0) target = $region5
    $region4: #{tpu_custom_call.1} parent=1 // pred_region
      _
    $region5: #{tpu_custom_call.1} parent=1 // pred_fallthru
      _
    // Predicated region
    $region6: #{tpu_custom_call.1} parent=1 // pred_check
      _
    $region7: #{tpu_custom_call.1} parent=1 // pred_check_branch
      %36 = sbr.rel (0) target = $region9
    $region8: #{tpu_custom_call.1} parent=1 // pred_region
      _
    $region9: #{tpu_custom_call.1} parent=1 // pred_fallthru
      _
    // Predicated region
    $region10: #{tpu_custom_call.1} parent=1 // pred_check
      _
    $region11: #{tpu_custom_call.1} parent=1 // pred_check_branch
      %38 = sbr.rel (0) target = $region13
    $region12: #{tpu_custom_call.1} parent=1 // pred_region
      _
    $region13: #{tpu_custom_call.1} parent=1 // pred_fallthru
      _
    // Predicated region
    $region14: #{tpu_custom_call.1} parent=1 // pred_check
      _
    $region15: #{tpu_custom_call.1} parent=1 // pred_check_branch
      %40 = sbr.rel (0) target = $region17
    $region16: #{tpu_custom_call.1} parent=1 // pred_region
      _
    $region17: #{tpu_custom_call.1} parent=1 // pred_fallthru
      _
    // Predicated region
    $region18: #{tpu_custom_call.1} parent=1 // pred_check
      _
    $region19: #{tpu_custom_call.1} parent=1 // pred_check_branch
      %42 = sbr.rel (0) target = $region21
    $region20: #{tpu_custom_call.1} parent=1 // pred_region
      _
    $region21: #{tpu_custom_call.1} parent=1 // pred_fallthru
      _
    // Predicated region
    $region22: #{tpu_custom_call.1} parent=1 // pred_check
      _
    $region23: #{tpu_custom_call.1} parent=1 // pred_check_branch
      %44 = sbr.rel (0) target = $region25
    $region24: #{tpu_custom_call.1} parent=1 // pred_region
      _
    $region25: #{tpu_custom_call.1} parent=1 // pred_fallthru
      _
    // Predicated region
    $region26: #{tpu_custom_call.1} parent=1 // pred_check
      _
    $region27: #{tpu_custom_call.1} parent=1 // pred_check_branch
      %46 = sbr.rel (0) target = $region29
    $region28: #{tpu_custom_call.1} parent=1 // pred_region
      _
    $region29: #{tpu_custom_call.1} parent=1 // pred_fallthru
      _
    // Predicated region
    $region30: #{tpu_custom_call.1} parent=1 // pred_check
      _
    $region31: #{tpu_custom_call.1} parent=1 // pred_check_branch
      %48 = sbr.rel (0) target = $region33
    $region32: #{tpu_custom_call.1} parent=1 // pred_region
      _
    $region33: #{tpu_custom_call.1} parent=1 // pred_fallthru
      _
    // Predicated region
    $region34: #{tpu_custom_call.1} parent=1 // pred_check
      _
    $region35: #{tpu_custom_call.1} parent=1 // pred_check_branch
      %50 = sbr.rel (0) target = $region37
    $region36: #{tpu_custom_call.1} parent=1 // pred_region
      _
    $region37: #{tpu_custom_call.1} parent=1 // pred_fallthru
      _
    // Predicated region
    $region38: #{tpu_custom_call.1} parent=1 // pred_check
      _
    $region39: #{tpu_custom_call.1} parent=1 // pred_check_branch
      %52 = sbr.rel (0) target = $region41
    $region40: #{tpu_custom_call.1} parent=1 // pred_region
      _
    $region41: #{tpu_custom_call.1} parent=1 // pred_fallthru
      _
    // Predicated region
    $region42: #{tpu_custom_call.1} parent=1 // pred_check
      _
    $region43: #{tpu_custom_call.1} parent=1 // pred_check_branch
      %54 = sbr.rel (0) target = $region45
    $region44: #{tpu_custom_call.1} parent=1 // pred_region
      _
    $region45: #{tpu_custom_call.1} parent=1 // pred_fallthru
      _
    // Predicated region
    $region46: #{tpu_custom_call.1} parent=1 // pred_check
      _
    $region47: #{tpu_custom_call.1} parent=1 // pred_check_branch
      %56 = sbr.rel (0) target = $region49
    $region48: #{tpu_custom_call.1} parent=1 // pred_region
      _
    $region49: #{tpu_custom_call.1} parent=1 // pred_fallthru
      _
    // Predicated region
    $region50: #{tpu_custom_call.1} parent=1 // pred_check
      _
    $region51: #{tpu_custom_call.1} parent=1 // pred_check_branch
      %58 = sbr.rel (0) target = $region53
    $region52: #{tpu_custom_call.1} parent=1 // pred_region
      _
    $region53: #{tpu_custom_call.1} parent=1 // pred_fallthru
      _
    // Predicated region
    $region54: #{tpu_custom_call.1} parent=1 // pred_check
      _
    $region55: #{tpu_custom_call.1} parent=1 // pred_check_branch
      %60 = sbr.rel (0) target = $region57
    $region56: #{tpu_custom_call.1} parent=1 // pred_region
      _
    $region57: #{tpu_custom_call.1} parent=1 // pred_fallthru
      _
    // Predicated region
    $region58: #{tpu_custom_call.1} parent=1 // pred_check
      _
    $region59: #{tpu_custom_call.1} parent=1 // pred_check_branch
      %62 = sbr.rel (0) target = $region61
    $region60: #{tpu_custom_call.1} parent=1 // pred_region
      _
    $region61: #{tpu_custom_call.1} parent=1 // pred_fallthru
      _
    // Predicated region
    $region62: #{tpu_custom_call.1} parent=1 // pred_check
      _
    $region63: #{tpu_custom_call.1} parent=1 // pred_check_branch
      %64 = sbr.rel (0) target = $region65
    $region64: #{tpu_custom_call.1} parent=1 // pred_region
      _
    $region65: #{tpu_custom_call.1} parent=1 // pred_fallthru
      _
    // Predicated region
    $region66: #{tpu_custom_call.1} parent=1 // pred_check
      _
    $region67: #{tpu_custom_call.1} parent=1 // pred_check_branch
      %66 = sbr.rel (0) target = $region69
    $region68: #{tpu_custom_call.1} parent=1 // pred_region
      _
    $region69: #{tpu_custom_call.1} parent=1 // pred_fallthru
      _
    // Predicated region
    $region70: #{tpu_custom_call.1} parent=1 // pred_check
      _
    $region71: #{tpu_custom_call.1} parent=1 // pred_check_branch
      %68 = sbr.rel (0) target = $region73
    $region72: #{tpu_custom_call.1} parent=1 // pred_region
      _
    $region73: #{tpu_custom_call.1} parent=1 // pred_fallthru
      _
    // Predicated region
    $region74: #{tpu_custom_call.1} parent=1 // pred_check
      _
    $region75: #{tpu_custom_call.1} parent=1 // pred_check_branch
      %70 = sbr.rel (0) target = $region77
    $region76: #{tpu_custom_call.1} parent=1 // pred_region
      _
    $region77: #{tpu_custom_call.1} parent=1 // pred_fallthru
      _
    // Predicated region
    $region78: #{tpu_custom_call.1} parent=1 // pred_check
      _
    $region79: #{tpu_custom_call.1} parent=1 // pred_check_branch
      %72 = sbr.rel (0) target = $region81
    $region80: #{tpu_custom_call.1} parent=1 // pred_region
      _
    $region81: #{tpu_custom_call.1} parent=1 // pred_fallthru
      _
    // Predicated region
    $region82: #{tpu_custom_call.1} parent=1 // pred_check
      _
    $region83: #{tpu_custom_call.1} parent=1 // pred_check_branch
      %74 = sbr.rel (0) target = $region85
    $region84: #{tpu_custom_call.1} parent=1 // pred_region
      _
    $region85: #{tpu_custom_call.1} parent=1 // pred_fallthru
      _
    // Predicated region
    $region86: #{tpu_custom_call.1} parent=1 // pred_check
      _
    $region87: #{tpu_custom_call.1} parent=1 // pred_check_branch
      %76 = sbr.rel (0) target = $region89
    $region88: #{tpu_custom_call.1} parent=1 // pred_region
      _
    $region89: #{tpu_custom_call.1} parent=1 // pred_fallthru
      _
    // Predicated region
    $region90: #{tpu_custom_call.1} parent=1 // pred_check
      _
    $region91: #{tpu_custom_call.1} parent=1 // pred_check_branch
      %78 = sbr.rel (0) target = $region93
    $region92: #{tpu_custom_call.1} parent=1 // pred_region
      _
    $region93: #{tpu_custom_call.1} parent=1 // pred_fallthru
      _
    // Predicated region
    $region94: #{tpu_custom_call.1} parent=1 // pred_check
      _
    $region95: #{tpu_custom_call.1} parent=1 // pred_check_branch
      %80 = sbr.rel (0) target = $region97
    $region96: #{tpu_custom_call.1} parent=1 // pred_region
      _
    $region97: #{tpu_custom_call.1} parent=1 // pred_fallthru
      _
    // Predicated region
    $region98: #{tpu_custom_call.1} parent=1 // pred_check
      _
    $region99: #{tpu_custom_call.1} parent=1 // pred_check_branch
      %82 = sbr.rel (0) target = $region101
    $region100: #{tpu_custom_call.1} parent=1 // pred_region
      _
    $region101: #{tpu_custom_call.1} parent=1 // pred_fallthru
      _
    // Predicated region
    $region102: #{tpu_custom_call.1} parent=1 // pred_check
      _
    $region103: #{tpu_custom_call.1} parent=1 // pred_check_branch
      %84 = sbr.rel (0) target = $region105
    $region104: #{tpu_custom_call.1} parent=1 // pred_region
      _
    $region105: #{tpu_custom_call.1} parent=1 // pred_fallthru
      _
    // Predicated region
    $region106: #{tpu_custom_call.1} parent=1 // pred_check
      _
    $region107: #{tpu_custom_call.1} parent=1 // pred_check_branch
      %86 = sbr.rel (0) target = $region109
    $region108: #{tpu_custom_call.1} parent=1 // pred_region
      _
    $region109: #{tpu_custom_call.1} parent=1 // pred_fallthru
      _
    %v88 = vld [vmem:[%s0] sm:$0xff]
    %v89 = vld [vmem:[%s1] sm:$0xff]
    %v90 = vld [vmem:[%s1 + $0x8] sm:$0xff]
    %v91 = vld [vmem:[%s1 + $0x10] sm:$0xf]
    %v92 = vld [vmem:[%s1 + $0x14] sm:$0xff]
    %v93 = vld [vmem:[%s1 + $0x1c] sm:$0xff]
    %v94 = vld [vmem:[%s1 + $0x24] sm:$0xf]
    %v95 = vld [vmem:[%s1 + $0x28] sm:$0xff]
    %v96 = vld [vmem:[%s1 + $0x30] sm:$0xff]
    %v97 = vld [vmem:[%s1 + $0x38] sm:$0xf]
    %v98 = vld [vmem:[%s1 + $0x3c] sm:$0xff]
    %v99 = vld [vmem:[%s1 + $0x44] sm:$0xff]
    %v100 = vld [vmem:[%s1 + $0x4c] sm:$0xf]
    %v101 = vld [vmem:[%s2] sm:$0x1f]
    %v102 = vpack.c.bf16 %v88, %v88
    %v104 = vlaneseq
    %v105 = vshrl.u32 %v104, 7
    %v106 = vsub.s32 0, %v105
    %v107 = vrot.slane %v101, %v106
    %v108 = vlaneseq
    %v109 = vshrl.u32 %v108, 7
    %v110 = vsub.s32 1, %v109
    %v111 = vrot.slane %v101, %v110
    %v112 = vlaneseq
    %v113 = vshrl.u32 %v112, 7
    %v114 = vsub.s32 2, %v113
    %v115 = vrot.slane %v101, %v114
    %v116 = vlaneseq
    %v117 = vshrl.u32 %v116, 7
    %v118 = vsub.s32 3, %v117
    %v119 = vrot.slane %v101, %v118
    %v120 = vlaneseq
    %v121 = vshrl.u32 %v120, 7
    %v122 = vsub.s32 4, %v121
    %v123 = vrot.slane %v101, %v122
    %v141 = vunpack.c.l.b16 %v89
    %v142 = vunpack.c.h.b16 %v89
    %v143 = vunpack.c.l.b16 %v90
    %v144 = vunpack.c.h.b16 %v90
    %v145 = vunpack.c.l.b16 %v91
    %v146 = vunpack.c.l.b16 %v92
    %v147 = vunpack.c.h.b16 %v92
    %v148 = vunpack.c.l.b16 %v93
    %v149 = vunpack.c.h.b16 %v93
    %v150 = vunpack.c.l.b16 %v94
    %v151 = vunpack.c.l.b16 %v95
    %v152 = vunpack.c.h.b16 %v95
    %v153 = vunpack.c.l.b16 %v96
    %v154 = vunpack.c.h.b16 %v96
    %v155 = vunpack.c.l.b16 %v97
    %v156 = vunpack.c.l.b16 %v98
    %v157 = vunpack.c.h.b16 %v98
    %v158 = vunpack.c.l.b16 %v99
    %v159 = vunpack.c.h.b16 %v99
    %v160 = vunpack.c.l.b16 %v100
    %v161 = vpack.c.b16 %v146, %v141
    %v162 = vpack.c.b16 %v147, %v142
    %v163 = vpack.c.b16 %v148, %v143
    %v164 = vpack.c.b16 %v149, %v144
    %v165 = vpack.c.b16 %v150, %v145
    %v166 = vpack.c.b16 %v156, %v151
    %v167 = vpack.c.b16 %v157, %v152
    %v168 = vpack.c.b16 %v158, %v153
    %v169 = vpack.c.b16 %v159, %v154
    %v170 = vpack.c.b16 %v160, %v155
    %vm181 = vcmask 261120
    %v183 = vsel %vm181, %v102, 0
    %185 = vmatprep.subr.bf16.mxu0 0
    %186 = vmatpush1.bf16.msra.mxu0 0
    %187 = vmatprep.subr.bf16.mxu0 0
    %188 = vmatpush1.bf16.msra.mxu0 0
    %189 = vmatprep.subr.bf16.mxu0 0
    %190 = vmatpush1.bf16.msra.mxu0 0
    %191 = vmatprep.subr.bf16.mxu0 0
    %192 = vmatpush1.bf16.msra.mxu0 0
    %193 = vmatprep.subr.bf16.mxu0 0
    %194 = vmatpush1.bf16.msra.mxu0 0
    %195 = vmatprep.subr.bf16.mxu0 0
    %196 = vmatpush1.bf16.msra.mxu0 0
    %197 = vmatprep.subr.bf16.mxu0 %v167
    %198 = vmatpush1.bf16.msra.mxu0 %v166
    %199 = vmatprep.subr.bf16.mxu0 %v162
    %200 = vmatpush1.bf16.msra.mxu0 %v161
    %201 = vmatprep.subr.bf16.mxu0 0
    %202 = vmatpush2.bf16.msra.mxu0 0
    %203 = vmatprep.subr.bf16.mxu0 0
    %204 = vmatpush2.bf16.msra.mxu0 0
    %205 = vmatprep.subr.bf16.mxu0 0
    %206 = vmatpush2.bf16.msra.mxu0 0
    %207 = vmatprep.subr.bf16.mxu0 0
    %208 = vmatpush2.bf16.msra.mxu0 0
    %209 = vmatprep.subr.bf16.mxu0 0
    %210 = vmatpush2.bf16.msra.mxu0 0
    %211 = vmatprep.subr.bf16.mxu0 0
    %212 = vmatpush2.bf16.msra.mxu0 0
    %213 = vmatprep.subr.bf16.mxu0 0
    %214 = vmatpush2.bf16.msra.mxu0 0
    %215 = vmatprep.subr.bf16.mxu0 0
    %216 = vmatpush2.bf16.msra.mxu0 0
    %217 = vmatprep.mubr.bf16.mxu0 0
    %218 = vmatmul.mubr.bf16.gmra.mxu0 %v183
    %v219 = vpop.f32.mrf.mxu0
    %v220 = vadd.f32 %v107, %v219
    %v221 = vpop.f32.mrf.mxu0
    %v222 = vadd.f32 %v111, %v221
    %v223 = vpop.f32.mrf.mxu0
    %v224 = vpop.f32.mrf.mxu0
    %225 = vdwg.mxu0
    %226 = vmatprep.subr.bf16.mxu0 0
    %227 = vmatpush1.bf16.msra.mxu0 0
    %228 = vmatprep.subr.bf16.mxu0 0
    %229 = vmatpush1.bf16.msra.mxu0 0
    %230 = vmatprep.subr.bf16.mxu0 0
    %231 = vmatpush1.bf16.msra.mxu0 0
    %232 = vmatprep.subr.bf16.mxu0 0
    %233 = vmatpush1.bf16.msra.mxu0 0
    %234 = vmatprep.subr.bf16.mxu0 0
    %235 = vmatpush1.bf16.msra.mxu0 0
    %236 = vmatprep.subr.bf16.mxu0 0
    %237 = vmatpush1.bf16.msra.mxu0 0
    %238 = vmatprep.subr.bf16.mxu0 %v169
    %239 = vmatpush1.bf16.msra.mxu0 %v168
    %240 = vmatprep.subr.bf16.mxu0 %v164
    %241 = vmatpush1.bf16.msra.mxu0 %v163
    %242 = vmatprep.subr.bf16.mxu0 0
    %243 = vmatpush2.bf16.msra.mxu0 0
    %244 = vmatprep.subr.bf16.mxu0 0
    %245 = vmatpush2.bf16.msra.mxu0 0
    %246 = vmatprep.subr.bf16.mxu0 0
    %247 = vmatpush2.bf16.msra.mxu0 0
    %248 = vmatprep.subr.bf16.mxu0 0
    %249 = vmatpush2.bf16.msra.mxu0 0
    %250 = vmatprep.subr.bf16.mxu0 0
    %251 = vmatpush2.bf16.msra.mxu0 0
    %252 = vmatprep.subr.bf16.mxu0 0
    %253 = vmatpush2.bf16.msra.mxu0 0
    %254 = vmatprep.subr.bf16.mxu0 0
    %255 = vmatpush2.bf16.msra.mxu0 0
    %256 = vmatprep.subr.bf16.mxu0 0
    %257 = vmatpush2.bf16.msra.mxu0 0
    %258 = vmatprep.mubr.bf16.mxu0 0
    %259 = vmatmul.mubr.bf16.gmra.mxu0 %v183
    %v260 = vpop.f32.mrf.mxu0
    %v261 = vadd.f32 %v115, %v260
    %v262 = vpop.f32.mrf.mxu0
    %v263 = vadd.f32 %v119, %v262
    %v264 = vpop.f32.mrf.mxu0
    %v265 = vpop.f32.mrf.mxu0
    %266 = vdwg.mxu0
    %267 = vmatprep.subr.bf16.mxu0 0
    %268 = vmatpush1.bf16.msra.mxu0 0
    %269 = vmatprep.subr.bf16.mxu0 0
    %270 = vmatpush1.bf16.msra.mxu0 0
    %271 = vmatprep.subr.bf16.mxu0 0
    %272 = vmatpush1.bf16.msra.mxu0 0
    %273 = vmatprep.subr.bf16.mxu0 0
    %274 = vmatpush1.bf16.msra.mxu0 0
    %275 = vmatprep.subr.bf16.mxu0 0
    %276 = vmatpush1.bf16.msra.mxu0 0
    %277 = vmatprep.subr.bf16.mxu0 0
    %278 = vmatpush1.bf16.msra.mxu0 0
    %279 = vmatprep.subr.bf16.mxu0 0
    %280 = vmatpush1.bf16.msra.mxu0 %v170
    %281 = vmatprep.subr.bf16.mxu0 0
    %282 = vmatpush1.bf16.msra.mxu0 %v165
    %283 = vmatprep.subr.bf16.mxu0 0
    %284 = vmatpush2.bf16.msra.mxu0 0
    %285 = vmatprep.subr.bf16.mxu0 0
    %286 = vmatpush2.bf16.msra.mxu0 0
    %287 = vmatprep.subr.bf16.mxu0 0
    %288 = vmatpush2.bf16.msra.mxu0 0
    %289 = vmatprep.subr.bf16.mxu0 0
    %290 = vmatpush2.bf16.msra.mxu0 0
    %291 = vmatprep.subr.bf16.mxu0 0
    %292 = vmatpush2.bf16.msra.mxu0 0
    %293 = vmatprep.subr.bf16.mxu0 0
    %294 = vmatpush2.bf16.msra.mxu0 0
    %295 = vmatprep.subr.bf16.mxu0 0
    %296 = vmatpush2.bf16.msra.mxu0 0
    %297 = vmatprep.subr.bf16.mxu0 0
    %298 = vmatpush2.bf16.msra.mxu0 0
    %299 = vmatprep.mubr.bf16.mxu0 0
    %300 = vmatmul.mubr.bf16.gmra.mxu0 %v183
    %v301 = vpop.f32.mrf.mxu0
    %v302 = vadd.f32 %v123, %v301
    %v303 = vpop.f32.mrf.mxu0
    %v304 = vpop.f32.mrf.mxu0
    %v305 = vpop.f32.mrf.mxu0
    %306 = vdwg.mxu0
    %v307 = vmax.f32 %v220, 0.0
    %v308 = vmax.f32 %v222, 0.0
    %v309 = vmax.f32 %v261, 0.0
    %v310 = vmax.f32 %v263, 0.0
    %v311 = vmax.f32 %v302, 0.0
    %v312 = vld [vmem:[%s3] sm:$0xff]
    %v313 = vld [vmem:[%s3 + $0x8] sm:$0xff]
    %v314 = vld [vmem:[%s3 + $0x10] sm:$0xf]
    %v315 = vld [vmem:[%s3 + $0x14] sm:$0xff]
    %v316 = vld [vmem:[%s3 + $0x1c] sm:$0xff]
    %v317 = vld [vmem:[%s3 + $0x24] sm:$0xf]
    %v318 = vld [vmem:[%s3 + $0x28] sm:$0xff]
    %v319 = vld [vmem:[%s3 + $0x30] sm:$0xff]
    %v320 = vld [vmem:[%s3 + $0x38] sm:$0xf]
    %v321 = vld [vmem:[%s3 + $0x3c] sm:$0xff]
    %v322 = vld [vmem:[%s3 + $0x44] sm:$0xff]
    %v323 = vld [vmem:[%s3 + $0x4c] sm:$0xf]
    %v324 = vld [vmem:[%s3 + $0x50] sm:$0xff]
    %v325 = vld [vmem:[%s3 + $0x58] sm:$0xff]
    %v326 = vld [vmem:[%s3 + $0x60] sm:$0xf]
    %v327 = vld [vmem:[%s3 + $0x64] sm:$0xff]
    %v328 = vld [vmem:[%s3 + $0x6c] sm:$0xff]
    %v329 = vld [vmem:[%s3 + $0x74] sm:$0xf]
    %v330 = vld [vmem:[%s3 + $0x78] sm:$0xff]
    %v331 = vld [vmem:[%s3 + $0x80] sm:$0xff]
    %v332 = vld [vmem:[%s3 + $0x88] sm:$0xf]
    %v333 = vld [vmem:[%s3 + $0x8c] sm:$0xff]
    %v334 = vld [vmem:[%s3 + $0x94] sm:$0xff]
    %v335 = vld [vmem:[%s3 + $0x9c] sm:$0xf]
    %v336 = vld [vmem:[%s3 + $0xa0] sm:$0xff]
    %v337 = vld [vmem:[%s3 + $0xa8] sm:$0xff]
    %v338 = vld [vmem:[%s3 + $0xb0] sm:$0xf]
    %v339 = vld [vmem:[%s3 + $0xb4] sm:$0xff]
    %v340 = vld [vmem:[%s3 + $0xbc] sm:$0xff]
    %v341 = vld [vmem:[%s3 + $0xc4] sm:$0xf]
    %v342 = vld [vmem:[%s3 + $0xc8] sm:$0xff]
    %v343 = vld [vmem:[%s3 + $0xd0] sm:$0xff]
    %v344 = vld [vmem:[%s3 + $0xd8] sm:$0xf]
    %v345 = vld [vmem:[%s3 + $0xdc] sm:$0xff]
    %v346 = vld [vmem:[%s3 + $0xe4] sm:$0xff]
    %v347 = vld [vmem:[%s3 + $0xec] sm:$0xf]
    %v348 = vld [vmem:[%s3 + $0xf0] sm:$0xff]
    %v349 = vld [vmem:[%s3 + $0xf8] sm:$0xff]
    %v350 = vld [vmem:[%s3 + $0x100] sm:$0xf]
    %v351 = vld [vmem:[%s3 + $0x104] sm:$0xff]
    %v352 = vld [vmem:[%s3 + $0x10c] sm:$0xff]
    %v353 = vld [vmem:[%s3 + $0x114] sm:$0xf]
    %v354 = vld [vmem:[%s3 + $0x118] sm:$0xff]
    %v355 = vld [vmem:[%s3 + $0x120] sm:$0xff]
    %v356 = vld [vmem:[%s3 + $0x128] sm:$0xf]
    %v357 = vld [vmem:[%s3 + $0x12c] sm:$0xff]
    %v358 = vld [vmem:[%s3 + $0x134] sm:$0xff]
    %v359 = vld [vmem:[%s3 + $0x13c] sm:$0xf]
    %v360 = vld [vmem:[%s3 + $0x140] sm:$0xff]
    %v361 = vld [vmem:[%s3 + $0x148] sm:$0xff]
    %v362 = vld [vmem:[%s3 + $0x150] sm:$0xf]
    %v363 = vld [vmem:[%s3 + $0x154] sm:$0xff]
    %v364 = vld [vmem:[%s3 + $0x15c] sm:$0xff]
    %v365 = vld [vmem:[%s3 + $0x164] sm:$0xf]
    %v366 = vld [vmem:[%s3 + $0x168] sm:$0xff]
    %v367 = vld [vmem:[%s3 + $0x170] sm:$0xff]
    %v368 = vld [vmem:[%s3 + $0x178] sm:$0xf]
    %v369 = vld [vmem:[%s3 + $0x17c] sm:$0xff]
    %v370 = vld [vmem:[%s3 + $0x184] sm:$0xff]
    %v371 = vld [vmem:[%s3 + $0x18c] sm:$0xf]
    %v372 = vld [vmem:[%s3 + $0x190] sm:$0xff]
    %v373 = vld [vmem:[%s3 + $0x198] sm:$0xff]
    %v374 = vld [vmem:[%s3 + $0x1a0] sm:$0xf]
    %v375 = vld [vmem:[%s3 + $0x1a4] sm:$0xff]
    %v376 = vld [vmem:[%s3 + $0x1ac] sm:$0xff]
    %v377 = vld [vmem:[%s3 + $0x1b4] sm:$0xf]
    %v378 = vld [vmem:[%s3 + $0x1b8] sm:$0xff]
    %v379 = vld [vmem:[%s3 + $0x1c0] sm:$0xff]
    %v380 = vld [vmem:[%s3 + $0x1c8] sm:$0xf]
    %v381 = vld [vmem:[%s3 + $0x1cc] sm:$0xff]
    %v382 = vld [vmem:[%s3 + $0x1d4] sm:$0xff]
    %v383 = vld [vmem:[%s3 + $0x1dc] sm:$0xf]
    %v384 = vld [vmem:[%s3 + $0x1e0] sm:$0xff]
    %v385 = vld [vmem:[%s3 + $0x1e8] sm:$0xff]
    %v386 = vld [vmem:[%s3 + $0x1f0] sm:$0xf]
    %v387 = vld [vmem:[%s3 + $0x1f4] sm:$0xff]
    %v388 = vld [vmem:[%s3 + $0x1fc] sm:$0xff]
    %v389 = vld [vmem:[%s3 + $0x204] sm:$0xf]
    %v390 = vld [vmem:[%s3 + $0x208] sm:$0xff]
    %v391 = vld [vmem:[%s3 + $0x210] sm:$0xff]
    %v392 = vld [vmem:[%s3 + $0x218] sm:$0xf]
    %v393 = vld [vmem:[%s3 + $0x21c] sm:$0xff]
    %v394 = vld [vmem:[%s3 + $0x224] sm:$0xff]
    %v395 = vld [vmem:[%s3 + $0x22c] sm:$0xf]
    %v396 = vld [vmem:[%s3 + $0x230] sm:$0xff]
    %v397 = vld [vmem:[%s3 + $0x238] sm:$0xff]
    %v398 = vld [vmem:[%s3 + $0x240] sm:$0xf]
    %v399 = vld [vmem:[%s3 + $0x244] sm:$0xff]
    %v400 = vld [vmem:[%s3 + $0x24c] sm:$0xff]
    %v401 = vld [vmem:[%s3 + $0x254] sm:$0xf]
    %v402 = vld [vmem:[%s3 + $0x258] sm:$0xff]
    %v403 = vld [vmem:[%s3 + $0x260] sm:$0xff]
    %v404 = vld [vmem:[%s3 + $0x268] sm:$0xf]
    %v405 = vld [vmem:[%s3 + $0x26c] sm:$0xff]
    %v406 = vld [vmem:[%s3 + $0x274] sm:$0xff]
    %v407 = vld [vmem:[%s3 + $0x27c] sm:$0xf]
    %v408 = vld [vmem:[%s3 + $0x280] sm:$0xff]
    %v409 = vld [vmem:[%s3 + $0x288] sm:$0xff]
    %v410 = vld [vmem:[%s3 + $0x290] sm:$0xf]
    %v411 = vld [vmem:[%s3 + $0x294] sm:$0xff]
    %v412 = vld [vmem:[%s3 + $0x29c] sm:$0xff]
    %v413 = vld [vmem:[%s3 + $0x2a4] sm:$0xf]
    %v414 = vld [vmem:[%s3 + $0x2a8] sm:$0xff]
    %v415 = vld [vmem:[%s3 + $0x2b0] sm:$0xff]
    %v416 = vld [vmem:[%s3 + $0x2b8] sm:$0xf]
    %v417 = vld [vmem:[%s3 + $0x2bc] sm:$0xff]
    %v418 = vld [vmem:[%s3 + $0x2c4] sm:$0xff]
    %v419 = vld [vmem:[%s3 + $0x2cc] sm:$0xf]
    %v420 = vld [vmem:[%s3 + $0x2d0] sm:$0xff]
    %v421 = vld [vmem:[%s3 + $0x2d8] sm:$0xff]
    %v422 = vld [vmem:[%s3 + $0x2e0] sm:$0xf]
    %v423 = vld [vmem:[%s3 + $0x2e4] sm:$0xff]
    %v424 = vld [vmem:[%s3 + $0x2ec] sm:$0xff]
    %v425 = vld [vmem:[%s3 + $0x2f4] sm:$0xf]
    %v426 = vld [vmem:[%s3 + $0x2f8] sm:$0xff]
    %v427 = vld [vmem:[%s3 + $0x300] sm:$0xff]
    %v428 = vld [vmem:[%s3 + $0x308] sm:$0xf]
    %v429 = vld [vmem:[%s3 + $0x30c] sm:$0xff]
    %v430 = vld [vmem:[%s3 + $0x314] sm:$0xff]
    %v431 = vld [vmem:[%s3 + $0x31c] sm:$0xf]
    %v432 = vld [vmem:[%s3 + $0x320] sm:$0xff]
    %v433 = vld [vmem:[%s3 + $0x328] sm:$0xff]
    %v434 = vld [vmem:[%s3 + $0x330] sm:$0xf]
    %v435 = vld [vmem:[%s3 + $0x334] sm:$0xff]
    %v436 = vld [vmem:[%s3 + $0x33c] sm:$0xff]
    %v437 = vld [vmem:[%s3 + $0x344] sm:$0xf]
    %v438 = vld [vmem:[%s3 + $0x348] sm:$0xff]
    %v439 = vld [vmem:[%s3 + $0x350] sm:$0xff]
    %v440 = vld [vmem:[%s3 + $0x358] sm:$0xf]
    %v441 = vld [vmem:[%s3 + $0x35c] sm:$0xff]
    %v442 = vld [vmem:[%s3 + $0x364] sm:$0xff]
    %v443 = vld [vmem:[%s3 + $0x36c] sm:$0xf]
    %v444 = vld [vmem:[%s3 + $0x370] sm:$0xff]
    %v445 = vld [vmem:[%s3 + $0x378] sm:$0xff]
    %v446 = vld [vmem:[%s3 + $0x380] sm:$0xf]
    %v447 = vld [vmem:[%s3 + $0x384] sm:$0xff]
    %v448 = vld [vmem:[%s3 + $0x38c] sm:$0xff]
    %v449 = vld [vmem:[%s3 + $0x394] sm:$0xf]
    %v450 = vld [vmem:[%s3 + $0x398] sm:$0xff]
    %v451 = vld [vmem:[%s3 + $0x3a0] sm:$0xff]
    %v452 = vld [vmem:[%s3 + $0x3a8] sm:$0xf]
    %v453 = vld [vmem:[%s3 + $0x3ac] sm:$0xff]
    %v454 = vld [vmem:[%s3 + $0x3b4] sm:$0xff]
    %v455 = vld [vmem:[%s3 + $0x3bc] sm:$0xf]
    %v456 = vld [vmem:[%s3 + $0x3c0] sm:$0xff]
    %v457 = vld [vmem:[%s3 + $0x3c8] sm:$0xff]
    %v458 = vld [vmem:[%s3 + $0x3d0] sm:$0xf]
    %v459 = vld [vmem:[%s3 + $0x3d4] sm:$0xff]
    %v460 = vld [vmem:[%s3 + $0x3dc] sm:$0xff]
    %v461 = vld [vmem:[%s3 + $0x3e4] sm:$0xf]
    %v462 = vld [vmem:[%s3 + $0x3e8] sm:$0xff]
    %v463 = vld [vmem:[%s3 + $0x3f0] sm:$0xff]
    %v464 = vld [vmem:[%s3 + $0x3f8] sm:$0xf]
    %v465 = vld [vmem:[%s3 + $0x3fc] sm:$0xff]
    %v466 = vld [vmem:[%s3 + $0x404] sm:$0xff]
    %v467 = vld [vmem:[%s3 + $0x40c] sm:$0xf]
    %v468 = vld [vmem:[%s3 + $0x410] sm:$0xff]
    %v469 = vld [vmem:[%s3 + $0x418] sm:$0xff]
    %v470 = vld [vmem:[%s3 + $0x420] sm:$0xf]
    %v471 = vld [vmem:[%s3 + $0x424] sm:$0xff]
    %v472 = vld [vmem:[%s3 + $0x42c] sm:$0xff]
    %v473 = vld [vmem:[%s3 + $0x434] sm:$0xf]
    %v474 = vld [vmem:[%s3 + $0x438] sm:$0xff]
    %v475 = vld [vmem:[%s3 + $0x440] sm:$0xff]
    %v476 = vld [vmem:[%s3 + $0x448] sm:$0xf]
    %v477 = vld [vmem:[%s3 + $0x44c] sm:$0xff]
    %v478 = vld [vmem:[%s3 + $0x454] sm:$0xff]
    %v479 = vld [vmem:[%s3 + $0x45c] sm:$0xf]
    %v480 = vld [vmem:[%s3 + $0x460] sm:$0xff]
    %v481 = vld [vmem:[%s3 + $0x468] sm:$0xff]
    %v482 = vld [vmem:[%s3 + $0x470] sm:$0xf]
    %v483 = vld [vmem:[%s3 + $0x474] sm:$0xff]
    %v484 = vld [vmem:[%s3 + $0x47c] sm:$0xff]
    %v485 = vld [vmem:[%s3 + $0x484] sm:$0xf]
    %v486 = vld [vmem:[%s3 + $0x488] sm:$0xff]
    %v487 = vld [vmem:[%s3 + $0x490] sm:$0xff]
    %v488 = vld [vmem:[%s3 + $0x498] sm:$0xf]
    %v489 = vld [vmem:[%s3 + $0x49c] sm:$0xff]
    %v490 = vld [vmem:[%s3 + $0x4a4] sm:$0xff]
    %v491 = vld [vmem:[%s3 + $0x4ac] sm:$0xf]
    %v492 = vld [vmem:[%s3 + $0x4b0] sm:$0xff]
    %v493 = vld [vmem:[%s3 + $0x4b8] sm:$0xff]
    %v494 = vld [vmem:[%s3 + $0x4c0] sm:$0xf]
    %v495 = vld [vmem:[%s3 + $0x4c4] sm:$0xff]
    %v496 = vld [vmem:[%s3 + $0x4cc] sm:$0xff]
    %v497 = vld [vmem:[%s3 + $0x4d4] sm:$0xf]
    %v498 = vld [vmem:[%s3 + $0x4d8] sm:$0xff]
    %v499 = vld [vmem:[%s3 + $0x4e0] sm:$0xff]
    %v500 = vld [vmem:[%s3 + $0x4e8] sm:$0xf]
    %v501 = vld [vmem:[%s3 + $0x4ec] sm:$0xff]
    %v502 = vld [vmem:[%s3 + $0x4f4] sm:$0xff]
    %v503 = vld [vmem:[%s3 + $0x4fc] sm:$0xf]
    %v504 = vld [vmem:[%s3 + $0x500] sm:$0xff]
    %v505 = vld [vmem:[%s3 + $0x508] sm:$0xff]
    %v506 = vld [vmem:[%s3 + $0x510] sm:$0xf]
    %v507 = vld [vmem:[%s3 + $0x514] sm:$0xff]
    %v508 = vld [vmem:[%s3 + $0x51c] sm:$0xff]
    %v509 = vld [vmem:[%s3 + $0x524] sm:$0xf]
    %v510 = vld [vmem:[%s3 + $0x528] sm:$0xff]
    %v511 = vld [vmem:[%s3 + $0x530] sm:$0xff]
    %v512 = vld [vmem:[%s3 + $0x538] sm:$0xf]
    %v513 = vld [vmem:[%s3 + $0x53c] sm:$0xff]
    %v514 = vld [vmem:[%s3 + $0x544] sm:$0xff]
    %v515 = vld [vmem:[%s3 + $0x54c] sm:$0xf]
    %v516 = vld [vmem:[%s3 + $0x550] sm:$0xff]
    %v517 = vld [vmem:[%s3 + $0x558] sm:$0xff]
    %v518 = vld [vmem:[%s3 + $0x560] sm:$0xf]
    %v519 = vld [vmem:[%s3 + $0x564] sm:$0xff]
    %v520 = vld [vmem:[%s3 + $0x56c] sm:$0xff]
    %v521 = vld [vmem:[%s3 + $0x574] sm:$0xf]
    %v522 = vld [vmem:[%s3 + $0x578] sm:$0xff]
    %v523 = vld [vmem:[%s3 + $0x580] sm:$0xff]
    %v524 = vld [vmem:[%s3 + $0x588] sm:$0xf]
    %v525 = vld [vmem:[%s3 + $0x58c] sm:$0xff]
    %v526 = vld [vmem:[%s3 + $0x594] sm:$0xff]
    %v527 = vld [vmem:[%s3 + $0x59c] sm:$0xf]
    %v528 = vld [vmem:[%s3 + $0x5a0] sm:$0xff]
    %v529 = vld [vmem:[%s3 + $0x5a8] sm:$0xff]
    %v530 = vld [vmem:[%s3 + $0x5b0] sm:$0xf]
    %v531 = vld [vmem:[%s3 + $0x5b4] sm:$0xff]
    %v532 = vld [vmem:[%s3 + $0x5bc] sm:$0xff]
    %v533 = vld [vmem:[%s3 + $0x5c4] sm:$0xf]
    %v534 = vld [vmem:[%s3 + $0x5c8] sm:$0xff]
    %v535 = vld [vmem:[%s3 + $0x5d0] sm:$0xff]
    %v536 = vld [vmem:[%s3 + $0x5d8] sm:$0xf]
    %v537 = vld [vmem:[%s4] sm:$0x1f]
    %v538 = vpack.c.bf16 %v307, %v307
    %v539 = vpack.c.bf16 %v308, %v308
    %v540 = vpack.c.bf16 %v309, %v309
    %v541 = vpack.c.bf16 %v310, %v310
    %v542 = vpack.c.bf16 %v311, %v311
    %v544 = vlaneseq
    %v545 = vshrl.u32 %v544, 7
    %v546 = vsub.s32 0, %v545
    %v547 = vrot.slane %v537, %v546
    %v548 = vlaneseq
    %v549 = vshrl.u32 %v548, 7
    %v550 = vsub.s32 1, %v549
    %v551 = vrot.slane %v537, %v550
    %v552 = vlaneseq
    %v553 = vshrl.u32 %v552, 7
    %v554 = vsub.s32 2, %v553
    %v555 = vrot.slane %v537, %v554
    %v556 = vlaneseq
    %v557 = vshrl.u32 %v556, 7
    %v558 = vsub.s32 3, %v557
    %v559 = vrot.slane %v537, %v558
    %v560 = vlaneseq
    %v561 = vshrl.u32 %v560, 7
    %v562 = vsub.s32 4, %v561
    %v563 = vrot.slane %v537, %v562
    %v794 = vunpack.c.l.b16 %v312
    %v795 = vunpack.c.h.b16 %v312
    %v796 = vunpack.c.l.b16 %v313
    %v797 = vunpack.c.h.b16 %v313
    %v798 = vunpack.c.l.b16 %v314
    %v799 = vunpack.c.l.b16 %v315
    %v800 = vunpack.c.h.b16 %v315
    %v801 = vunpack.c.l.b16 %v316
    %v802 = vunpack.c.h.b16 %v316
    %v803 = vunpack.c.l.b16 %v317
    %v804 = vunpack.c.l.b16 %v318
    %v805 = vunpack.c.h.b16 %v318
    %v806 = vunpack.c.l.b16 %v319
    %v807 = vunpack.c.h.b16 %v319
    %v808 = vunpack.c.l.b16 %v320
    %v809 = vunpack.c.l.b16 %v321
    %v810 = vunpack.c.h.b16 %v321
    %v811 = vunpack.c.l.b16 %v322
    %v812 = vunpack.c.h.b16 %v322
    %v813 = vunpack.c.l.b16 %v323
    %v814 = vunpack.c.l.b16 %v324
    %v815 = vunpack.c.h.b16 %v324
    %v816 = vunpack.c.l.b16 %v325
    %v817 = vunpack.c.h.b16 %v325
    %v818 = vunpack.c.l.b16 %v326
    %v819 = vunpack.c.l.b16 %v327
    %v820 = vunpack.c.h.b16 %v327
    %v821 = vunpack.c.l.b16 %v328
    %v822 = vunpack.c.h.b16 %v328
    %v823 = vunpack.c.l.b16 %v329
    %v824 = vunpack.c.l.b16 %v330
    %v825 = vunpack.c.h.b16 %v330
    %v826 = vunpack.c.l.b16 %v331
    %v827 = vunpack.c.h.b16 %v331
    %v828 = vunpack.c.l.b16 %v332
    %v829 = vunpack.c.l.b16 %v333
    %v830 = vunpack.c.h.b16 %v333
    %v831 = vunpack.c.l.b16 %v334
    %v832 = vunpack.c.h.b16 %v334
    %v833 = vunpack.c.l.b16 %v335
    %v834 = vunpack.c.l.b16 %v336
    %v835 = vunpack.c.h.b16 %v336
    %v836 = vunpack.c.l.b16 %v337
    %v837 = vunpack.c.h.b16 %v337
    %v838 = vunpack.c.l.b16 %v338
    %v839 = vunpack.c.l.b16 %v339
    %v840 = vunpack.c.h.b16 %v339
    %v841 = vunpack.c.l.b16 %v340
    %v842 = vunpack.c.h.b16 %v340
    %v843 = vunpack.c.l.b16 %v341
    %v844 = vunpack.c.l.b16 %v342
    %v845 = vunpack.c.h.b16 %v342
    %v846 = vunpack.c.l.b16 %v343
    %v847 = vunpack.c.h.b16 %v343
    %v848 = vunpack.c.l.b16 %v344
    %v849 = vunpack.c.l.b16 %v345
    %v850 = vunpack.c.h.b16 %v345
    %v851 = vunpack.c.l.b16 %v346
    %v852 = vunpack.c.h.b16 %v346
    %v853 = vunpack.c.l.b16 %v347
    %v854 = vunpack.c.l.b16 %v348
    %v855 = vunpack.c.h.b16 %v348
    %v856 = vunpack.c.l.b16 %v349
    %v857 = vunpack.c.h.b16 %v349
    %v858 = vunpack.c.l.b16 %v350
    %v859 = vunpack.c.l.b16 %v351
    %v860 = vunpack.c.h.b16 %v351
    %v861 = vunpack.c.l.b16 %v352
    %v862 = vunpack.c.h.b16 %v352
    %v863 = vunpack.c.l.b16 %v353
    %v864 = vunpack.c.l.b16 %v354
    %v865 = vunpack.c.h.b16 %v354
    %v866 = vunpack.c.l.b16 %v355
    %v867 = vunpack.c.h.b16 %v355
    %v868 = vunpack.c.l.b16 %v356
    %v869 = vunpack.c.l.b16 %v357
    %v870 = vunpack.c.h.b16 %v357
    %v871 = vunpack.c.l.b16 %v358
    %v872 = vunpack.c.h.b16 %v358
    %v873 = vunpack.c.l.b16 %v359
    %v874 = vunpack.c.l.b16 %v360
    %v875 = vunpack.c.h.b16 %v360
    %v876 = vunpack.c.l.b16 %v361
    %v877 = vunpack.c.h.b16 %v361
    %v878 = vunpack.c.l.b16 %v362
    %v879 = vunpack.c.l.b16 %v363
    %v880 = vunpack.c.h.b16 %v363
    %v881 = vunpack.c.l.b16 %v364
    %v882 = vunpack.c.h.b16 %v364
    %v883 = vunpack.c.l.b16 %v365
    %v884 = vunpack.c.l.b16 %v366
    %v885 = vunpack.c.h.b16 %v366
    %v886 = vunpack.c.l.b16 %v367
    %v887 = vunpack.c.h.b16 %v367
    %v888 = vunpack.c.l.b16 %v368
    %v889 = vunpack.c.l.b16 %v369
    %v890 = vunpack.c.h.b16 %v369
    %v891 = vunpack.c.l.b16 %v370
    %v892 = vunpack.c.h.b16 %v370
    %v893 = vunpack.c.l.b16 %v371
    %v894 = vunpack.c.l.b16 %v372
    %v895 = vunpack.c.h.b16 %v372
    %v896 = vunpack.c.l.b16 %v373
    %v897 = vunpack.c.h.b16 %v373
    %v898 = vunpack.c.l.b16 %v374
    %v899 = vunpack.c.l.b16 %v375
    %v900 = vunpack.c.h.b16 %v375
    %v901 = vunpack.c.l.b16 %v376
    %v902 = vunpack.c.h.b16 %v376
    %v903 = vunpack.c.l.b16 %v377
    %v904 = vunpack.c.l.b16 %v378
    %v905 = vunpack.c.h.b16 %v378
    %v906 = vunpack.c.l.b16 %v379
    %v907 = vunpack.c.h.b16 %v379
    %v908 = vunpack.c.l.b16 %v380
    %v909 = vunpack.c.l.b16 %v381
    %v910 = vunpack.c.h.b16 %v381
    %v911 = vunpack.c.l.b16 %v382
    %v912 = vunpack.c.h.b16 %v382
    %v913 = vunpack.c.l.b16 %v383
    %v914 = vunpack.c.l.b16 %v384
    %v915 = vunpack.c.h.b16 %v384
    %v916 = vunpack.c.l.b16 %v385
    %v917 = vunpack.c.h.b16 %v385
    %v918 = vunpack.c.l.b16 %v386
    %v919 = vunpack.c.l.b16 %v387
    %v920 = vunpack.c.h.b16 %v387
    %v921 = vunpack.c.l.b16 %v388
    %v922 = vunpack.c.h.b16 %v388
    %v923 = vunpack.c.l.b16 %v389
    %v924 = vunpack.c.l.b16 %v390
    %v925 = vunpack.c.h.b16 %v390
    %v926 = vunpack.c.l.b16 %v391
    %v927 = vunpack.c.h.b16 %v391
    %v928 = vunpack.c.l.b16 %v392
    %v929 = vunpack.c.l.b16 %v393
    %v930 = vunpack.c.h.b16 %v393
    %v931 = vunpack.c.l.b16 %v394
    %v932 = vunpack.c.h.b16 %v394
    %v933 = vunpack.c.l.b16 %v395
    %v934 = vunpack.c.l.b16 %v396
    %v935 = vunpack.c.h.b16 %v396
    %v936 = vunpack.c.l.b16 %v397
    %v937 = vunpack.c.h.b16 %v397
    %v938 = vunpack.c.l.b16 %v398
    %v939 = vunpack.c.l.b16 %v399
    %v940 = vunpack.c.h.b16 %v399
    %v941 = vunpack.c.l.b16 %v400
    %v942 = vunpack.c.h.b16 %v400
    %v943 = vunpack.c.l.b16 %v401
    %v944 = vunpack.c.l.b16 %v402
    %v945 = vunpack.c.h.b16 %v402
    %v946 = vunpack.c.l.b16 %v403
    %v947 = vunpack.c.h.b16 %v403
    %v948 = vunpack.c.l.b16 %v404
    %v949 = vunpack.c.l.b16 %v405
    %v950 = vunpack.c.h.b16 %v405
    %v951 = vunpack.c.l.b16 %v406
    %v952 = vunpack.c.h.b16 %v406
    %v953 = vunpack.c.l.b16 %v407
    %v954 = vunpack.c.l.b16 %v408
    %v955 = vunpack.c.h.b16 %v408
    %v956 = vunpack.c.l.b16 %v409
    %v957 = vunpack.c.h.b16 %v409
    %v958 = vunpack.c.l.b16 %v410
    %v959 = vunpack.c.l.b16 %v411
    %v960 = vunpack.c.h.b16 %v411
    %v961 = vunpack.c.l.b16 %v412
    %v962 = vunpack.c.h.b16 %v412
    %v963 = vunpack.c.l.b16 %v413
    %v964 = vunpack.c.l.b16 %v414
    %v965 = vunpack.c.h.b16 %v414
    %v966 = vunpack.c.l.b16 %v415
    %v967 = vunpack.c.h.b16 %v415
    %v968 = vunpack.c.l.b16 %v416
    %v969 = vunpack.c.l.b16 %v417
    %v970 = vunpack.c.h.b16 %v417
    %v971 = vunpack.c.l.b16 %v418
    %v972 = vunpack.c.h.b16 %v418
    %v973 = vunpack.c.l.b16 %v419
    %v974 = vunpack.c.l.b16 %v420
    %v975 = vunpack.c.h.b16 %v420
    %v976 = vunpack.c.l.b16 %v421
    %v977 = vunpack.c.h.b16 %v421
    %v978 = vunpack.c.l.b16 %v422
    %v979 = vunpack.c.l.b16 %v423
    %v980 = vunpack.c.h.b16 %v423
    %v981 = vunpack.c.l.b16 %v424
    %v982 = vunpack.c.h.b16 %v424
    %v983 = vunpack.c.l.b16 %v425
    %v984 = vunpack.c.l.b16 %v426
    %v985 = vunpack.c.h.b16 %v426
    %v986 = vunpack.c.l.b16 %v427
    %v987 = vunpack.c.h.b16 %v427
    %v988 = vunpack.c.l.b16 %v428
    %v989 = vunpack.c.l.b16 %v429
    %v990 = vunpack.c.h.b16 %v429
    %v991 = vunpack.c.l.b16 %v430
    %v992 = vunpack.c.h.b16 %v430
    %v993 = vunpack.c.l.b16 %v431
    %v994 = vunpack.c.l.b16 %v432
    %v995 = vunpack.c.h.b16 %v432
    %v996 = vunpack.c.l.b16 %v433
    %v997 = vunpack.c.h.b16 %v433
    %v998 = vunpack.c.l.b16 %v434
    %v999 = vunpack.c.l.b16 %v435
    %v1000 = vunpack.c.h.b16 %v435
    %v1001 = vunpack.c.l.b16 %v436
    %v1002 = vunpack.c.h.b16 %v436
    %v1003 = vunpack.c.l.b16 %v437
    %v1004 = vunpack.c.l.b16 %v438
    %v1005 = vunpack.c.h.b16 %v438
    %v1006 = vunpack.c.l.b16 %v439
    %v1007 = vunpack.c.h.b16 %v439
    %v1008 = vunpack.c.l.b16 %v440
    %v1009 = vunpack.c.l.b16 %v441
    %v1010 = vunpack.c.h.b16 %v441
    %v1011 = vunpack.c.l.b16 %v442
    %v1012 = vunpack.c.h.b16 %v442
    %v1013 = vunpack.c.l.b16 %v443
    %v1014 = vunpack.c.l.b16 %v444
    %v1015 = vunpack.c.h.b16 %v444
    %v1016 = vunpack.c.l.b16 %v445
    %v1017 = vunpack.c.h.b16 %v445
    %v1018 = vunpack.c.l.b16 %v446
    %v1019 = vunpack.c.l.b16 %v447
    %v1020 = vunpack.c.h.b16 %v447
    %v1021 = vunpack.c.l.b16 %v448
    %v1022 = vunpack.c.h.b16 %v448
    %v1023 = vunpack.c.l.b16 %v449
    %v1024 = vunpack.c.l.b16 %v450
    %v1025 = vunpack.c.h.b16 %v450
    %v1026 = vunpack.c.l.b16 %v451
    %v1027 = vunpack.c.h.b16 %v451
    %v1028 = vunpack.c.l.b16 %v452
    %v1029 = vunpack.c.l.b16 %v453
    %v1030 = vunpack.c.h.b16 %v453
    %v1031 = vunpack.c.l.b16 %v454
    %v1032 = vunpack.c.h.b16 %v454
    %v1033 = vunpack.c.l.b16 %v455
    %v1034 = vunpack.c.l.b16 %v456
    %v1035 = vunpack.c.h.b16 %v456
    %v1036 = vunpack.c.l.b16 %v457
    %v1037 = vunpack.c.h.b16 %v457
    %v1038 = vunpack.c.l.b16 %v458
    %v1039 = vunpack.c.l.b16 %v459
    %v1040 = vunpack.c.h.b16 %v459
    %v1041 = vunpack.c.l.b16 %v460
    %v1042 = vunpack.c.h.b16 %v460
    %v1043 = vunpack.c.l.b16 %v461
    %v1044 = vunpack.c.l.b16 %v462
    %v1045 = vunpack.c.h.b16 %v462
    %v1046 = vunpack.c.l.b16 %v463
    %v1047 = vunpack.c.h.b16 %v463
    %v1048 = vunpack.c.l.b16 %v464
    %v1049 = vunpack.c.l.b16 %v465
    %v1050 = vunpack.c.h.b16 %v465
    %v1051 = vunpack.c.l.b16 %v466
    %v1052 = vunpack.c.h.b16 %v466
    %v1053 = vunpack.c.l.b16 %v467
    %v1054 = vunpack.c.l.b16 %v468
    %v1055 = vunpack.c.h.b16 %v468
    %v1056 = vunpack.c.l.b16 %v469
    %v1057 = vunpack.c.h.b16 %v469
    %v1058 = vunpack.c.l.b16 %v470
    %v1059 = vunpack.c.l.b16 %v471
    %v1060 = vunpack.c.h.b16 %v471
    %v1061 = vunpack.c.l.b16 %v472
    %v1062 = vunpack.c.h.b16 %v472
    %v1063 = vunpack.c.l.b16 %v473
    %v1064 = vunpack.c.l.b16 %v474
    %v1065 = vunpack.c.h.b16 %v474
    %v1066 = vunpack.c.l.b16 %v475
    %v1067 = vunpack.c.h.b16 %v475
    %v1068 = vunpack.c.l.b16 %v476
    %v1069 = vunpack.c.l.b16 %v477
    %v1070 = vunpack.c.h.b16 %v477
    %v1071 = vunpack.c.l.b16 %v478
    %v1072 = vunpack.c.h.b16 %v478
    %v1073 = vunpack.c.l.b16 %v479
    %v1074 = vunpack.c.l.b16 %v480
    %v1075 = vunpack.c.h.b16 %v480
    %v1076 = vunpack.c.l.b16 %v481
    %v1077 = vunpack.c.h.b16 %v481
    %v1078 = vunpack.c.l.b16 %v482
    %v1079 = vunpack.c.l.b16 %v483
    %v1080 = vunpack.c.h.b16 %v483
    %v1081 = vunpack.c.l.b16 %v484
    %v1082 = vunpack.c.h.b16 %v484
    %v1083 = vunpack.c.l.b16 %v485
    %v1084 = vunpack.c.l.b16 %v486
    %v1085 = vunpack.c.h.b16 %v486
    %v1086 = vunpack.c.l.b16 %v487
    %v1087 = vunpack.c.h.b16 %v487
    %v1088 = vunpack.c.l.b16 %v488
    %v1089 = vunpack.c.l.b16 %v489
    %v1090 = vunpack.c.h.b16 %v489
    %v1091 = vunpack.c.l.b16 %v490
    %v1092 = vunpack.c.h.b16 %v490
    %v1093 = vunpack.c.l.b16 %v491
    %v1094 = vunpack.c.l.b16 %v492
    %v1095 = vunpack.c.h.b16 %v492
    %v1096 = vunpack.c.l.b16 %v493
    %v1097 = vunpack.c.h.b16 %v493
    %v1098 = vunpack.c.l.b16 %v494
    %v1099 = vunpack.c.l.b16 %v495
    %v1100 = vunpack.c.h.b16 %v495
    %v1101 = vunpack.c.l.b16 %v496
    %v1102 = vunpack.c.h.b16 %v496
    %v1103 = vunpack.c.l.b16 %v497
    %v1104 = vunpack.c.l.b16 %v498
    %v1105 = vunpack.c.h.b16 %v498
    %v1106 = vunpack.c.l.b16 %v499
    %v1107 = vunpack.c.h.b16 %v499
    %v1108 = vunpack.c.l.b16 %v500
    %v1109 = vunpack.c.l.b16 %v501
    %v1110 = vunpack.c.h.b16 %v501
    %v1111 = vunpack.c.l.b16 %v502
    %v1112 = vunpack.c.h.b16 %v502
    %v1113 = vunpack.c.l.b16 %v503
    %v1114 = vunpack.c.l.b16 %v504
    %v1115 = vunpack.c.h.b16 %v504
    %v1116 = vunpack.c.l.b16 %v505
    %v1117 = vunpack.c.h.b16 %v505
    %v1118 = vunpack.c.l.b16 %v506
    %v1119 = vunpack.c.l.b16 %v507
    %v1120 = vunpack.c.h.b16 %v507
    %v1121 = vunpack.c.l.b16 %v508
    %v1122 = vunpack.c.h.b16 %v508
    %v1123 = vunpack.c.l.b16 %v509
    %v1124 = vunpack.c.l.b16 %v510
    %v1125 = vunpack.c.h.b16 %v510
    %v1126 = vunpack.c.l.b16 %v511
    %v1127 = vunpack.c.h.b16 %v511
    %v1128 = vunpack.c.l.b16 %v512
    %v1129 = vunpack.c.l.b16 %v513
    %v1130 = vunpack.c.h.b16 %v513
    %v1131 = vunpack.c.l.b16 %v514
    %v1132 = vunpack.c.h.b16 %v514
    %v1133 = vunpack.c.l.b16 %v515
    %v1134 = vunpack.c.l.b16 %v516
    %v1135 = vunpack.c.h.b16 %v516
    %v1136 = vunpack.c.l.b16 %v517
    %v1137 = vunpack.c.h.b16 %v517
    %v1138 = vunpack.c.l.b16 %v518
    %v1139 = vunpack.c.l.b16 %v519
    %v1140 = vunpack.c.h.b16 %v519
    %v1141 = vunpack.c.l.b16 %v520
    %v1142 = vunpack.c.h.b16 %v520
    %v1143 = vunpack.c.l.b16 %v521
    %v1144 = vunpack.c.l.b16 %v522
    %v1145 = vunpack.c.h.b16 %v522
    %v1146 = vunpack.c.l.b16 %v523
    %v1147 = vunpack.c.h.b16 %v523
    %v1148 = vunpack.c.l.b16 %v524
    %v1149 = vunpack.c.l.b16 %v525
    %v1150 = vunpack.c.h.b16 %v525
    %v1151 = vunpack.c.l.b16 %v526
    %v1152 = vunpack.c.h.b16 %v526
    %v1153 = vunpack.c.l.b16 %v527
    %v1154 = vunpack.c.l.b16 %v528
    %v1155 = vunpack.c.h.b16 %v528
    %v1156 = vunpack.c.l.b16 %v529
    %v1157 = vunpack.c.h.b16 %v529
    %v1158 = vunpack.c.l.b16 %v530
    %v1159 = vunpack.c.l.b16 %v531
    %v1160 = vunpack.c.h.b16 %v531
    %v1161 = vunpack.c.l.b16 %v532
    %v1162 = vunpack.c.h.b16 %v532
    %v1163 = vunpack.c.l.b16 %v533
    %v1164 = vunpack.c.l.b16 %v534
    %v1165 = vunpack.c.h.b16 %v534
    %v1166 = vunpack.c.l.b16 %v535
    %v1167 = vunpack.c.h.b16 %v535
    %v1168 = vunpack.c.l.b16 %v536
    %v1169 = vpack.c.b16 %v799, %v794
    %v1170 = vpack.c.b16 %v800, %v795
    %v1171 = vpack.c.b16 %v801, %v796
    %v1172 = vpack.c.b16 %v802, %v797
    %v1173 = vpack.c.b16 %v803, %v798
    %v1174 = vpack.c.b16 %v809, %v804
    %v1175 = vpack.c.b16 %v810, %v805
    %v1176 = vpack.c.b16 %v811, %v806
    %v1177 = vpack.c.b16 %v812, %v807
    %v1178 = vpack.c.b16 %v813, %v808
    %v1179 = vpack.c.b16 %v819, %v814
    %v1180 = vpack.c.b16 %v820, %v815
    %v1181 = vpack.c.b16 %v821, %v816
    %v1182 = vpack.c.b16 %v822, %v817
    %v1183 = vpack.c.b16 %v823, %v818
    %v1184 = vpack.c.b16 %v829, %v824
    %v1185 = vpack.c.b16 %v830, %v825
    %v1186 = vpack.c.b16 %v831, %v826
    %v1187 = vpack.c.b16 %v832, %v827
    %v1188 = vpack.c.b16 %v833, %v828
    %v1189 = vpack.c.b16 %v839, %v834
    %v1190 = vpack.c.b16 %v840, %v835
    %v1191 = vpack.c.b16 %v841, %v836
    %v1192 = vpack.c.b16 %v842, %v837
    %v1193 = vpack.c.b16 %v843, %v838
    %v1194 = vpack.c.b16 %v849, %v844
    %v1195 = vpack.c.b16 %v850, %v845
    %v1196 = vpack.c.b16 %v851, %v846
    %v1197 = vpack.c.b16 %v852, %v847
    %v1198 = vpack.c.b16 %v853, %v848
    %v1199 = vpack.c.b16 %v859, %v854
    %v1200 = vpack.c.b16 %v860, %v855
    %v1201 = vpack.c.b16 %v861, %v856
    %v1202 = vpack.c.b16 %v862, %v857
    %v1203 = vpack.c.b16 %v863, %v858
    %v1204 = vpack.c.b16 %v869, %v864
    %v1205 = vpack.c.b16 %v870, %v865
    %v1206 = vpack.c.b16 %v871, %v866
    %v1207 = vpack.c.b16 %v872, %v867
    %v1208 = vpack.c.b16 %v873, %v868
    %v1209 = vpack.c.b16 %v879, %v874
    %v1210 = vpack.c.b16 %v880, %v875
    %v1211 = vpack.c.b16 %v881, %v876
    %v1212 = vpack.c.b16 %v882, %v877
    %v1213 = vpack.c.b16 %v883, %v878
    %v1214 = vpack.c.b16 %v889, %v884
    %v1215 = vpack.c.b16 %v890, %v885
    %v1216 = vpack.c.b16 %v891, %v886
    %v1217 = vpack.c.b16 %v892, %v887
    %v1218 = vpack.c.b16 %v893, %v888
    %v1219 = vpack.c.b16 %v899, %v894
    %v1220 = vpack.c.b16 %v900, %v895
    %v1221 = vpack.c.b16 %v901, %v896
    %v1222 = vpack.c.b16 %v902, %v897
    %v1223 = vpack.c.b16 %v903, %v898
    %v1224 = vpack.c.b16 %v909, %v904
    %v1225 = vpack.c.b16 %v910, %v905
    %v1226 = vpack.c.b16 %v911, %v906
    %v1227 = vpack.c.b16 %v912, %v907
    %v1228 = vpack.c.b16 %v913, %v908
    %v1229 = vpack.c.b16 %v919, %v914
    %v1230 = vpack.c.b16 %v920, %v915
    %v1231 = vpack.c.b16 %v921, %v916
    %v1232 = vpack.c.b16 %v922, %v917
    %v1233 = vpack.c.b16 %v923, %v918
    %v1234 = vpack.c.b16 %v929, %v924
    %v1235 = vpack.c.b16 %v930, %v925
    %v1236 = vpack.c.b16 %v931, %v926
    %v1237 = vpack.c.b16 %v932, %v927
    %v1238 = vpack.c.b16 %v933, %v928
    %v1239 = vpack.c.b16 %v939, %v934
    %v1240 = vpack.c.b16 %v940, %v935
    %v1241 = vpack.c.b16 %v941, %v936
    %v1242 = vpack.c.b16 %v942, %v937
    %v1243 = vpack.c.b16 %v943, %v938
    %v1244 = vpack.c.b16 %v949, %v944
    %v1245 = vpack.c.b16 %v950, %v945
    %v1246 = vpack.c.b16 %v951, %v946
    %v1247 = vpack.c.b16 %v952, %v947
    %v1248 = vpack.c.b16 %v953, %v948
    %v1249 = vpack.c.b16 %v959, %v954
    %v1250 = vpack.c.b16 %v960, %v955
    %v1251 = vpack.c.b16 %v961, %v956
    %v1252 = vpack.c.b16 %v962, %v957
    %v1253 = vpack.c.b16 %v963, %v958
    %v1254 = vpack.c.b16 %v969, %v964
    %v1255 = vpack.c.b16 %v970, %v965
    %v1256 = vpack.c.b16 %v971, %v966
    %v1257 = vpack.c.b16 %v972, %v967
    %v1258 = vpack.c.b16 %v973, %v968
    %v1259 = vpack.c.b16 %v979, %v974
    %v1260 = vpack.c.b16 %v980, %v975
    %v1261 = vpack.c.b16 %v981, %v976
    %v1262 = vpack.c.b16 %v982, %v977
    %v1263 = vpack.c.b16 %v983, %v978
    %v1264 = vpack.c.b16 %v989, %v984
    %v1265 = vpack.c.b16 %v990, %v985
    %v1266 = vpack.c.b16 %v991, %v986
    %v1267 = vpack.c.b16 %v992, %v987
    %v1268 = vpack.c.b16 %v993, %v988
    %v1269 = vpack.c.b16 %v999, %v994
    %v1270 = vpack.c.b16 %v1000, %v995
    %v1271 = vpack.c.b16 %v1001, %v996
    %v1272 = vpack.c.b16 %v1002, %v997
    %v1273 = vpack.c.b16 %v1003, %v998
    %v1274 = vpack.c.b16 %v1009, %v1004
    %v1275 = vpack.c.b16 %v1010, %v1005
    %v1276 = vpack.c.b16 %v1011, %v1006
    %v1277 = vpack.c.b16 %v1012, %v1007
    %v1278 = vpack.c.b16 %v1013, %v1008
    %v1279 = vpack.c.b16 %v1019, %v1014
    %v1280 = vpack.c.b16 %v1020, %v1015
    %v1281 = vpack.c.b16 %v1021, %v1016
    %v1282 = vpack.c.b16 %v1022, %v1017
    %v1283 = vpack.c.b16 %v1023, %v1018
    %v1284 = vpack.c.b16 %v1029, %v1024
    %v1285 = vpack.c.b16 %v1030, %v1025
    %v1286 = vpack.c.b16 %v1031, %v1026
    %v1287 = vpack.c.b16 %v1032, %v1027
    %v1288 = vpack.c.b16 %v1033, %v1028
    %v1289 = vpack.c.b16 %v1039, %v1034
    %v1290 = vpack.c.b16 %v1040, %v1035
    %v1291 = vpack.c.b16 %v1041, %v1036
    %v1292 = vpack.c.b16 %v1042, %v1037
    %v1293 = vpack.c.b16 %v1043, %v1038
    %v1294 = vpack.c.b16 %v1049, %v1044
    %v1295 = vpack.c.b16 %v1050, %v1045
    %v1296 = vpack.c.b16 %v1051, %v1046
    %v1297 = vpack.c.b16 %v1052, %v1047
    %v1298 = vpack.c.b16 %v1053, %v1048
    %v1299 = vpack.c.b16 %v1059, %v1054
    %v1300 = vpack.c.b16 %v1060, %v1055
    %v1301 = vpack.c.b16 %v1061, %v1056
    %v1302 = vpack.c.b16 %v1062, %v1057
    %v1303 = vpack.c.b16 %v1063, %v1058
    %v1304 = vpack.c.b16 %v1069, %v1064
    %v1305 = vpack.c.b16 %v1070, %v1065
    %v1306 = vpack.c.b16 %v1071, %v1066
    %v1307 = vpack.c.b16 %v1072, %v1067
    %v1308 = vpack.c.b16 %v1073, %v1068
    %v1309 = vpack.c.b16 %v1079, %v1074
    %v1310 = vpack.c.b16 %v1080, %v1075
    %v1311 = vpack.c.b16 %v1081, %v1076
    %v1312 = vpack.c.b16 %v1082, %v1077
    %v1313 = vpack.c.b16 %v1083, %v1078
    %v1314 = vpack.c.b16 %v1089, %v1084
    %v1315 = vpack.c.b16 %v1090, %v1085
    %v1316 = vpack.c.b16 %v1091, %v1086
    %v1317 = vpack.c.b16 %v1092, %v1087
    %v1318 = vpack.c.b16 %v1093, %v1088
    %v1319 = vpack.c.b16 %v1099, %v1094
    %v1320 = vpack.c.b16 %v1100, %v1095
    %v1321 = vpack.c.b16 %v1101, %v1096
    %v1322 = vpack.c.b16 %v1102, %v1097
    %v1323 = vpack.c.b16 %v1103, %v1098
    %v1324 = vpack.c.b16 %v1109, %v1104
    %v1325 = vpack.c.b16 %v1110, %v1105
    %v1326 = vpack.c.b16 %v1111, %v1106
    %v1327 = vpack.c.b16 %v1112, %v1107
    %v1328 = vpack.c.b16 %v1113, %v1108
    %v1329 = vpack.c.b16 %v1119, %v1114
    %v1330 = vpack.c.b16 %v1120, %v1115
    %v1331 = vpack.c.b16 %v1121, %v1116
    %v1332 = vpack.c.b16 %v1122, %v1117
    %v1333 = vpack.c.b16 %v1123, %v1118
    %v1334 = vpack.c.b16 %v1129, %v1124
    %v1335 = vpack.c.b16 %v1130, %v1125
    %v1336 = vpack.c.b16 %v1131, %v1126
    %v1337 = vpack.c.b16 %v1132, %v1127
    %v1338 = vpack.c.b16 %v1133, %v1128
    %v1339 = vpack.c.b16 %v1139, %v1134
    %v1340 = vpack.c.b16 %v1140, %v1135
    %v1341 = vpack.c.b16 %v1141, %v1136
    %v1342 = vpack.c.b16 %v1142, %v1137
    %v1343 = vpack.c.b16 %v1143, %v1138
    %v1344 = vpack.c.b16 %v1149, %v1144
    %v1345 = vpack.c.b16 %v1150, %v1145
    %v1346 = vpack.c.b16 %v1151, %v1146
    %v1347 = vpack.c.b16 %v1152, %v1147
    %v1348 = vpack.c.b16 %v1153, %v1148
    %v1349 = vpack.c.b16 %v1159, %v1154
    %v1350 = vpack.c.b16 %v1160, %v1155
    %v1351 = vpack.c.b16 %v1161, %v1156
    %v1352 = vpack.c.b16 %v1162, %v1157
    %v1353 = vpack.c.b16 %v1163, %v1158
    %v1354 = vpack.c.b16 %v1164, %v1164
    %v1355 = vpack.c.b16 %v1165, %v1165
    %v1356 = vpack.c.b16 %v1166, %v1166
    %v1357 = vpack.c.b16 %v1167, %v1167
    %v1358 = vpack.c.b16 %v1168, %v1168
    %vm1544 = vcmask 719872
    %v1546 = vsel %vm1544, %v542, 0
    %vm1548 = vcmask 1043456
    %v1550 = vsel %vm1548, %v1354, 0
    %v1553 = vsel %vm1548, %v1355, 0
    %v1556 = vsel %vm1548, %v1356, 0
    %v1559 = vsel %vm1548, %v1357, 0
    %v1562 = vsel %vm1548, %v1358, 0
    %1564 = vmatprep.subr.bf16.mxu0 %v1205
    %1565 = vmatpush1.bf16.msra.mxu0 %v1204
    %1566 = vmatprep.subr.bf16.mxu0 %v1200
    %1567 = vmatpush1.bf16.msra.mxu0 %v1199
    %1568 = vmatprep.subr.bf16.mxu0 %v1195
    %1569 = vmatpush1.bf16.msra.mxu0 %v1194
    %1570 = vmatprep.subr.bf16.mxu0 %v1190
    %1571 = vmatpush1.bf16.msra.mxu0 %v1189
    %1572 = vmatprep.subr.bf16.mxu0 %v1185
    %1573 = vmatpush1.bf16.msra.mxu0 %v1184
    %1574 = vmatprep.subr.bf16.mxu0 %v1180
    %1575 = vmatpush1.bf16.msra.mxu0 %v1179
    %1576 = vmatprep.subr.bf16.mxu0 %v1175
    %1577 = vmatpush1.bf16.msra.mxu0 %v1174
    %1578 = vmatprep.subr.bf16.mxu0 %v1170
    %1579 = vmatpush1.bf16.msra.mxu0 %v1169
    %1580 = vmatprep.subr.bf16.mxu0 %v1245
    %1581 = vmatpush2.bf16.msra.mxu0 %v1244
    %1582 = vmatprep.subr.bf16.mxu0 %v1240
    %1583 = vmatpush2.bf16.msra.mxu0 %v1239
    %1584 = vmatprep.subr.bf16.mxu0 %v1235
    %1585 = vmatpush2.bf16.msra.mxu0 %v1234
    %1586 = vmatprep.subr.bf16.mxu0 %v1230
    %1587 = vmatpush2.bf16.msra.mxu0 %v1229
    %1588 = vmatprep.subr.bf16.mxu0 %v1225
    %1589 = vmatpush2.bf16.msra.mxu0 %v1224
    %1590 = vmatprep.subr.bf16.mxu0 %v1220
    %1591 = vmatpush2.bf16.msra.mxu0 %v1219
    %1592 = vmatprep.subr.bf16.mxu0 %v1215
    %1593 = vmatpush2.bf16.msra.mxu0 %v1214
    %1594 = vmatprep.subr.bf16.mxu0 %v1210
    %1595 = vmatpush2.bf16.msra.mxu0 %v1209
    %1596 = vmatprep.mubr.bf16.mxu0 %v539
    %1597 = vmatmul.mubr.bf16.gmra.mxu0 %v538
    %v1598 = vpop.f32.mrf.mxu0
    %v1599 = vadd.f32 %v547, %v1598
    %v1600 = vpop.f32.mrf.mxu0
    %v1601 = vadd.f32 %v551, %v1600
    %v1602 = vpop.f32.mrf.mxu0
    %v1603 = vpop.f32.mrf.mxu0
    %1604 = vdwg.mxu0
    %1605 = vmatprep.subr.bf16.mxu0 %v1285
    %1606 = vmatpush1.bf16.msra.mxu0 %v1284
    %1607 = vmatprep.subr.bf16.mxu0 %v1280
    %1608 = vmatpush1.bf16.msra.mxu0 %v1279
    %1609 = vmatprep.subr.bf16.mxu0 %v1275
    %1610 = vmatpush1.bf16.msra.mxu0 %v1274
    %1611 = vmatprep.subr.bf16.mxu0 %v1270
    %1612 = vmatpush1.bf16.msra.mxu0 %v1269
    %1613 = vmatprep.subr.bf16.mxu0 %v1265
    %1614 = vmatpush1.bf16.msra.mxu0 %v1264
    %1615 = vmatprep.subr.bf16.mxu0 %v1260
    %1616 = vmatpush1.bf16.msra.mxu0 %v1259
    %1617 = vmatprep.subr.bf16.mxu0 %v1255
    %1618 = vmatpush1.bf16.msra.mxu0 %v1254
    %1619 = vmatprep.subr.bf16.mxu0 %v1250
    %1620 = vmatpush1.bf16.msra.mxu0 %v1249
    %1621 = vmatprep.subr.bf16.mxu0 %v1325
    %1622 = vmatpush2.bf16.msra.mxu0 %v1324
    %1623 = vmatprep.subr.bf16.mxu0 %v1320
    %1624 = vmatpush2.bf16.msra.mxu0 %v1319
    %1625 = vmatprep.subr.bf16.mxu0 %v1315
    %1626 = vmatpush2.bf16.msra.mxu0 %v1314
    %1627 = vmatprep.subr.bf16.mxu0 %v1310
    %1628 = vmatpush2.bf16.msra.mxu0 %v1309
    %1629 = vmatprep.subr.bf16.mxu0 %v1305
    %1630 = vmatpush2.bf16.msra.mxu0 %v1304
    %1631 = vmatprep.subr.bf16.mxu0 %v1300
    %1632 = vmatpush2.bf16.msra.mxu0 %v1299
    %1633 = vmatprep.subr.bf16.mxu0 %v1295
    %1634 = vmatpush2.bf16.msra.mxu0 %v1294
    %1635 = vmatprep.subr.bf16.mxu0 %v1290
    %1636 = vmatpush2.bf16.msra.mxu0 %v1289
    %1637 = vmatprep.mubr.bf16.mxu0 %v541
    %1638 = vmatmul.mubr.bf16.gmra.mxu0 %v540
    %v1639 = vpop.f32.mrf.mxu0
    %v1640 = vadd.f32 %v1599, %v1639
    %v1641 = vpop.f32.mrf.mxu0
    %v1642 = vadd.f32 %v1601, %v1641
    %v1643 = vpop.f32.mrf.mxu0
    %v1644 = vpop.f32.mrf.mxu0
    %1645 = vdwg.mxu0
    %1646 = vmatprep.subr.bf16.mxu0 0
    %1647 = vmatpush1.bf16.msra.mxu0 0
    %1648 = vmatprep.subr.bf16.mxu0 0
    %1649 = vmatpush1.bf16.msra.mxu0 0
    %1650 = vmatprep.subr.bf16.mxu0 %v1553
    %1651 = vmatpush1.bf16.msra.mxu0 %v1550
    %1652 = vmatprep.subr.bf16.mxu0 %v1350
    %1653 = vmatpush1.bf16.msra.mxu0 %v1349
    %1654 = vmatprep.subr.bf16.mxu0 %v1345
    %1655 = vmatpush1.bf16.msra.mxu0 %v1344
    %1656 = vmatprep.subr.bf16.mxu0 %v1340
    %1657 = vmatpush1.bf16.msra.mxu0 %v1339
    %1658 = vmatprep.subr.bf16.mxu0 %v1335
    %1659 = vmatpush1.bf16.msra.mxu0 %v1334
    %1660 = vmatprep.subr.bf16.mxu0 %v1330
    %1661 = vmatpush1.bf16.msra.mxu0 %v1329
    %1662 = vmatprep.subr.bf16.mxu0 0
    %1663 = vmatpush2.bf16.msra.mxu0 0
    %1664 = vmatprep.subr.bf16.mxu0 0
    %1665 = vmatpush2.bf16.msra.mxu0 0
    %1666 = vmatprep.subr.bf16.mxu0 0
    %1667 = vmatpush2.bf16.msra.mxu0 0
    %1668 = vmatprep.subr.bf16.mxu0 0
    %1669 = vmatpush2.bf16.msra.mxu0 0
    %1670 = vmatprep.subr.bf16.mxu0 0
    %1671 = vmatpush2.bf16.msra.mxu0 0
    %1672 = vmatprep.subr.bf16.mxu0 0
    %1673 = vmatpush2.bf16.msra.mxu0 0
    %1674 = vmatprep.subr.bf16.mxu0 0
    %1675 = vmatpush2.bf16.msra.mxu0 0
    %1676 = vmatprep.subr.bf16.mxu0 0
    %1677 = vmatpush2.bf16.msra.mxu0 0
    %1678 = vmatprep.mubr.bf16.mxu0 0
    %1679 = vmatmul.mubr.bf16.gmra.mxu0 %v1546
    %v1680 = vpop.f32.mrf.mxu0
    %v1681 = vadd.f32 %v1640, %v1680
    %v1682 = vpop.f32.mrf.mxu0
    %v1683 = vadd.f32 %v1642, %v1682
    %v1684 = vpop.f32.mrf.mxu0
    %v1685 = vpop.f32.mrf.mxu0
    %1686 = vdwg.mxu0
    %1687 = vmatprep.subr.bf16.mxu0 %v1207
    %1688 = vmatpush1.bf16.msra.mxu0 %v1206
    %1689 = vmatprep.subr.bf16.mxu0 %v1202
    %1690 = vmatpush1.bf16.msra.mxu0 %v1201
    %1691 = vmatprep.subr.bf16.mxu0 %v1197
    %1692 = vmatpush1.bf16.msra.mxu0 %v1196
    %1693 = vmatprep.subr.bf16.mxu0 %v1192
    %1694 = vmatpush1.bf16.msra.mxu0 %v1191
    %1695 = vmatprep.subr.bf16.mxu0 %v1187
    %1696 = vmatpush1.bf16.msra.mxu0 %v1186
    %1697 = vmatprep.subr.bf16.mxu0 %v1182
    %1698 = vmatpush1.bf16.msra.mxu0 %v1181
    %1699 = vmatprep.subr.bf16.mxu0 %v1177
    %1700 = vmatpush1.bf16.msra.mxu0 %v1176
    %1701 = vmatprep.subr.bf16.mxu0 %v1172
    %1702 = vmatpush1.bf16.msra.mxu0 %v1171
    %1703 = vmatprep.subr.bf16.mxu0 %v1247
    %1704 = vmatpush2.bf16.msra.mxu0 %v1246
    %1705 = vmatprep.subr.bf16.mxu0 %v1242
    %1706 = vmatpush2.bf16.msra.mxu0 %v1241
    %1707 = vmatprep.subr.bf16.mxu0 %v1237
    %1708 = vmatpush2.bf16.msra.mxu0 %v1236
    %1709 = vmatprep.subr.bf16.mxu0 %v1232
    %1710 = vmatpush2.bf16.msra.mxu0 %v1231
    %1711 = vmatprep.subr.bf16.mxu0 %v1227
    %1712 = vmatpush2.bf16.msra.mxu0 %v1226
    %1713 = vmatprep.subr.bf16.mxu0 %v1222
    %1714 = vmatpush2.bf16.msra.mxu0 %v1221
    %1715 = vmatprep.subr.bf16.mxu0 %v1217
    %1716 = vmatpush2.bf16.msra.mxu0 %v1216
    %1717 = vmatprep.subr.bf16.mxu0 %v1212
    %1718 = vmatpush2.bf16.msra.mxu0 %v1211
    %1719 = vmatprep.mubr.bf16.mxu0 %v539
    %1720 = vmatmul.mubr.bf16.gmra.mxu0 %v538
    %v1721 = vpop.f32.mrf.mxu0
    %v1722 = vadd.f32 %v555, %v1721
    %v1723 = vpop.f32.mrf.mxu0
    %v1724 = vadd.f32 %v559, %v1723
    %v1725 = vpop.f32.mrf.mxu0
    %v1726 = vpop.f32.mrf.mxu0
    %1727 = vdwg.mxu0
    %1728 = vmatprep.subr.bf16.mxu0 %v1287
    %1729 = vmatpush1.bf16.msra.mxu0 %v1286
    %1730 = vmatprep.subr.bf16.mxu0 %v1282
    %1731 = vmatpush1.bf16.msra.mxu0 %v1281
    %1732 = vmatprep.subr.bf16.mxu0 %v1277
    %1733 = vmatpush1.bf16.msra.mxu0 %v1276
    %1734 = vmatprep.subr.bf16.mxu0 %v1272
    %1735 = vmatpush1.bf16.msra.mxu0 %v1271
    %1736 = vmatprep.subr.bf16.mxu0 %v1267
    %1737 = vmatpush1.bf16.msra.mxu0 %v1266
    %1738 = vmatprep.subr.bf16.mxu0 %v1262
    %1739 = vmatpush1.bf16.msra.mxu0 %v1261
    %1740 = vmatprep.subr.bf16.mxu0 %v1257
    %1741 = vmatpush1.bf16.msra.mxu0 %v1256
    %1742 = vmatprep.subr.bf16.mxu0 %v1252
    %1743 = vmatpush1.bf16.msra.mxu0 %v1251
    %1744 = vmatprep.subr.bf16.mxu0 %v1327
    %1745 = vmatpush2.bf16.msra.mxu0 %v1326
    %1746 = vmatprep.subr.bf16.mxu0 %v1322
    %1747 = vmatpush2.bf16.msra.mxu0 %v1321
    %1748 = vmatprep.subr.bf16.mxu0 %v1317
    %1749 = vmatpush2.bf16.msra.mxu0 %v1316
    %1750 = vmatprep.subr.bf16.mxu0 %v1312
    %1751 = vmatpush2.bf16.msra.mxu0 %v1311
    %1752 = vmatprep.subr.bf16.mxu0 %v1307
    %1753 = vmatpush2.bf16.msra.mxu0 %v1306
    %1754 = vmatprep.subr.bf16.mxu0 %v1302
    %1755 = vmatpush2.bf16.msra.mxu0 %v1301
    %1756 = vmatprep.subr.bf16.mxu0 %v1297
    %1757 = vmatpush2.bf16.msra.mxu0 %v1296
    %1758 = vmatprep.subr.bf16.mxu0 %v1292
    %1759 = vmatpush2.bf16.msra.mxu0 %v1291
    %1760 = vmatprep.mubr.bf16.mxu0 %v541
    %1761 = vmatmul.mubr.bf16.gmra.mxu0 %v540
    %v1762 = vpop.f32.mrf.mxu0
    %v1763 = vadd.f32 %v1722, %v1762
    %v1764 = vpop.f32.mrf.mxu0
    %v1765 = vadd.f32 %v1724, %v1764
    %v1766 = vpop.f32.mrf.mxu0
    %v1767 = vpop.f32.mrf.mxu0
    %1768 = vdwg.mxu0
    %1769 = vmatprep.subr.bf16.mxu0 0
    %1770 = vmatpush1.bf16.msra.mxu0 0
    %1771 = vmatprep.subr.bf16.mxu0 0
    %1772 = vmatpush1.bf16.msra.mxu0 0
    %1773 = vmatprep.subr.bf16.mxu0 %v1559
    %1774 = vmatpush1.bf16.msra.mxu0 %v1556
    %1775 = vmatprep.subr.bf16.mxu0 %v1352
    %1776 = vmatpush1.bf16.msra.mxu0 %v1351
    %1777 = vmatprep.subr.bf16.mxu0 %v1347
    %1778 = vmatpush1.bf16.msra.mxu0 %v1346
    %1779 = vmatprep.subr.bf16.mxu0 %v1342
    %1780 = vmatpush1.bf16.msra.mxu0 %v1341
    %1781 = vmatprep.subr.bf16.mxu0 %v1337
    %1782 = vmatpush1.bf16.msra.mxu0 %v1336
    %1783 = vmatprep.subr.bf16.mxu0 %v1332
    %1784 = vmatpush1.bf16.msra.mxu0 %v1331
    %1785 = vmatprep.subr.bf16.mxu0 0
    %1786 = vmatpush2.bf16.msra.mxu0 0
    %1787 = vmatprep.subr.bf16.mxu0 0
    %1788 = vmatpush2.bf16.msra.mxu0 0
    %1789 = vmatprep.subr.bf16.mxu0 0
    %1790 = vmatpush2.bf16.msra.mxu0 0
    %1791 = vmatprep.subr.bf16.mxu0 0
    %1792 = vmatpush2.bf16.msra.mxu0 0
    %1793 = vmatprep.subr.bf16.mxu0 0
    %1794 = vmatpush2.bf16.msra.mxu0 0
    %1795 = vmatprep.subr.bf16.mxu0 0
    %1796 = vmatpush2.bf16.msra.mxu0 0
    %1797 = vmatprep.subr.bf16.mxu0 0
    %1798 = vmatpush2.bf16.msra.mxu0 0
    %1799 = vmatprep.subr.bf16.mxu0 0
    %1800 = vmatpush2.bf16.msra.mxu0 0
    %1801 = vmatprep.mubr.bf16.mxu0 0
    %1802 = vmatmul.mubr.bf16.gmra.mxu0 %v1546
    %v1803 = vpop.f32.mrf.mxu0
    %v1804 = vadd.f32 %v1763, %v1803
    %v1805 = vpop.f32.mrf.mxu0
    %v1806 = vadd.f32 %v1765, %v1805
    %v1807 = vpop.f32.mrf.mxu0
    %v1808 = vpop.f32.mrf.mxu0
    %1809 = vdwg.mxu0
    %1810 = vmatprep.subr.bf16.mxu0 0
    %1811 = vmatpush1.bf16.msra.mxu0 %v1208
    %1812 = vmatprep.subr.bf16.mxu0 0
    %1813 = vmatpush1.bf16.msra.mxu0 %v1203
    %1814 = vmatprep.subr.bf16.mxu0 0
    %1815 = vmatpush1.bf16.msra.mxu0 %v1198
    %1816 = vmatprep.subr.bf16.mxu0 0
    %1817 = vmatpush1.bf16.msra.mxu0 %v1193
    %1818 = vmatprep.subr.bf16.mxu0 0
    %1819 = vmatpush1.bf16.msra.mxu0 %v1188
    %1820 = vmatprep.subr.bf16.mxu0 0
    %1821 = vmatpush1.bf16.msra.mxu0 %v1183
    %1822 = vmatprep.subr.bf16.mxu0 0
    %1823 = vmatpush1.bf16.msra.mxu0 %v1178
    %1824 = vmatprep.subr.bf16.mxu0 0
    %1825 = vmatpush1.bf16.msra.mxu0 %v1173
    %1826 = vmatprep.subr.bf16.mxu0 0
    %1827 = vmatpush2.bf16.msra.mxu0 %v1248
    %1828 = vmatprep.subr.bf16.mxu0 0
    %1829 = vmatpush2.bf16.msra.mxu0 %v1243
    %1830 = vmatprep.subr.bf16.mxu0 0
    %1831 = vmatpush2.bf16.msra.mxu0 %v1238
    %1832 = vmatprep.subr.bf16.mxu0 0
    %1833 = vmatpush2.bf16.msra.mxu0 %v1233
    %1834 = vmatprep.subr.bf16.mxu0 0
    %1835 = vmatpush2.bf16.msra.mxu0 %v1228
    %1836 = vmatprep.subr.bf16.mxu0 0
    %1837 = vmatpush2.bf16.msra.mxu0 %v1223
    %1838 = vmatprep.subr.bf16.mxu0 0
    %1839 = vmatpush2.bf16.msra.mxu0 %v1218
    %1840 = vmatprep.subr.bf16.mxu0 0
    %1841 = vmatpush2.bf16.msra.mxu0 %v1213
    %1842 = vmatprep.mubr.bf16.mxu0 %v539
    %1843 = vmatmul.mubr.bf16.gmra.mxu0 %v538
    %v1844 = vpop.f32.mrf.mxu0
    %v1845 = vadd.f32 %v563, %v1844
    %v1846 = vpop.f32.mrf.mxu0
    %v1847 = vpop.f32.mrf.mxu0
    %v1848 = vpop.f32.mrf.mxu0
    %1849 = vdwg.mxu0
    %1850 = vmatprep.subr.bf16.mxu0 0
    %1851 = vmatpush1.bf16.msra.mxu0 %v1288
    %1852 = vmatprep.subr.bf16.mxu0 0
    %1853 = vmatpush1.bf16.msra.mxu0 %v1283
    %1854 = vmatprep.subr.bf16.mxu0 0
    %1855 = vmatpush1.bf16.msra.mxu0 %v1278
    %1856 = vmatprep.subr.bf16.mxu0 0
    %1857 = vmatpush1.bf16.msra.mxu0 %v1273
    %1858 = vmatprep.subr.bf16.mxu0 0
    %1859 = vmatpush1.bf16.msra.mxu0 %v1268
    %1860 = vmatprep.subr.bf16.mxu0 0
    %1861 = vmatpush1.bf16.msra.mxu0 %v1263
    %1862 = vmatprep.subr.bf16.mxu0 0
    %1863 = vmatpush1.bf16.msra.mxu0 %v1258
    %1864 = vmatprep.subr.bf16.mxu0 0
    %1865 = vmatpush1.bf16.msra.mxu0 %v1253
    %1866 = vmatprep.subr.bf16.mxu0 0
    %1867 = vmatpush2.bf16.msra.mxu0 %v1328
    %1868 = vmatprep.subr.bf16.mxu0 0
    %1869 = vmatpush2.bf16.msra.mxu0 %v1323
    %1870 = vmatprep.subr.bf16.mxu0 0
    %1871 = vmatpush2.bf16.msra.mxu0 %v1318
    %1872 = vmatprep.subr.bf16.mxu0 0
    %1873 = vmatpush2.bf16.msra.mxu0 %v1313
    %1874 = vmatprep.subr.bf16.mxu0 0
    %1875 = vmatpush2.bf16.msra.mxu0 %v1308
    %1876 = vmatprep.subr.bf16.mxu0 0
    %1877 = vmatpush2.bf16.msra.mxu0 %v1303
    %1878 = vmatprep.subr.bf16.mxu0 0
    %1879 = vmatpush2.bf16.msra.mxu0 %v1298
    %1880 = vmatprep.subr.bf16.mxu0 0
    %1881 = vmatpush2.bf16.msra.mxu0 %v1293
    %1882 = vmatprep.mubr.bf16.mxu0 %v541
    %1883 = vmatmul.mubr.bf16.gmra.mxu0 %v540
    %v1884 = vpop.f32.mrf.mxu0
    %v1885 = vadd.f32 %v1845, %v1884
    %v1886 = vpop.f32.mrf.mxu0
    %v1887 = vpop.f32.mrf.mxu0
    %v1888 = vpop.f32.mrf.mxu0
    %1889 = vdwg.mxu0
    %1890 = vmatprep.subr.bf16.mxu0 0
    %1891 = vmatpush1.bf16.msra.mxu0 0
    %1892 = vmatprep.subr.bf16.mxu0 0
    %1893 = vmatpush1.bf16.msra.mxu0 0
    %1894 = vmatprep.subr.bf16.mxu0 0
    %1895 = vmatpush1.bf16.msra.mxu0 %v1562
    %1896 = vmatprep.subr.bf16.mxu0 0
    %1897 = vmatpush1.bf16.msra.mxu0 %v1353
    %1898 = vmatprep.subr.bf16.mxu0 0
    %1899 = vmatpush1.bf16.msra.mxu0 %v1348
    %1900 = vmatprep.subr.bf16.mxu0 0
    %1901 = vmatpush1.bf16.msra.mxu0 %v1343
    %1902 = vmatprep.subr.bf16.mxu0 0
    %1903 = vmatpush1.bf16.msra.mxu0 %v1338
    %1904 = vmatprep.subr.bf16.mxu0 0
    %1905 = vmatpush1.bf16.msra.mxu0 %v1333
    %1906 = vmatprep.subr.bf16.mxu0 0
    %1907 = vmatpush2.bf16.msra.mxu0 0
    %1908 = vmatprep.subr.bf16.mxu0 0
    %1909 = vmatpush2.bf16.msra.mxu0 0
    %1910 = vmatprep.subr.bf16.mxu0 0
    %1911 = vmatpush2.bf16.msra.mxu0 0
    %1912 = vmatprep.subr.bf16.mxu0 0
    %1913 = vmatpush2.bf16.msra.mxu0 0
    %1914 = vmatprep.subr.bf16.mxu0 0
    %1915 = vmatpush2.bf16.msra.mxu0 0
    %1916 = vmatprep.subr.bf16.mxu0 0
    %1917 = vmatpush2.bf16.msra.mxu0 0
    %1918 = vmatprep.subr.bf16.mxu0 0
    %1919 = vmatpush2.bf16.msra.mxu0 0
    %1920 = vmatprep.subr.bf16.mxu0 0
    %1921 = vmatpush2.bf16.msra.mxu0 0
    %1922 = vmatprep.mubr.bf16.mxu0 0
    %1923 = vmatmul.mubr.bf16.gmra.mxu0 %v1546
    %v1924 = vpop.f32.mrf.mxu0
    %v1925 = vadd.f32 %v1885, %v1924
    %v1926 = vpop.f32.mrf.mxu0
    %v1927 = vpop.f32.mrf.mxu0
    %v1928 = vpop.f32.mrf.mxu0
    %1929 = vdwg.mxu0
    %v1930 = vmax.f32 %v1681, 0.0
    %v1931 = vmax.f32 %v1683, 0.0
    %v1932 = vmax.f32 %v1804, 0.0
    %v1933 = vmax.f32 %v1806, 0.0
    %v1934 = vmax.f32 %v1925, 0.0
    %v1935 = vld [vmem:[%s5] sm:$0xff]
    %v1936 = vld [vmem:[%s5 + $0x8] sm:$0xff]
    %v1937 = vld [vmem:[%s5 + $0x10] sm:$0xff]
    %v1938 = vld [vmem:[%s5 + $0x18] sm:$0xff]
    %v1939 = vld [vmem:[%s5 + $0x20] sm:$0xff]
    %v1940 = vld [vmem:[%s5 + $0x28] sm:$0xff]
    %v1941 = vld [vmem:[%s5 + $0x30] sm:$0xff]
    %v1942 = vld [vmem:[%s5 + $0x38] sm:$0xff]
    %v1943 = vld [vmem:[%s5 + $0x40] sm:$0xff]
    %v1944 = vld [vmem:[%s5 + $0x48] sm:$0xff]
    %v1945 = vld [vmem:[%s5 + $0x50] sm:$0xff]
    %v1946 = vld [vmem:[%s5 + $0x58] sm:$0xff]
    %v1947 = vld [vmem:[%s5 + $0x60] sm:$0xff]
    %v1948 = vld [vmem:[%s5 + $0x68] sm:$0xff]
    %v1949 = vld [vmem:[%s5 + $0x70] sm:$0xff]
    %v1950 = vld [vmem:[%s5 + $0x78] sm:$0xff]
    %v1951 = vld [vmem:[%s5 + $0x80] sm:$0xff]
    %v1952 = vld [vmem:[%s5 + $0x88] sm:$0xff]
    %v1953 = vld [vmem:[%s5 + $0x90] sm:$0xff]
    %v1954 = vld [vmem:[%s5 + $0x98] sm:$0xff]
    %v1955 = vld [vmem:[%s5 + $0xa0] sm:$0xff]
    %v1956 = vld [vmem:[%s5 + $0xa8] sm:$0xff]
    %v1957 = vld [vmem:[%s5 + $0xb0] sm:$0xff]
    %v1958 = vld [vmem:[%s5 + $0xb8] sm:$0xff]
    %v1959 = vld [vmem:[%s5 + $0xc0] sm:$0xff]
    %v1960 = vld [vmem:[%s5 + $0xc8] sm:$0xff]
    %v1961 = vld [vmem:[%s5 + $0xd0] sm:$0xff]
    %v1962 = vld [vmem:[%s5 + $0xd8] sm:$0xff]
    %v1963 = vld [vmem:[%s5 + $0xe0] sm:$0xff]
    %v1964 = vld [vmem:[%s5 + $0xe8] sm:$0xff]
    %v1965 = vld [vmem:[%s5 + $0xf0] sm:$0xff]
    %v1966 = vld [vmem:[%s5 + $0xf8] sm:$0xff]
    %v1967 = vld [vmem:[%s5 + $0x100] sm:$0xff]
    %v1968 = vld [vmem:[%s5 + $0x108] sm:$0xff]
    %v1969 = vld [vmem:[%s5 + $0x110] sm:$0xff]
    %v1970 = vld [vmem:[%s5 + $0x118] sm:$0xff]
    %v1971 = vld [vmem:[%s5 + $0x120] sm:$0xff]
    %v1972 = vld [vmem:[%s5 + $0x128] sm:$0xff]
    %v1973 = vld [vmem:[%s5 + $0x130] sm:$0xff]
    %v1974 = vld [vmem:[%s5 + $0x138] sm:$0xff]
    %v1975 = vld [vmem:[%s5 + $0x140] sm:$0xff]
    %v1976 = vld [vmem:[%s5 + $0x148] sm:$0xff]
    %v1977 = vld [vmem:[%s5 + $0x150] sm:$0xff]
    %v1978 = vld [vmem:[%s5 + $0x158] sm:$0xff]
    %v1979 = vld [vmem:[%s5 + $0x160] sm:$0xff]
    %v1980 = vld [vmem:[%s5 + $0x168] sm:$0xff]
    %v1981 = vld [vmem:[%s5 + $0x170] sm:$0xff]
    %v1982 = vld [vmem:[%s5 + $0x178] sm:$0xff]
    %v1983 = vld [vmem:[%s5 + $0x180] sm:$0xff]
    %v1984 = vld [vmem:[%s5 + $0x188] sm:$0xff]
    %v1985 = vld [vmem:[%s5 + $0x190] sm:$0xff]
    %v1986 = vld [vmem:[%s5 + $0x198] sm:$0xff]
    %v1987 = vld [vmem:[%s5 + $0x1a0] sm:$0xff]
    %v1988 = vld [vmem:[%s5 + $0x1a8] sm:$0xff]
    %v1989 = vld [vmem:[%s5 + $0x1b0] sm:$0xff]
    %v1990 = vld [vmem:[%s5 + $0x1b8] sm:$0xff]
    %v1991 = vld [vmem:[%s5 + $0x1c0] sm:$0xff]
    %v1992 = vld [vmem:[%s5 + $0x1c8] sm:$0xff]
    %v1993 = vld [vmem:[%s5 + $0x1d0] sm:$0xff]
    %v1994 = vld [vmem:[%s5 + $0x1d8] sm:$0xff]
    %v1995 = vld [vmem:[%s5 + $0x1e0] sm:$0xff]
    %v1996 = vld [vmem:[%s5 + $0x1e8] sm:$0xff]
    %v1997 = vld [vmem:[%s5 + $0x1f0] sm:$0xff]
    %v1998 = vld [vmem:[%s5 + $0x1f8] sm:$0xff]
    %v1999 = vld [vmem:[%s5 + $0x200] sm:$0xff]
    %v2000 = vld [vmem:[%s5 + $0x208] sm:$0xff]
    %v2001 = vld [vmem:[%s5 + $0x210] sm:$0xff]
    %v2002 = vld [vmem:[%s5 + $0x218] sm:$0xff]
    %v2003 = vld [vmem:[%s5 + $0x220] sm:$0xff]
    %v2004 = vld [vmem:[%s5 + $0x228] sm:$0xff]
    %v2005 = vld [vmem:[%s5 + $0x230] sm:$0xff]
    %v2006 = vld [vmem:[%s5 + $0x238] sm:$0xff]
    %v2007 = vld [vmem:[%s5 + $0x240] sm:$0xff]
    %v2008 = vld [vmem:[%s5 + $0x248] sm:$0xff]
    %v2009 = vld [vmem:[%s5 + $0x250] sm:$0xff]
    %v2010 = vld [vmem:[%s5 + $0x258] sm:$0xff]
    %v2011 = vld [vmem:[%s5 + $0x260] sm:$0xff]
    %v2012 = vld [vmem:[%s5 + $0x268] sm:$0xff]
    %v2013 = vld [vmem:[%s5 + $0x270] sm:$0xff]
    %v2014 = vld [vmem:[%s5 + $0x278] sm:$0xff]
    %v2015 = vld [vmem:[%s5 + $0x280] sm:$0xff]
    %v2016 = vld [vmem:[%s5 + $0x288] sm:$0xff]
    %v2017 = vld [vmem:[%s5 + $0x290] sm:$0xff]
    %v2018 = vld [vmem:[%s5 + $0x298] sm:$0xff]
    %v2019 = vld [vmem:[%s5 + $0x2a0] sm:$0xff]
    %v2020 = vld [vmem:[%s5 + $0x2a8] sm:$0xff]
    %v2021 = vld [vmem:[%s5 + $0x2b0] sm:$0xff]
    %v2022 = vld [vmem:[%s5 + $0x2b8] sm:$0xff]
    %v2023 = vld [vmem:[%s5 + $0x2c0] sm:$0xff]
    %v2024 = vld [vmem:[%s5 + $0x2c8] sm:$0xff]
    %v2025 = vld [vmem:[%s5 + $0x2d0] sm:$0xff]
    %v2026 = vld [vmem:[%s5 + $0x2d8] sm:$0xff]
    %v2027 = vld [vmem:[%s5 + $0x2e0] sm:$0xff]
    %v2028 = vld [vmem:[%s5 + $0x2e8] sm:$0xff]
    %v2029 = vld [vmem:[%s5 + $0x2f0] sm:$0xff]
    %v2030 = vld [vmem:[%s5 + $0x2f8] sm:$0xff]
    %v2031 = vld [vmem:[%s5 + $0x300] sm:$0xff]
    %v2032 = vld [vmem:[%s5 + $0x308] sm:$0xff]
    %v2033 = vld [vmem:[%s5 + $0x310] sm:$0xff]
    %v2034 = vld [vmem:[%s5 + $0x318] sm:$0xff]
    %v2035 = vld [vmem:[%s5 + $0x320] sm:$0xff]
    %v2036 = vld [vmem:[%s5 + $0x328] sm:$0xff]
    %v2037 = vld [vmem:[%s5 + $0x330] sm:$0xff]
    %v2038 = vld [vmem:[%s5 + $0x338] sm:$0xff]
    %v2039 = vld [vmem:[%s5 + $0x340] sm:$0xff]
    %v2040 = vld [vmem:[%s5 + $0x348] sm:$0xff]
    %v2041 = vld [vmem:[%s5 + $0x350] sm:$0xff]
    %v2042 = vld [vmem:[%s5 + $0x358] sm:$0xff]
    %v2043 = vld [vmem:[%s5 + $0x360] sm:$0xff]
    %v2044 = vld [vmem:[%s5 + $0x368] sm:$0xff]
    %v2045 = vld [vmem:[%s5 + $0x370] sm:$0xff]
    %v2046 = vld [vmem:[%s5 + $0x378] sm:$0xff]
    %v2047 = vld [vmem:[%s5 + $0x380] sm:$0xff]
    %v2048 = vld [vmem:[%s5 + $0x388] sm:$0xff]
    %v2049 = vld [vmem:[%s5 + $0x390] sm:$0xff]
    %v2050 = vld [vmem:[%s5 + $0x398] sm:$0xff]
    %v2051 = vld [vmem:[%s5 + $0x3a0] sm:$0xff]
    %v2052 = vld [vmem:[%s5 + $0x3a8] sm:$0xff]
    %v2053 = vld [vmem:[%s5 + $0x3b0] sm:$0xff]
    %v2054 = vld [vmem:[%s5 + $0x3b8] sm:$0xff]
    %v2055 = vld [vmem:[%s5 + $0x3c0] sm:$0xff]
    %v2056 = vld [vmem:[%s5 + $0x3c8] sm:$0xff]
    %v2057 = vld [vmem:[%s5 + $0x3d0] sm:$0xff]
    %v2058 = vld [vmem:[%s5 + $0x3d8] sm:$0xff]
    %v2059 = vld [vmem:[%s5 + $0x3e0] sm:$0xff]
    %v2060 = vld [vmem:[%s5 + $0x3e8] sm:$0xff]
    %v2061 = vld [vmem:[%s5 + $0x3f0] sm:$0xff]
    %v2062 = vld [vmem:[%s5 + $0x3f8] sm:$0xff]
    %v2063 = vld [vmem:[%s5 + $0x400] sm:$0xff]
    %v2064 = vld [vmem:[%s5 + $0x408] sm:$0xff]
    %v2065 = vld [vmem:[%s5 + $0x410] sm:$0xff]
    %v2066 = vld [vmem:[%s5 + $0x418] sm:$0xff]
    %v2067 = vld [vmem:[%s5 + $0x420] sm:$0xff]
    %v2068 = vld [vmem:[%s5 + $0x428] sm:$0xff]
    %v2069 = vld [vmem:[%s5 + $0x430] sm:$0xff]
    %v2070 = vld [vmem:[%s5 + $0x438] sm:$0xff]
    %v2071 = vld [vmem:[%s5 + $0x440] sm:$0x77]
    %v2072 = vld [vmem:[%s5 + $0x448] sm:$0x77]
    %v2073 = vld [vmem:[%s6] sm:$0xf]
    %v2074 = vpack.c.bf16 %v1930, %v1930
    %v2075 = vpack.c.bf16 %v1931, %v1931
    %v2076 = vpack.c.bf16 %v1932, %v1932
    %v2077 = vpack.c.bf16 %v1933, %v1933
    %v2078 = vpack.c.bf16 %v1934, %v1934
    %v2080 = vlaneseq
    %v2081 = vshrl.u32 %v2080, 7
    %v2082 = vsub.s32 0, %v2081
    %v2083 = vrot.slane %v2073, %v2082
    %v2084 = vlaneseq
    %v2085 = vshrl.u32 %v2084, 7
    %v2086 = vsub.s32 1, %v2085
    %v2087 = vrot.slane %v2073, %v2086
    %v2088 = vlaneseq
    %v2089 = vshrl.u32 %v2088, 7
    %v2090 = vsub.s32 2, %v2089
    %v2091 = vrot.slane %v2073, %v2090
    %v2092 = vlaneseq
    %v2093 = vshrl.u32 %v2092, 7
    %v2094 = vsub.s32 3, %v2093
    %v2095 = vrot.slane %v2073, %v2094
    %v2238 = vunpack.c.l.b16 %v1935
    %v2239 = vunpack.c.h.b16 %v1935
    %v2240 = vunpack.c.l.b16 %v1936
    %v2241 = vunpack.c.h.b16 %v1936
    %v2242 = vunpack.c.l.b16 %v1937
    %v2243 = vunpack.c.h.b16 %v1937
    %v2244 = vunpack.c.l.b16 %v1938
    %v2245 = vunpack.c.h.b16 %v1938
    %v2246 = vunpack.c.l.b16 %v1939
    %v2247 = vunpack.c.h.b16 %v1939
    %v2248 = vunpack.c.l.b16 %v1940
    %v2249 = vunpack.c.h.b16 %v1940
    %v2250 = vunpack.c.l.b16 %v1941
    %v2251 = vunpack.c.h.b16 %v1941
    %v2252 = vunpack.c.l.b16 %v1942
    %v2253 = vunpack.c.h.b16 %v1942
    %v2254 = vunpack.c.l.b16 %v1943
    %v2255 = vunpack.c.h.b16 %v1943
    %v2256 = vunpack.c.l.b16 %v1944
    %v2257 = vunpack.c.h.b16 %v1944
    %v2258 = vunpack.c.l.b16 %v1945
    %v2259 = vunpack.c.h.b16 %v1945
    %v2260 = vunpack.c.l.b16 %v1946
    %v2261 = vunpack.c.h.b16 %v1946
    %v2262 = vunpack.c.l.b16 %v1947
    %v2263 = vunpack.c.h.b16 %v1947
    %v2264 = vunpack.c.l.b16 %v1948
    %v2265 = vunpack.c.h.b16 %v1948
    %v2266 = vunpack.c.l.b16 %v1949
    %v2267 = vunpack.c.h.b16 %v1949
    %v2268 = vunpack.c.l.b16 %v1950
    %v2269 = vunpack.c.h.b16 %v1950
    %v2270 = vunpack.c.l.b16 %v1951
    %v2271 = vunpack.c.h.b16 %v1951
    %v2272 = vunpack.c.l.b16 %v1952
    %v2273 = vunpack.c.h.b16 %v1952
    %v2274 = vunpack.c.l.b16 %v1953
    %v2275 = vunpack.c.h.b16 %v1953
    %v2276 = vunpack.c.l.b16 %v1954
    %v2277 = vunpack.c.h.b16 %v1954
    %v2278 = vunpack.c.l.b16 %v1955
    %v2279 = vunpack.c.h.b16 %v1955
    %v2280 = vunpack.c.l.b16 %v1956
    %v2281 = vunpack.c.h.b16 %v1956
    %v2282 = vunpack.c.l.b16 %v1957
    %v2283 = vunpack.c.h.b16 %v1957
    %v2284 = vunpack.c.l.b16 %v1958
    %v2285 = vunpack.c.h.b16 %v1958
    %v2286 = vunpack.c.l.b16 %v1959
    %v2287 = vunpack.c.h.b16 %v1959
    %v2288 = vunpack.c.l.b16 %v1960
    %v2289 = vunpack.c.h.b16 %v1960
    %v2290 = vunpack.c.l.b16 %v1961
    %v2291 = vunpack.c.h.b16 %v1961
    %v2292 = vunpack.c.l.b16 %v1962
    %v2293 = vunpack.c.h.b16 %v1962
    %v2294 = vunpack.c.l.b16 %v1963
    %v2295 = vunpack.c.h.b16 %v1963
    %v2296 = vunpack.c.l.b16 %v1964
    %v2297 = vunpack.c.h.b16 %v1964
    %v2298 = vunpack.c.l.b16 %v1965
    %v2299 = vunpack.c.h.b16 %v1965
    %v2300 = vunpack.c.l.b16 %v1966
    %v2301 = vunpack.c.h.b16 %v1966
    %v2302 = vunpack.c.l.b16 %v1967
    %v2303 = vunpack.c.h.b16 %v1967
    %v2304 = vunpack.c.l.b16 %v1968
    %v2305 = vunpack.c.h.b16 %v1968
    %v2306 = vunpack.c.l.b16 %v1969
    %v2307 = vunpack.c.h.b16 %v1969
    %v2308 = vunpack.c.l.b16 %v1970
    %v2309 = vunpack.c.h.b16 %v1970
    %v2310 = vunpack.c.l.b16 %v1971
    %v2311 = vunpack.c.h.b16 %v1971
    %v2312 = vunpack.c.l.b16 %v1972
    %v2313 = vunpack.c.h.b16 %v1972
    %v2314 = vunpack.c.l.b16 %v1973
    %v2315 = vunpack.c.h.b16 %v1973
    %v2316 = vunpack.c.l.b16 %v1974
    %v2317 = vunpack.c.h.b16 %v1974
    %v2318 = vunpack.c.l.b16 %v1975
    %v2319 = vunpack.c.h.b16 %v1975
    %v2320 = vunpack.c.l.b16 %v1976
    %v2321 = vunpack.c.h.b16 %v1976
    %v2322 = vunpack.c.l.b16 %v1977
    %v2323 = vunpack.c.h.b16 %v1977
    %v2324 = vunpack.c.l.b16 %v1978
    %v2325 = vunpack.c.h.b16 %v1978
    %v2326 = vunpack.c.l.b16 %v1979
    %v2327 = vunpack.c.h.b16 %v1979
    %v2328 = vunpack.c.l.b16 %v1980
    %v2329 = vunpack.c.h.b16 %v1980
    %v2330 = vunpack.c.l.b16 %v1981
    %v2331 = vunpack.c.h.b16 %v1981
    %v2332 = vunpack.c.l.b16 %v1982
    %v2333 = vunpack.c.h.b16 %v1982
    %v2334 = vunpack.c.l.b16 %v1983
    %v2335 = vunpack.c.h.b16 %v1983
    %v2336 = vunpack.c.l.b16 %v1984
    %v2337 = vunpack.c.h.b16 %v1984
    %v2338 = vunpack.c.l.b16 %v1985
    %v2339 = vunpack.c.h.b16 %v1985
    %v2340 = vunpack.c.l.b16 %v1986
    %v2341 = vunpack.c.h.b16 %v1986
    %v2342 = vunpack.c.l.b16 %v1987
    %v2343 = vunpack.c.h.b16 %v1987
    %v2344 = vunpack.c.l.b16 %v1988
    %v2345 = vunpack.c.h.b16 %v1988
    %v2346 = vunpack.c.l.b16 %v1989
    %v2347 = vunpack.c.h.b16 %v1989
    %v2348 = vunpack.c.l.b16 %v1990
    %v2349 = vunpack.c.h.b16 %v1990
    %v2350 = vunpack.c.l.b16 %v1991
    %v2351 = vunpack.c.h.b16 %v1991
    %v2352 = vunpack.c.l.b16 %v1992
    %v2353 = vunpack.c.h.b16 %v1992
    %v2354 = vunpack.c.l.b16 %v1993
    %v2355 = vunpack.c.h.b16 %v1993
    %v2356 = vunpack.c.l.b16 %v1994
    %v2357 = vunpack.c.h.b16 %v1994
    %v2358 = vunpack.c.l.b16 %v1995
    %v2359 = vunpack.c.h.b16 %v1995
    %v2360 = vunpack.c.l.b16 %v1996
    %v2361 = vunpack.c.h.b16 %v1996
    %v2362 = vunpack.c.l.b16 %v1997
    %v2363 = vunpack.c.h.b16 %v1997
    %v2364 = vunpack.c.l.b16 %v1998
    %v2365 = vunpack.c.h.b16 %v1998
    %v2366 = vunpack.c.l.b16 %v1999
    %v2367 = vunpack.c.h.b16 %v1999
    %v2368 = vunpack.c.l.b16 %v2000
    %v2369 = vunpack.c.h.b16 %v2000
    %v2370 = vunpack.c.l.b16 %v2001
    %v2371 = vunpack.c.h.b16 %v2001
    %v2372 = vunpack.c.l.b16 %v2002
    %v2373 = vunpack.c.h.b16 %v2002
    %v2374 = vunpack.c.l.b16 %v2003
    %v2375 = vunpack.c.h.b16 %v2003
    %v2376 = vunpack.c.l.b16 %v2004
    %v2377 = vunpack.c.h.b16 %v2004
    %v2378 = vunpack.c.l.b16 %v2005
    %v2379 = vunpack.c.h.b16 %v2005
    %v2380 = vunpack.c.l.b16 %v2006
    %v2381 = vunpack.c.h.b16 %v2006
    %v2382 = vunpack.c.l.b16 %v2007
    %v2383 = vunpack.c.h.b16 %v2007
    %v2384 = vunpack.c.l.b16 %v2008
    %v2385 = vunpack.c.h.b16 %v2008
    %v2386 = vunpack.c.l.b16 %v2009
    %v2387 = vunpack.c.h.b16 %v2009
    %v2388 = vunpack.c.l.b16 %v2010
    %v2389 = vunpack.c.h.b16 %v2010
    %v2390 = vunpack.c.l.b16 %v2011
    %v2391 = vunpack.c.h.b16 %v2011
    %v2392 = vunpack.c.l.b16 %v2012
    %v2393 = vunpack.c.h.b16 %v2012
    %v2394 = vunpack.c.l.b16 %v2013
    %v2395 = vunpack.c.h.b16 %v2013
    %v2396 = vunpack.c.l.b16 %v2014
    %v2397 = vunpack.c.h.b16 %v2014
    %v2398 = vunpack.c.l.b16 %v2015
    %v2399 = vunpack.c.h.b16 %v2015
    %v2400 = vunpack.c.l.b16 %v2016
    %v2401 = vunpack.c.h.b16 %v2016
    %v2402 = vunpack.c.l.b16 %v2017
    %v2403 = vunpack.c.h.b16 %v2017
    %v2404 = vunpack.c.l.b16 %v2018
    %v2405 = vunpack.c.h.b16 %v2018
    %v2406 = vunpack.c.l.b16 %v2019
    %v2407 = vunpack.c.h.b16 %v2019
    %v2408 = vunpack.c.l.b16 %v2020
    %v2409 = vunpack.c.h.b16 %v2020
    %v2410 = vunpack.c.l.b16 %v2021
    %v2411 = vunpack.c.h.b16 %v2021
    %v2412 = vunpack.c.l.b16 %v2022
    %v2413 = vunpack.c.h.b16 %v2022
    %v2414 = vunpack.c.l.b16 %v2023
    %v2415 = vunpack.c.h.b16 %v2023
    %v2416 = vunpack.c.l.b16 %v2024
    %v2417 = vunpack.c.h.b16 %v2024
    %v2418 = vunpack.c.l.b16 %v2025
    %v2419 = vunpack.c.h.b16 %v2025
    %v2420 = vunpack.c.l.b16 %v2026
    %v2421 = vunpack.c.h.b16 %v2026
    %v2422 = vunpack.c.l.b16 %v2027
    %v2423 = vunpack.c.h.b16 %v2027
    %v2424 = vunpack.c.l.b16 %v2028
    %v2425 = vunpack.c.h.b16 %v2028
    %v2426 = vunpack.c.l.b16 %v2029
    %v2427 = vunpack.c.h.b16 %v2029
    %v2428 = vunpack.c.l.b16 %v2030
    %v2429 = vunpack.c.h.b16 %v2030
    %v2430 = vunpack.c.l.b16 %v2031
    %v2431 = vunpack.c.h.b16 %v2031
    %v2432 = vunpack.c.l.b16 %v2032
    %v2433 = vunpack.c.h.b16 %v2032
    %v2434 = vunpack.c.l.b16 %v2033
    %v2435 = vunpack.c.h.b16 %v2033
    %v2436 = vunpack.c.l.b16 %v2034
    %v2437 = vunpack.c.h.b16 %v2034
    %v2438 = vunpack.c.l.b16 %v2035
    %v2439 = vunpack.c.h.b16 %v2035
    %v2440 = vunpack.c.l.b16 %v2036
    %v2441 = vunpack.c.h.b16 %v2036
    %v2442 = vunpack.c.l.b16 %v2037
    %v2443 = vunpack.c.h.b16 %v2037
    %v2444 = vunpack.c.l.b16 %v2038
    %v2445 = vunpack.c.h.b16 %v2038
    %v2446 = vunpack.c.l.b16 %v2039
    %v2447 = vunpack.c.h.b16 %v2039
    %v2448 = vunpack.c.l.b16 %v2040
    %v2449 = vunpack.c.h.b16 %v2040
    %v2450 = vunpack.c.l.b16 %v2041
    %v2451 = vunpack.c.h.b16 %v2041
    %v2452 = vunpack.c.l.b16 %v2042
    %v2453 = vunpack.c.h.b16 %v2042
    %v2454 = vunpack.c.l.b16 %v2043
    %v2455 = vunpack.c.h.b16 %v2043
    %v2456 = vunpack.c.l.b16 %v2044
    %v2457 = vunpack.c.h.b16 %v2044
    %v2458 = vunpack.c.l.b16 %v2045
    %v2459 = vunpack.c.h.b16 %v2045
    %v2460 = vunpack.c.l.b16 %v2046
    %v2461 = vunpack.c.h.b16 %v2046
    %v2462 = vunpack.c.l.b16 %v2047
    %v2463 = vunpack.c.h.b16 %v2047
    %v2464 = vunpack.c.l.b16 %v2048
    %v2465 = vunpack.c.h.b16 %v2048
    %v2466 = vunpack.c.l.b16 %v2049
    %v2467 = vunpack.c.h.b16 %v2049
    %v2468 = vunpack.c.l.b16 %v2050
    %v2469 = vunpack.c.h.b16 %v2050
    %v2470 = vunpack.c.l.b16 %v2051
    %v2471 = vunpack.c.h.b16 %v2051
    %v2472 = vunpack.c.l.b16 %v2052
    %v2473 = vunpack.c.h.b16 %v2052
    %v2474 = vunpack.c.l.b16 %v2053
    %v2475 = vunpack.c.h.b16 %v2053
    %v2476 = vunpack.c.l.b16 %v2054
    %v2477 = vunpack.c.h.b16 %v2054
    %v2478 = vunpack.c.l.b16 %v2055
    %v2479 = vunpack.c.h.b16 %v2055
    %v2480 = vunpack.c.l.b16 %v2056
    %v2481 = vunpack.c.h.b16 %v2056
    %v2482 = vunpack.c.l.b16 %v2057
    %v2483 = vunpack.c.h.b16 %v2057
    %v2484 = vunpack.c.l.b16 %v2058
    %v2485 = vunpack.c.h.b16 %v2058
    %v2486 = vunpack.c.l.b16 %v2059
    %v2487 = vunpack.c.h.b16 %v2059
    %v2488 = vunpack.c.l.b16 %v2060
    %v2489 = vunpack.c.h.b16 %v2060
    %v2490 = vunpack.c.l.b16 %v2061
    %v2491 = vunpack.c.h.b16 %v2061
    %v2492 = vunpack.c.l.b16 %v2062
    %v2493 = vunpack.c.h.b16 %v2062
    %v2494 = vunpack.c.l.b16 %v2063
    %v2495 = vunpack.c.h.b16 %v2063
    %v2496 = vunpack.c.l.b16 %v2064
    %v2497 = vunpack.c.h.b16 %v2064
    %v2498 = vunpack.c.l.b16 %v2065
    %v2499 = vunpack.c.h.b16 %v2065
    %v2500 = vunpack.c.l.b16 %v2066
    %v2501 = vunpack.c.h.b16 %v2066
    %v2502 = vunpack.c.l.b16 %v2067
    %v2503 = vunpack.c.h.b16 %v2067
    %v2504 = vunpack.c.l.b16 %v2068
    %v2505 = vunpack.c.h.b16 %v2068
    %v2506 = vunpack.c.l.b16 %v2069
    %v2507 = vunpack.c.h.b16 %v2069
    %v2508 = vunpack.c.l.b16 %v2070
    %v2509 = vunpack.c.h.b16 %v2070
    %v2510 = vunpack.c.l.b16 %v2071
    %v2511 = vunpack.c.h.b16 %v2071
    %v2512 = vunpack.c.l.b16 %v2072
    %v2513 = vunpack.c.h.b16 %v2072
    %v2514 = vpack.c.b16 %v2242, %v2238
    %v2515 = vpack.c.b16 %v2243, %v2239
    %v2516 = vpack.c.b16 %v2244, %v2240
    %v2517 = vpack.c.b16 %v2245, %v2241
    %v2518 = vpack.c.b16 %v2250, %v2246
    %v2519 = vpack.c.b16 %v2251, %v2247
    %v2520 = vpack.c.b16 %v2252, %v2248
    %v2521 = vpack.c.b16 %v2253, %v2249
    %v2522 = vpack.c.b16 %v2258, %v2254
    %v2523 = vpack.c.b16 %v2259, %v2255
    %v2524 = vpack.c.b16 %v2260, %v2256
    %v2525 = vpack.c.b16 %v2261, %v2257
    %v2526 = vpack.c.b16 %v2266, %v2262
    %v2527 = vpack.c.b16 %v2267, %v2263
    %v2528 = vpack.c.b16 %v2268, %v2264
    %v2529 = vpack.c.b16 %v2269, %v2265
    %v2530 = vpack.c.b16 %v2274, %v2270
    %v2531 = vpack.c.b16 %v2275, %v2271
    %v2532 = vpack.c.b16 %v2276, %v2272
    %v2533 = vpack.c.b16 %v2277, %v2273
    %v2534 = vpack.c.b16 %v2282, %v2278
    %v2535 = vpack.c.b16 %v2283, %v2279
    %v2536 = vpack.c.b16 %v2284, %v2280
    %v2537 = vpack.c.b16 %v2285, %v2281
    %v2538 = vpack.c.b16 %v2290, %v2286
    %v2539 = vpack.c.b16 %v2291, %v2287
    %v2540 = vpack.c.b16 %v2292, %v2288
    %v2541 = vpack.c.b16 %v2293, %v2289
    %v2542 = vpack.c.b16 %v2298, %v2294
    %v2543 = vpack.c.b16 %v2299, %v2295
    %v2544 = vpack.c.b16 %v2300, %v2296
    %v2545 = vpack.c.b16 %v2301, %v2297
    %v2546 = vpack.c.b16 %v2306, %v2302
    %v2547 = vpack.c.b16 %v2307, %v2303
    %v2548 = vpack.c.b16 %v2308, %v2304
    %v2549 = vpack.c.b16 %v2309, %v2305
    %v2550 = vpack.c.b16 %v2314, %v2310
    %v2551 = vpack.c.b16 %v2315, %v2311
    %v2552 = vpack.c.b16 %v2316, %v2312
    %v2553 = vpack.c.b16 %v2317, %v2313
    %v2554 = vpack.c.b16 %v2322, %v2318
    %v2555 = vpack.c.b16 %v2323, %v2319
    %v2556 = vpack.c.b16 %v2324, %v2320
    %v2557 = vpack.c.b16 %v2325, %v2321
    %v2558 = vpack.c.b16 %v2330, %v2326
    %v2559 = vpack.c.b16 %v2331, %v2327
    %v2560 = vpack.c.b16 %v2332, %v2328
    %v2561 = vpack.c.b16 %v2333, %v2329
    %v2562 = vpack.c.b16 %v2338, %v2334
    %v2563 = vpack.c.b16 %v2339, %v2335
    %v2564 = vpack.c.b16 %v2340, %v2336
    %v2565 = vpack.c.b16 %v2341, %v2337
    %v2566 = vpack.c.b16 %v2346, %v2342
    %v2567 = vpack.c.b16 %v2347, %v2343
    %v2568 = vpack.c.b16 %v2348, %v2344
    %v2569 = vpack.c.b16 %v2349, %v2345
    %v2570 = vpack.c.b16 %v2354, %v2350
    %v2571 = vpack.c.b16 %v2355, %v2351
    %v2572 = vpack.c.b16 %v2356, %v2352
    %v2573 = vpack.c.b16 %v2357, %v2353
    %v2574 = vpack.c.b16 %v2362, %v2358
    %v2575 = vpack.c.b16 %v2363, %v2359
    %v2576 = vpack.c.b16 %v2364, %v2360
    %v2577 = vpack.c.b16 %v2365, %v2361
    %v2578 = vpack.c.b16 %v2370, %v2366
    %v2579 = vpack.c.b16 %v2371, %v2367
    %v2580 = vpack.c.b16 %v2372, %v2368
    %v2581 = vpack.c.b16 %v2373, %v2369
    %v2582 = vpack.c.b16 %v2378, %v2374
    %v2583 = vpack.c.b16 %v2379, %v2375
    %v2584 = vpack.c.b16 %v2380, %v2376
    %v2585 = vpack.c.b16 %v2381, %v2377
    %v2586 = vpack.c.b16 %v2386, %v2382
    %v2587 = vpack.c.b16 %v2387, %v2383
    %v2588 = vpack.c.b16 %v2388, %v2384
    %v2589 = vpack.c.b16 %v2389, %v2385
    %v2590 = vpack.c.b16 %v2394, %v2390
    %v2591 = vpack.c.b16 %v2395, %v2391
    %v2592 = vpack.c.b16 %v2396, %v2392
    %v2593 = vpack.c.b16 %v2397, %v2393
    %v2594 = vpack.c.b16 %v2402, %v2398
    %v2595 = vpack.c.b16 %v2403, %v2399
    %v2596 = vpack.c.b16 %v2404, %v2400
    %v2597 = vpack.c.b16 %v2405, %v2401
    %v2598 = vpack.c.b16 %v2410, %v2406
    %v2599 = vpack.c.b16 %v2411, %v2407
    %v2600 = vpack.c.b16 %v2412, %v2408
    %v2601 = vpack.c.b16 %v2413, %v2409
    %v2602 = vpack.c.b16 %v2418, %v2414
    %v2603 = vpack.c.b16 %v2419, %v2415
    %v2604 = vpack.c.b16 %v2420, %v2416
    %v2605 = vpack.c.b16 %v2421, %v2417
    %v2606 = vpack.c.b16 %v2426, %v2422
    %v2607 = vpack.c.b16 %v2427, %v2423
    %v2608 = vpack.c.b16 %v2428, %v2424
    %v2609 = vpack.c.b16 %v2429, %v2425
    %v2610 = vpack.c.b16 %v2434, %v2430
    %v2611 = vpack.c.b16 %v2435, %v2431
    %v2612 = vpack.c.b16 %v2436, %v2432
    %v2613 = vpack.c.b16 %v2437, %v2433
    %v2614 = vpack.c.b16 %v2442, %v2438
    %v2615 = vpack.c.b16 %v2443, %v2439
    %v2616 = vpack.c.b16 %v2444, %v2440
    %v2617 = vpack.c.b16 %v2445, %v2441
    %v2618 = vpack.c.b16 %v2450, %v2446
    %v2619 = vpack.c.b16 %v2451, %v2447
    %v2620 = vpack.c.b16 %v2452, %v2448
    %v2621 = vpack.c.b16 %v2453, %v2449
    %v2622 = vpack.c.b16 %v2458, %v2454
    %v2623 = vpack.c.b16 %v2459, %v2455
    %v2624 = vpack.c.b16 %v2460, %v2456
    %v2625 = vpack.c.b16 %v2461, %v2457
    %v2626 = vpack.c.b16 %v2466, %v2462
    %v2627 = vpack.c.b16 %v2467, %v2463
    %v2628 = vpack.c.b16 %v2468, %v2464
    %v2629 = vpack.c.b16 %v2469, %v2465
    %v2630 = vpack.c.b16 %v2474, %v2470
    %v2631 = vpack.c.b16 %v2475, %v2471
    %v2632 = vpack.c.b16 %v2476, %v2472
    %v2633 = vpack.c.b16 %v2477, %v2473
    %v2634 = vpack.c.b16 %v2482, %v2478
    %v2635 = vpack.c.b16 %v2483, %v2479
    %v2636 = vpack.c.b16 %v2484, %v2480
    %v2637 = vpack.c.b16 %v2485, %v2481
    %v2638 = vpack.c.b16 %v2490, %v2486
    %v2639 = vpack.c.b16 %v2491, %v2487
    %v2640 = vpack.c.b16 %v2492, %v2488
    %v2641 = vpack.c.b16 %v2493, %v2489
    %v2642 = vpack.c.b16 %v2498, %v2494
    %v2643 = vpack.c.b16 %v2499, %v2495
    %v2644 = vpack.c.b16 %v2500, %v2496
    %v2645 = vpack.c.b16 %v2501, %v2497
    %v2646 = vpack.c.b16 %v2506, %v2502
    %v2647 = vpack.c.b16 %v2507, %v2503
    %v2648 = vpack.c.b16 %v2508, %v2504
    %v2649 = vpack.c.b16 %v2509, %v2505
    %v2650 = vpack.c.b16 %v2510, %v2510
    %v2651 = vpack.c.b16 %v2511, %v2511
    %v2652 = vpack.c.b16 %v2512, %v2512
    %v2653 = vpack.c.b16 %v2513, %v2513
    %vm2790 = vcmask 310272
    %v2792 = vsel %vm2790, %v2078, 0
    %vm2794 = vcmask 1042432
    %v2796 = vsel %vm2794, %v2650, 0
    %v2799 = vsel %vm2794, %v2651, 0
    %v2802 = vsel %vm2794, %v2652, 0
    %v2805 = vsel %vm2794, %v2653, 0
    %2807 = vmatprep.subr.bf16.mxu0 %v2543
    %2808 = vmatpush1.bf16.msra.mxu0 %v2542
    %2809 = vmatprep.subr.bf16.mxu0 %v2539
    %2810 = vmatpush1.bf16.msra.mxu0 %v2538
    %2811 = vmatprep.subr.bf16.mxu0 %v2535
    %2812 = vmatpush1.bf16.msra.mxu0 %v2534
    %2813 = vmatprep.subr.bf16.mxu0 %v2531
    %2814 = vmatpush1.bf16.msra.mxu0 %v2530
    %2815 = vmatprep.subr.bf16.mxu0 %v2527
    %2816 = vmatpush1.bf16.msra.mxu0 %v2526
    %2817 = vmatprep.subr.bf16.mxu0 %v2523
    %2818 = vmatpush1.bf16.msra.mxu0 %v2522
    %2819 = vmatprep.subr.bf16.mxu0 %v2519
    %2820 = vmatpush1.bf16.msra.mxu0 %v2518
    %2821 = vmatprep.subr.bf16.mxu0 %v2515
    %2822 = vmatpush1.bf16.msra.mxu0 %v2514
    %2823 = vmatprep.subr.bf16.mxu0 %v2575
    %2824 = vmatpush2.bf16.msra.mxu0 %v2574
    %2825 = vmatprep.subr.bf16.mxu0 %v2571
    %2826 = vmatpush2.bf16.msra.mxu0 %v2570
    %2827 = vmatprep.subr.bf16.mxu0 %v2567
    %2828 = vmatpush2.bf16.msra.mxu0 %v2566
    %2829 = vmatprep.subr.bf16.mxu0 %v2563
    %2830 = vmatpush2.bf16.msra.mxu0 %v2562
    %2831 = vmatprep.subr.bf16.mxu0 %v2559
    %2832 = vmatpush2.bf16.msra.mxu0 %v2558
    %2833 = vmatprep.subr.bf16.mxu0 %v2555
    %2834 = vmatpush2.bf16.msra.mxu0 %v2554
    %2835 = vmatprep.subr.bf16.mxu0 %v2551
    %2836 = vmatpush2.bf16.msra.mxu0 %v2550
    %2837 = vmatprep.subr.bf16.mxu0 %v2547
    %2838 = vmatpush2.bf16.msra.mxu0 %v2546
    %2839 = vmatprep.mubr.bf16.mxu0 %v2075
    %2840 = vmatmul.mubr.bf16.gmra.mxu0 %v2074
    %v2841 = vpop.f32.mrf.mxu0
    %v2842 = vadd.f32 %v2083, %v2841
    %v2843 = vpop.f32.mrf.mxu0
    %v2844 = vadd.f32 %v2087, %v2843
    %v2845 = vpop.f32.mrf.mxu0
    %v2846 = vpop.f32.mrf.mxu0
    %2847 = vdwg.mxu0
    %2848 = vmatprep.subr.bf16.mxu0 %v2607
    %2849 = vmatpush1.bf16.msra.mxu0 %v2606
    %2850 = vmatprep.subr.bf16.mxu0 %v2603
    %2851 = vmatpush1.bf16.msra.mxu0 %v2602
    %2852 = vmatprep.subr.bf16.mxu0 %v2599
    %2853 = vmatpush1.bf16.msra.mxu0 %v2598
    %2854 = vmatprep.subr.bf16.mxu0 %v2595
    %2855 = vmatpush1.bf16.msra.mxu0 %v2594
    %2856 = vmatprep.subr.bf16.mxu0 %v2591
    %2857 = vmatpush1.bf16.msra.mxu0 %v2590
    %2858 = vmatprep.subr.bf16.mxu0 %v2587
    %2859 = vmatpush1.bf16.msra.mxu0 %v2586
    %2860 = vmatprep.subr.bf16.mxu0 %v2583
    %2861 = vmatpush1.bf16.msra.mxu0 %v2582
    %2862 = vmatprep.subr.bf16.mxu0 %v2579
    %2863 = vmatpush1.bf16.msra.mxu0 %v2578
    %2864 = vmatprep.subr.bf16.mxu0 %v2639
    %2865 = vmatpush2.bf16.msra.mxu0 %v2638
    %2866 = vmatprep.subr.bf16.mxu0 %v2635
    %2867 = vmatpush2.bf16.msra.mxu0 %v2634
    %2868 = vmatprep.subr.bf16.mxu0 %v2631
    %2869 = vmatpush2.bf16.msra.mxu0 %v2630
    %2870 = vmatprep.subr.bf16.mxu0 %v2627
    %2871 = vmatpush2.bf16.msra.mxu0 %v2626
    %2872 = vmatprep.subr.bf16.mxu0 %v2623
    %2873 = vmatpush2.bf16.msra.mxu0 %v2622
    %2874 = vmatprep.subr.bf16.mxu0 %v2619
    %2875 = vmatpush2.bf16.msra.mxu0 %v2618
    %2876 = vmatprep.subr.bf16.mxu0 %v2615
    %2877 = vmatpush2.bf16.msra.mxu0 %v2614
    %2878 = vmatprep.subr.bf16.mxu0 %v2611
    %2879 = vmatpush2.bf16.msra.mxu0 %v2610
    %2880 = vmatprep.mubr.bf16.mxu0 %v2077
    %2881 = vmatmul.mubr.bf16.gmra.mxu0 %v2076
    %v2882 = vpop.f32.mrf.mxu0
    %v2883 = vadd.f32 %v2842, %v2882
    %v2884 = vpop.f32.mrf.mxu0
    %v2885 = vadd.f32 %v2844, %v2884
    %v2886 = vpop.f32.mrf.mxu0
    %v2887 = vpop.f32.mrf.mxu0
    %2888 = vdwg.mxu0
    %2889 = vmatprep.subr.bf16.mxu0 0
    %2890 = vmatpush1.bf16.msra.mxu0 0
    %2891 = vmatprep.subr.bf16.mxu0 0
    %2892 = vmatpush1.bf16.msra.mxu0 0
    %2893 = vmatprep.subr.bf16.mxu0 0
    %2894 = vmatpush1.bf16.msra.mxu0 0
    %2895 = vmatprep.subr.bf16.mxu0 0
    %2896 = vmatpush1.bf16.msra.mxu0 0
    %2897 = vmatprep.subr.bf16.mxu0 0
    %2898 = vmatpush1.bf16.msra.mxu0 0
    %2899 = vmatprep.subr.bf16.mxu0 %v2799
    %2900 = vmatpush1.bf16.msra.mxu0 %v2796
    %2901 = vmatprep.subr.bf16.mxu0 %v2647
    %2902 = vmatpush1.bf16.msra.mxu0 %v2646
    %2903 = vmatprep.subr.bf16.mxu0 %v2643
    %2904 = vmatpush1.bf16.msra.mxu0 %v2642
    %2905 = vmatprep.subr.bf16.mxu0 0
    %2906 = vmatpush2.bf16.msra.mxu0 0
    %2907 = vmatprep.subr.bf16.mxu0 0
    %2908 = vmatpush2.bf16.msra.mxu0 0
    %2909 = vmatprep.subr.bf16.mxu0 0
    %2910 = vmatpush2.bf16.msra.mxu0 0
    %2911 = vmatprep.subr.bf16.mxu0 0
    %2912 = vmatpush2.bf16.msra.mxu0 0
    %2913 = vmatprep.subr.bf16.mxu0 0
    %2914 = vmatpush2.bf16.msra.mxu0 0
    %2915 = vmatprep.subr.bf16.mxu0 0
    %2916 = vmatpush2.bf16.msra.mxu0 0
    %2917 = vmatprep.subr.bf16.mxu0 0
    %2918 = vmatpush2.bf16.msra.mxu0 0
    %2919 = vmatprep.subr.bf16.mxu0 0
    %2920 = vmatpush2.bf16.msra.mxu0 0
    %2921 = vmatprep.mubr.bf16.mxu0 0
    %2922 = vmatmul.mubr.bf16.gmra.mxu0 %v2792
    %v2923 = vpop.f32.mrf.mxu0
    %v2924 = vadd.f32 %v2883, %v2923
    %v2925 = vpop.f32.mrf.mxu0
    %v2926 = vadd.f32 %v2885, %v2925
    %v2927 = vpop.f32.mrf.mxu0
    %v2928 = vpop.f32.mrf.mxu0
    %2929 = vdwg.mxu0
    %2930 = vmatprep.subr.bf16.mxu0 %v2545
    %2931 = vmatpush1.bf16.msra.mxu0 %v2544
    %2932 = vmatprep.subr.bf16.mxu0 %v2541
    %2933 = vmatpush1.bf16.msra.mxu0 %v2540
    %2934 = vmatprep.subr.bf16.mxu0 %v2537
    %2935 = vmatpush1.bf16.msra.mxu0 %v2536
    %2936 = vmatprep.subr.bf16.mxu0 %v2533
    %2937 = vmatpush1.bf16.msra.mxu0 %v2532
    %2938 = vmatprep.subr.bf16.mxu0 %v2529
    %2939 = vmatpush1.bf16.msra.mxu0 %v2528
    %2940 = vmatprep.subr.bf16.mxu0 %v2525
    %2941 = vmatpush1.bf16.msra.mxu0 %v2524
    %2942 = vmatprep.subr.bf16.mxu0 %v2521
    %2943 = vmatpush1.bf16.msra.mxu0 %v2520
    %2944 = vmatprep.subr.bf16.mxu0 %v2517
    %2945 = vmatpush1.bf16.msra.mxu0 %v2516
    %2946 = vmatprep.subr.bf16.mxu0 %v2577
    %2947 = vmatpush2.bf16.msra.mxu0 %v2576
    %2948 = vmatprep.subr.bf16.mxu0 %v2573
    %2949 = vmatpush2.bf16.msra.mxu0 %v2572
    %2950 = vmatprep.subr.bf16.mxu0 %v2569
    %2951 = vmatpush2.bf16.msra.mxu0 %v2568
    %2952 = vmatprep.subr.bf16.mxu0 %v2565
    %2953 = vmatpush2.bf16.msra.mxu0 %v2564
    %2954 = vmatprep.subr.bf16.mxu0 %v2561
    %2955 = vmatpush2.bf16.msra.mxu0 %v2560
    %2956 = vmatprep.subr.bf16.mxu0 %v2557
    %2957 = vmatpush2.bf16.msra.mxu0 %v2556
    %2958 = vmatprep.subr.bf16.mxu0 %v2553
    %2959 = vmatpush2.bf16.msra.mxu0 %v2552
    %2960 = vmatprep.subr.bf16.mxu0 %v2549
    %2961 = vmatpush2.bf16.msra.mxu0 %v2548
    %2962 = vmatprep.mubr.bf16.mxu0 %v2075
    %2963 = vmatmul.mubr.bf16.gmra.mxu0 %v2074
    %v2964 = vpop.f32.mrf.mxu0
    %v2965 = vadd.f32 %v2091, %v2964
    %v2966 = vpop.f32.mrf.mxu0
    %v2967 = vadd.f32 %v2095, %v2966
    %v2968 = vpop.f32.mrf.mxu0
    %v2969 = vpop.f32.mrf.mxu0
    %2970 = vdwg.mxu0
    %2971 = vmatprep.subr.bf16.mxu0 %v2609
    %2972 = vmatpush1.bf16.msra.mxu0 %v2608
    %2973 = vmatprep.subr.bf16.mxu0 %v2605
    %2974 = vmatpush1.bf16.msra.mxu0 %v2604
    %2975 = vmatprep.subr.bf16.mxu0 %v2601
    %2976 = vmatpush1.bf16.msra.mxu0 %v2600
    %2977 = vmatprep.subr.bf16.mxu0 %v2597
    %2978 = vmatpush1.bf16.msra.mxu0 %v2596
    %2979 = vmatprep.subr.bf16.mxu0 %v2593
    %2980 = vmatpush1.bf16.msra.mxu0 %v2592
    %2981 = vmatprep.subr.bf16.mxu0 %v2589
    %2982 = vmatpush1.bf16.msra.mxu0 %v2588
    %2983 = vmatprep.subr.bf16.mxu0 %v2585
    %2984 = vmatpush1.bf16.msra.mxu0 %v2584
    %2985 = vmatprep.subr.bf16.mxu0 %v2581
    %2986 = vmatpush1.bf16.msra.mxu0 %v2580
    %2987 = vmatprep.subr.bf16.mxu0 %v2641
    %2988 = vmatpush2.bf16.msra.mxu0 %v2640
    %2989 = vmatprep.subr.bf16.mxu0 %v2637
    %2990 = vmatpush2.bf16.msra.mxu0 %v2636
    %2991 = vmatprep.subr.bf16.mxu0 %v2633
    %2992 = vmatpush2.bf16.msra.mxu0 %v2632
    %2993 = vmatprep.subr.bf16.mxu0 %v2629
    %2994 = vmatpush2.bf16.msra.mxu0 %v2628
    %2995 = vmatprep.subr.bf16.mxu0 %v2625
    %2996 = vmatpush2.bf16.msra.mxu0 %v2624
    %2997 = vmatprep.subr.bf16.mxu0 %v2621
    %2998 = vmatpush2.bf16.msra.mxu0 %v2620
    %2999 = vmatprep.subr.bf16.mxu0 %v2617
    %3000 = vmatpush2.bf16.msra.mxu0 %v2616
    %3001 = vmatprep.subr.bf16.mxu0 %v2613
    %3002 = vmatpush2.bf16.msra.mxu0 %v2612
    %3003 = vmatprep.mubr.bf16.mxu0 %v2077
    %3004 = vmatmul.mubr.bf16.gmra.mxu0 %v2076
    %v3005 = vpop.f32.mrf.mxu0
    %v3006 = vadd.f32 %v2965, %v3005
    %v3007 = vpop.f32.mrf.mxu0
    %v3008 = vadd.f32 %v2967, %v3007
    %v3009 = vpop.f32.mrf.mxu0
    %v3010 = vpop.f32.mrf.mxu0
    %3011 = vdwg.mxu0
    %3012 = vmatprep.subr.bf16.mxu0 0
    %3013 = vmatpush1.bf16.msra.mxu0 0
    %3014 = vmatprep.subr.bf16.mxu0 0
    %3015 = vmatpush1.bf16.msra.mxu0 0
    %3016 = vmatprep.subr.bf16.mxu0 0
    %3017 = vmatpush1.bf16.msra.mxu0 0
    %3018 = vmatprep.subr.bf16.mxu0 0
    %3019 = vmatpush1.bf16.msra.mxu0 0
    %3020 = vmatprep.subr.bf16.mxu0 0
    %3021 = vmatpush1.bf16.msra.mxu0 0
    %3022 = vmatprep.subr.bf16.mxu0 %v2805
    %3023 = vmatpush1.bf16.msra.mxu0 %v2802
    %3024 = vmatprep.subr.bf16.mxu0 %v2649
    %3025 = vmatpush1.bf16.msra.mxu0 %v2648
    %3026 = vmatprep.subr.bf16.mxu0 %v2645
    %3027 = vmatpush1.bf16.msra.mxu0 %v2644
    %3028 = vmatprep.subr.bf16.mxu0 0
    %3029 = vmatpush2.bf16.msra.mxu0 0
    %3030 = vmatprep.subr.bf16.mxu0 0
    %3031 = vmatpush2.bf16.msra.mxu0 0
    %3032 = vmatprep.subr.bf16.mxu0 0
    %3033 = vmatpush2.bf16.msra.mxu0 0
    %3034 = vmatprep.subr.bf16.mxu0 0
    %3035 = vmatpush2.bf16.msra.mxu0 0
    %3036 = vmatprep.subr.bf16.mxu0 0
    %3037 = vmatpush2.bf16.msra.mxu0 0
    %3038 = vmatprep.subr.bf16.mxu0 0
    %3039 = vmatpush2.bf16.msra.mxu0 0
    %3040 = vmatprep.subr.bf16.mxu0 0
    %3041 = vmatpush2.bf16.msra.mxu0 0
    %3042 = vmatprep.subr.bf16.mxu0 0
    %3043 = vmatpush2.bf16.msra.mxu0 0
    %3044 = vmatprep.mubr.bf16.mxu0 0
    %3045 = vmatmul.mubr.bf16.gmra.mxu0 %v2792
    %v3046 = vpop.f32.mrf.mxu0
    %v3047 = vadd.f32 %v3006, %v3046
    %v3048 = vpop.f32.mrf.mxu0
    %v3049 = vadd.f32 %v3008, %v3048
    %v3050 = vpop.f32.mrf.mxu0
    %v3051 = vpop.f32.mrf.mxu0
    %3052 = vdwg.mxu0
    %v3053 = vmax.f32 %v2924, 0.0
    %v3054 = vmax.f32 %v2926, 0.0
    %v3055 = vmax.f32 %v3047, 0.0
    %v3056 = vmax.f32 %v3049, 0.0
    %v3057 = vld [vmem:[%s7] sm:$0xff]
    %v3058 = vld [vmem:[%s7 + $0x8] sm:$0xff]
    %v3059 = vld [vmem:[%s7 + $0x10] sm:$0xff]
    %v3060 = vld [vmem:[%s7 + $0x18] sm:$0xff]
    %v3061 = vld [vmem:[%s7 + $0x20] sm:$0xff]
    %v3062 = vld [vmem:[%s7 + $0x28] sm:$0xff]
    %v3063 = vld [vmem:[%s7 + $0x30] sm:$0xff]
    %v3064 = vld [vmem:[%s7 + $0x38] sm:$0xff]
    %v3065 = vld [vmem:[%s7 + $0x40] sm:$0xff]
    %v3066 = vld [vmem:[%s7 + $0x48] sm:$0xff]
    %v3067 = vld [vmem:[%s7 + $0x50] sm:$0xff]
    %v3068 = vld [vmem:[%s7 + $0x58] sm:$0xff]
    %v3069 = vld [vmem:[%s7 + $0x60] sm:$0xff]
    %v3070 = vld [vmem:[%s7 + $0x68] sm:$0xff]
    %v3071 = vld [vmem:[%s7 + $0x70] sm:$0xff]
    %v3072 = vld [vmem:[%s7 + $0x78] sm:$0xff]
    %v3073 = vld [vmem:[%s7 + $0x80] sm:$0xff]
    %v3074 = vld [vmem:[%s7 + $0x88] sm:$0xff]
    %v3075 = vld [vmem:[%s7 + $0x90] sm:$0xff]
    %v3076 = vld [vmem:[%s7 + $0x98] sm:$0xff]
    %v3077 = vld [vmem:[%s7 + $0xa0] sm:$0xff]
    %v3078 = vld [vmem:[%s7 + $0xa8] sm:$0xff]
    %v3079 = vld [vmem:[%s7 + $0xb0] sm:$0xff]
    %v3080 = vld [vmem:[%s7 + $0xb8] sm:$0xff]
    %v3081 = vld [vmem:[%s7 + $0xc0] sm:$0xff]
    %v3082 = vld [vmem:[%s7 + $0xc8] sm:$0xff]
    %v3083 = vld [vmem:[%s7 + $0xd0] sm:$0xff]
    %v3084 = vld [vmem:[%s7 + $0xd8] sm:$0xff]
    %v3085 = vld [vmem:[%s7 + $0xe0] sm:$0xff]
    %v3086 = vld [vmem:[%s7 + $0xe8] sm:$0xff]
    %v3087 = vld [vmem:[%s7 + $0xf0] sm:$0xff]
    %v3088 = vld [vmem:[%s7 + $0xf8] sm:$0xff]
    %v3089 = vld [vmem:[%s7 + $0x100] sm:$0xff]
    %v3090 = vld [vmem:[%s7 + $0x108] sm:$0xff]
    %v3091 = vld [vmem:[%s7 + $0x110] sm:$0xff]
    %v3092 = vld [vmem:[%s7 + $0x118] sm:$0xff]
    %v3093 = vld [vmem:[%s7 + $0x120] sm:$0xff]
    %v3094 = vld [vmem:[%s7 + $0x128] sm:$0xff]
    %v3095 = vld [vmem:[%s7 + $0x130] sm:$0xff]
    %v3096 = vld [vmem:[%s7 + $0x138] sm:$0xff]
    %v3097 = vld [vmem:[%s7 + $0x140] sm:$0xff]
    %v3098 = vld [vmem:[%s7 + $0x148] sm:$0xff]
    %v3099 = vld [vmem:[%s7 + $0x150] sm:$0xff]
    %v3100 = vld [vmem:[%s7 + $0x158] sm:$0xff]
    %v3101 = vld [vmem:[%s7 + $0x160] sm:$0xff]
    %v3102 = vld [vmem:[%s7 + $0x168] sm:$0xff]
    %v3103 = vld [vmem:[%s7 + $0x170] sm:$0xff]
    %v3104 = vld [vmem:[%s7 + $0x178] sm:$0xff]
    %v3105 = vld [vmem:[%s7 + $0x180] sm:$0xff]
    %v3106 = vld [vmem:[%s7 + $0x188] sm:$0xff]
    %v3107 = vld [vmem:[%s7 + $0x190] sm:$0xff]
    %v3108 = vld [vmem:[%s7 + $0x198] sm:$0xff]
    %v3109 = vld [vmem:[%s7 + $0x1a0] sm:$0xff]
    %v3110 = vld [vmem:[%s7 + $0x1a8] sm:$0xff]
    %v3111 = vld [vmem:[%s7 + $0x1b0] sm:$0xff]
    %v3112 = vld [vmem:[%s7 + $0x1b8] sm:$0xff]
    %v3113 = vld [vmem:[%s7 + $0x1c0] sm:$0xff]
    %v3114 = vld [vmem:[%s7 + $0x1c8] sm:$0xff]
    %v3115 = vld [vmem:[%s7 + $0x1d0] sm:$0xff]
    %v3116 = vld [vmem:[%s7 + $0x1d8] sm:$0xff]
    %v3117 = vld [vmem:[%s7 + $0x1e0] sm:$0xff]
    %v3118 = vld [vmem:[%s7 + $0x1e8] sm:$0xff]
    %v3119 = vld [vmem:[%s7 + $0x1f0] sm:$0xff]
    %v3120 = vld [vmem:[%s7 + $0x1f8] sm:$0xff]
    %v3121 = vld [vmem:[%s7 + $0x200] sm:$0xff]
    %v3122 = vld [vmem:[%s7 + $0x208] sm:$0xff]
    %v3123 = vld [vmem:[%s7 + $0x210] sm:$0xff]
    %v3124 = vld [vmem:[%s7 + $0x218] sm:$0xff]
    %v3125 = vld [vmem:[%s7 + $0x220] sm:$0xff]
    %v3126 = vld [vmem:[%s7 + $0x228] sm:$0xff]
    %v3127 = vld [vmem:[%s7 + $0x230] sm:$0xff]
    %v3128 = vld [vmem:[%s7 + $0x238] sm:$0xff]
    %v3129 = vld [vmem:[%s7 + $0x240] sm:$0xff]
    %v3130 = vld [vmem:[%s7 + $0x248] sm:$0xff]
    %v3131 = vld [vmem:[%s7 + $0x250] sm:$0xff]
    %v3132 = vld [vmem:[%s7 + $0x258] sm:$0xff]
    %v3133 = vld [vmem:[%s7 + $0x260] sm:$0xff]
    %v3134 = vld [vmem:[%s7 + $0x268] sm:$0xff]
    %v3135 = vld [vmem:[%s7 + $0x270] sm:$0xff]
    %v3136 = vld [vmem:[%s7 + $0x278] sm:$0xff]
    %v3137 = vld [vmem:[%s7 + $0x280] sm:$0xff]
    %v3138 = vld [vmem:[%s7 + $0x288] sm:$0xff]
    %v3139 = vld [vmem:[%s7 + $0x290] sm:$0xff]
    %v3140 = vld [vmem:[%s7 + $0x298] sm:$0xff]
    %v3141 = vld [vmem:[%s7 + $0x2a0] sm:$0xff]
    %v3142 = vld [vmem:[%s7 + $0x2a8] sm:$0xff]
    %v3143 = vld [vmem:[%s7 + $0x2b0] sm:$0xff]
    %v3144 = vld [vmem:[%s7 + $0x2b8] sm:$0xff]
    %v3145 = vld [vmem:[%s7 + $0x2c0] sm:$0xff]
    %v3146 = vld [vmem:[%s7 + $0x2c8] sm:$0xff]
    %v3147 = vld [vmem:[%s7 + $0x2d0] sm:$0xff]
    %v3148 = vld [vmem:[%s7 + $0x2d8] sm:$0xff]
    %v3149 = vld [vmem:[%s7 + $0x2e0] sm:$0xff]
    %v3150 = vld [vmem:[%s7 + $0x2e8] sm:$0xff]
    %v3151 = vld [vmem:[%s7 + $0x2f0] sm:$0xff]
    %v3152 = vld [vmem:[%s7 + $0x2f8] sm:$0xff]
    %v3153 = vld [vmem:[%s7 + $0x300] sm:$0xff]
    %v3154 = vld [vmem:[%s7 + $0x308] sm:$0xff]
    %v3155 = vld [vmem:[%s7 + $0x310] sm:$0xff]
    %v3156 = vld [vmem:[%s7 + $0x318] sm:$0xff]
    %v3157 = vld [vmem:[%s7 + $0x320] sm:$0xff]
    %v3158 = vld [vmem:[%s7 + $0x328] sm:$0xff]
    %v3159 = vld [vmem:[%s7 + $0x330] sm:$0xff]
    %v3160 = vld [vmem:[%s7 + $0x338] sm:$0xff]
    %v3161 = vld [vmem:[%s7 + $0x340] sm:$0xff]
    %v3162 = vld [vmem:[%s7 + $0x348] sm:$0xff]
    %v3163 = vld [vmem:[%s7 + $0x350] sm:$0xff]
    %v3164 = vld [vmem:[%s7 + $0x358] sm:$0xff]
    %v3165 = vld [vmem:[%s7 + $0x360] sm:$0xff]
    %v3166 = vld [vmem:[%s7 + $0x368] sm:$0xff]
    %v3167 = vld [vmem:[%s7 + $0x370] sm:$0xff]
    %v3168 = vld [vmem:[%s7 + $0x378] sm:$0xff]
    %v3169 = vld [vmem:[%s7 + $0x380] sm:$0xff]
    %v3170 = vld [vmem:[%s7 + $0x388] sm:$0xff]
    %v3171 = vld [vmem:[%s7 + $0x390] sm:$0xff]
    %v3172 = vld [vmem:[%s7 + $0x398] sm:$0xff]
    %v3173 = vld [vmem:[%s7 + $0x3a0] sm:$0xff]
    %v3174 = vld [vmem:[%s7 + $0x3a8] sm:$0xff]
    %v3175 = vld [vmem:[%s7 + $0x3b0] sm:$0xff]
    %v3176 = vld [vmem:[%s7 + $0x3b8] sm:$0xff]
    %v3177 = vld [vmem:[%s7 + $0x3c0] sm:$0xff]
    %v3178 = vld [vmem:[%s7 + $0x3c8] sm:$0xff]
    %v3179 = vld [vmem:[%s7 + $0x3d0] sm:$0xff]
    %v3180 = vld [vmem:[%s7 + $0x3d8] sm:$0xff]
    %v3181 = vld [vmem:[%s7 + $0x3e0] sm:$0x33]
    %v3182 = vld [vmem:[%s7 + $0x3e8] sm:$0x33]
    %v3183 = vld [vmem:[%s8] sm:$0xf]
    %v3184 = vpack.c.bf16 %v3053, %v3053
    %v3185 = vpack.c.bf16 %v3054, %v3054
    %v3186 = vpack.c.bf16 %v3055, %v3055
    %v3187 = vpack.c.bf16 %v3056, %v3056
    %v3189 = vlaneseq
    %v3190 = vshrl.u32 %v3189, 7
    %v3191 = vsub.s32 0, %v3190
    %v3192 = vrot.slane %v3183, %v3191
    %v3193 = vlaneseq
    %v3194 = vshrl.u32 %v3193, 7
    %v3195 = vsub.s32 1, %v3194
    %v3196 = vrot.slane %v3183, %v3195
    %v3197 = vlaneseq
    %v3198 = vshrl.u32 %v3197, 7
    %v3199 = vsub.s32 2, %v3198
    %v3200 = vrot.slane %v3183, %v3199
    %v3201 = vlaneseq
    %v3202 = vshrl.u32 %v3201, 7
    %v3203 = vsub.s32 3, %v3202
    %v3204 = vrot.slane %v3183, %v3203
    %v3335 = vunpack.c.l.b16 %v3057
    %v3336 = vunpack.c.h.b16 %v3057
    %v3337 = vunpack.c.l.b16 %v3058
    %v3338 = vunpack.c.h.b16 %v3058
    %v3339 = vunpack.c.l.b16 %v3059
    %v3340 = vunpack.c.h.b16 %v3059
    %v3341 = vunpack.c.l.b16 %v3060
    %v3342 = vunpack.c.h.b16 %v3060
    %v3343 = vunpack.c.l.b16 %v3061
    %v3344 = vunpack.c.h.b16 %v3061
    %v3345 = vunpack.c.l.b16 %v3062
    %v3346 = vunpack.c.h.b16 %v3062
    %v3347 = vunpack.c.l.b16 %v3063
    %v3348 = vunpack.c.h.b16 %v3063
    %v3349 = vunpack.c.l.b16 %v3064
    %v3350 = vunpack.c.h.b16 %v3064
    %v3351 = vunpack.c.l.b16 %v3065
    %v3352 = vunpack.c.h.b16 %v3065
    %v3353 = vunpack.c.l.b16 %v3066
    %v3354 = vunpack.c.h.b16 %v3066
    %v3355 = vunpack.c.l.b16 %v3067
    %v3356 = vunpack.c.h.b16 %v3067
    %v3357 = vunpack.c.l.b16 %v3068
    %v3358 = vunpack.c.h.b16 %v3068
    %v3359 = vunpack.c.l.b16 %v3069
    %v3360 = vunpack.c.h.b16 %v3069
    %v3361 = vunpack.c.l.b16 %v3070
    %v3362 = vunpack.c.h.b16 %v3070
    %v3363 = vunpack.c.l.b16 %v3071
    %v3364 = vunpack.c.h.b16 %v3071
    %v3365 = vunpack.c.l.b16 %v3072
    %v3366 = vunpack.c.h.b16 %v3072
    %v3367 = vunpack.c.l.b16 %v3073
    %v3368 = vunpack.c.h.b16 %v3073
    %v3369 = vunpack.c.l.b16 %v3074
    %v3370 = vunpack.c.h.b16 %v3074
    %v3371 = vunpack.c.l.b16 %v3075
    %v3372 = vunpack.c.h.b16 %v3075
    %v3373 = vunpack.c.l.b16 %v3076
    %v3374 = vunpack.c.h.b16 %v3076
    %v3375 = vunpack.c.l.b16 %v3077
    %v3376 = vunpack.c.h.b16 %v3077
    %v3377 = vunpack.c.l.b16 %v3078
    %v3378 = vunpack.c.h.b16 %v3078
    %v3379 = vunpack.c.l.b16 %v3079
    %v3380 = vunpack.c.h.b16 %v3079
    %v3381 = vunpack.c.l.b16 %v3080
    %v3382 = vunpack.c.h.b16 %v3080
    %v3383 = vunpack.c.l.b16 %v3081
    %v3384 = vunpack.c.h.b16 %v3081
    %v3385 = vunpack.c.l.b16 %v3082
    %v3386 = vunpack.c.h.b16 %v3082
    %v3387 = vunpack.c.l.b16 %v3083
    %v3388 = vunpack.c.h.b16 %v3083
    %v3389 = vunpack.c.l.b16 %v3084
    %v3390 = vunpack.c.h.b16 %v3084
    %v3391 = vunpack.c.l.b16 %v3085
    %v3392 = vunpack.c.h.b16 %v3085
    %v3393 = vunpack.c.l.b16 %v3086
    %v3394 = vunpack.c.h.b16 %v3086
    %v3395 = vunpack.c.l.b16 %v3087
    %v3396 = vunpack.c.h.b16 %v3087
    %v3397 = vunpack.c.l.b16 %v3088
    %v3398 = vunpack.c.h.b16 %v3088
    %v3399 = vunpack.c.l.b16 %v3089
    %v3400 = vunpack.c.h.b16 %v3089
    %v3401 = vunpack.c.l.b16 %v3090
    %v3402 = vunpack.c.h.b16 %v3090
    %v3403 = vunpack.c.l.b16 %v3091
    %v3404 = vunpack.c.h.b16 %v3091
    %v3405 = vunpack.c.l.b16 %v3092
    %v3406 = vunpack.c.h.b16 %v3092
    %v3407 = vunpack.c.l.b16 %v3093
    %v3408 = vunpack.c.h.b16 %v3093
    %v3409 = vunpack.c.l.b16 %v3094
    %v3410 = vunpack.c.h.b16 %v3094
    %v3411 = vunpack.c.l.b16 %v3095
    %v3412 = vunpack.c.h.b16 %v3095
    %v3413 = vunpack.c.l.b16 %v3096
    %v3414 = vunpack.c.h.b16 %v3096
    %v3415 = vunpack.c.l.b16 %v3097
    %v3416 = vunpack.c.h.b16 %v3097
    %v3417 = vunpack.c.l.b16 %v3098
    %v3418 = vunpack.c.h.b16 %v3098
    %v3419 = vunpack.c.l.b16 %v3099
    %v3420 = vunpack.c.h.b16 %v3099
    %v3421 = vunpack.c.l.b16 %v3100
    %v3422 = vunpack.c.h.b16 %v3100
    %v3423 = vunpack.c.l.b16 %v3101
    %v3424 = vunpack.c.h.b16 %v3101
    %v3425 = vunpack.c.l.b16 %v3102
    %v3426 = vunpack.c.h.b16 %v3102
    %v3427 = vunpack.c.l.b16 %v3103
    %v3428 = vunpack.c.h.b16 %v3103
    %v3429 = vunpack.c.l.b16 %v3104
    %v3430 = vunpack.c.h.b16 %v3104
    %v3431 = vunpack.c.l.b16 %v3105
    %v3432 = vunpack.c.h.b16 %v3105
    %v3433 = vunpack.c.l.b16 %v3106
    %v3434 = vunpack.c.h.b16 %v3106
    %v3435 = vunpack.c.l.b16 %v3107
    %v3436 = vunpack.c.h.b16 %v3107
    %v3437 = vunpack.c.l.b16 %v3108
    %v3438 = vunpack.c.h.b16 %v3108
    %v3439 = vunpack.c.l.b16 %v3109
    %v3440 = vunpack.c.h.b16 %v3109
    %v3441 = vunpack.c.l.b16 %v3110
    %v3442 = vunpack.c.h.b16 %v3110
    %v3443 = vunpack.c.l.b16 %v3111
    %v3444 = vunpack.c.h.b16 %v3111
    %v3445 = vunpack.c.l.b16 %v3112
    %v3446 = vunpack.c.h.b16 %v3112
    %v3447 = vunpack.c.l.b16 %v3113
    %v3448 = vunpack.c.h.b16 %v3113
    %v3449 = vunpack.c.l.b16 %v3114
    %v3450 = vunpack.c.h.b16 %v3114
    %v3451 = vunpack.c.l.b16 %v3115
    %v3452 = vunpack.c.h.b16 %v3115
    %v3453 = vunpack.c.l.b16 %v3116
    %v3454 = vunpack.c.h.b16 %v3116
    %v3455 = vunpack.c.l.b16 %v3117
    %v3456 = vunpack.c.h.b16 %v3117
    %v3457 = vunpack.c.l.b16 %v3118
    %v3458 = vunpack.c.h.b16 %v3118
    %v3459 = vunpack.c.l.b16 %v3119
    %v3460 = vunpack.c.h.b16 %v3119
    %v3461 = vunpack.c.l.b16 %v3120
    %v3462 = vunpack.c.h.b16 %v3120
    %v3463 = vunpack.c.l.b16 %v3121
    %v3464 = vunpack.c.h.b16 %v3121
    %v3465 = vunpack.c.l.b16 %v3122
    %v3466 = vunpack.c.h.b16 %v3122
    %v3467 = vunpack.c.l.b16 %v3123
    %v3468 = vunpack.c.h.b16 %v3123
    %v3469 = vunpack.c.l.b16 %v3124
    %v3470 = vunpack.c.h.b16 %v3124
    %v3471 = vunpack.c.l.b16 %v3125
    %v3472 = vunpack.c.h.b16 %v3125
    %v3473 = vunpack.c.l.b16 %v3126
    %v3474 = vunpack.c.h.b16 %v3126
    %v3475 = vunpack.c.l.b16 %v3127
    %v3476 = vunpack.c.h.b16 %v3127
    %v3477 = vunpack.c.l.b16 %v3128
    %v3478 = vunpack.c.h.b16 %v3128
    %v3479 = vunpack.c.l.b16 %v3129
    %v3480 = vunpack.c.h.b16 %v3129
    %v3481 = vunpack.c.l.b16 %v3130
    %v3482 = vunpack.c.h.b16 %v3130
    %v3483 = vunpack.c.l.b16 %v3131
    %v3484 = vunpack.c.h.b16 %v3131
    %v3485 = vunpack.c.l.b16 %v3132
    %v3486 = vunpack.c.h.b16 %v3132
    %v3487 = vunpack.c.l.b16 %v3133
    %v3488 = vunpack.c.h.b16 %v3133
    %v3489 = vunpack.c.l.b16 %v3134
    %v3490 = vunpack.c.h.b16 %v3134
    %v3491 = vunpack.c.l.b16 %v3135
    %v3492 = vunpack.c.h.b16 %v3135
    %v3493 = vunpack.c.l.b16 %v3136
    %v3494 = vunpack.c.h.b16 %v3136
    %v3495 = vunpack.c.l.b16 %v3137
    %v3496 = vunpack.c.h.b16 %v3137
    %v3497 = vunpack.c.l.b16 %v3138
    %v3498 = vunpack.c.h.b16 %v3138
    %v3499 = vunpack.c.l.b16 %v3139
    %v3500 = vunpack.c.h.b16 %v3139
    %v3501 = vunpack.c.l.b16 %v3140
    %v3502 = vunpack.c.h.b16 %v3140
    %v3503 = vunpack.c.l.b16 %v3141
    %v3504 = vunpack.c.h.b16 %v3141
    %v3505 = vunpack.c.l.b16 %v3142
    %v3506 = vunpack.c.h.b16 %v3142
    %v3507 = vunpack.c.l.b16 %v3143
    %v3508 = vunpack.c.h.b16 %v3143
    %v3509 = vunpack.c.l.b16 %v3144
    %v3510 = vunpack.c.h.b16 %v3144
    %v3511 = vunpack.c.l.b16 %v3145
    %v3512 = vunpack.c.h.b16 %v3145
    %v3513 = vunpack.c.l.b16 %v3146
    %v3514 = vunpack.c.h.b16 %v3146
    %v3515 = vunpack.c.l.b16 %v3147
    %v3516 = vunpack.c.h.b16 %v3147
    %v3517 = vunpack.c.l.b16 %v3148
    %v3518 = vunpack.c.h.b16 %v3148
    %v3519 = vunpack.c.l.b16 %v3149
    %v3520 = vunpack.c.h.b16 %v3149
    %v3521 = vunpack.c.l.b16 %v3150
    %v3522 = vunpack.c.h.b16 %v3150
    %v3523 = vunpack.c.l.b16 %v3151
    %v3524 = vunpack.c.h.b16 %v3151
    %v3525 = vunpack.c.l.b16 %v3152
    %v3526 = vunpack.c.h.b16 %v3152
    %v3527 = vunpack.c.l.b16 %v3153
    %v3528 = vunpack.c.h.b16 %v3153
    %v3529 = vunpack.c.l.b16 %v3154
    %v3530 = vunpack.c.h.b16 %v3154
    %v3531 = vunpack.c.l.b16 %v3155
    %v3532 = vunpack.c.h.b16 %v3155
    %v3533 = vunpack.c.l.b16 %v3156
    %v3534 = vunpack.c.h.b16 %v3156
    %v3535 = vunpack.c.l.b16 %v3157
    %v3536 = vunpack.c.h.b16 %v3157
    %v3537 = vunpack.c.l.b16 %v3158
    %v3538 = vunpack.c.h.b16 %v3158
    %v3539 = vunpack.c.l.b16 %v3159
    %v3540 = vunpack.c.h.b16 %v3159
    %v3541 = vunpack.c.l.b16 %v3160
    %v3542 = vunpack.c.h.b16 %v3160
    %v3543 = vunpack.c.l.b16 %v3161
    %v3544 = vunpack.c.h.b16 %v3161
    %v3545 = vunpack.c.l.b16 %v3162
    %v3546 = vunpack.c.h.b16 %v3162
    %v3547 = vunpack.c.l.b16 %v3163
    %v3548 = vunpack.c.h.b16 %v3163
    %v3549 = vunpack.c.l.b16 %v3164
    %v3550 = vunpack.c.h.b16 %v3164
    %v3551 = vunpack.c.l.b16 %v3165
    %v3552 = vunpack.c.h.b16 %v3165
    %v3553 = vunpack.c.l.b16 %v3166
    %v3554 = vunpack.c.h.b16 %v3166
    %v3555 = vunpack.c.l.b16 %v3167
    %v3556 = vunpack.c.h.b16 %v3167
    %v3557 = vunpack.c.l.b16 %v3168
    %v3558 = vunpack.c.h.b16 %v3168
    %v3559 = vunpack.c.l.b16 %v3169
    %v3560 = vunpack.c.h.b16 %v3169
    %v3561 = vunpack.c.l.b16 %v3170
    %v3562 = vunpack.c.h.b16 %v3170
    %v3563 = vunpack.c.l.b16 %v3171
    %v3564 = vunpack.c.h.b16 %v3171
    %v3565 = vunpack.c.l.b16 %v3172
    %v3566 = vunpack.c.h.b16 %v3172
    %v3567 = vunpack.c.l.b16 %v3173
    %v3568 = vunpack.c.h.b16 %v3173
    %v3569 = vunpack.c.l.b16 %v3174
    %v3570 = vunpack.c.h.b16 %v3174
    %v3571 = vunpack.c.l.b16 %v3175
    %v3572 = vunpack.c.h.b16 %v3175
    %v3573 = vunpack.c.l.b16 %v3176
    %v3574 = vunpack.c.h.b16 %v3176
    %v3575 = vunpack.c.l.b16 %v3177
    %v3576 = vunpack.c.h.b16 %v3177
    %v3577 = vunpack.c.l.b16 %v3178
    %v3578 = vunpack.c.h.b16 %v3178
    %v3579 = vunpack.c.l.b16 %v3179
    %v3580 = vunpack.c.h.b16 %v3179
    %v3581 = vunpack.c.l.b16 %v3180
    %v3582 = vunpack.c.h.b16 %v3180
    %v3583 = vunpack.c.l.b16 %v3181
    %v3584 = vunpack.c.h.b16 %v3181
    %v3585 = vunpack.c.l.b16 %v3182
    %v3586 = vunpack.c.h.b16 %v3182
    %v3587 = vpack.c.b16 %v3339, %v3335
    %v3588 = vpack.c.b16 %v3340, %v3336
    %v3589 = vpack.c.b16 %v3341, %v3337
    %v3590 = vpack.c.b16 %v3342, %v3338
    %v3591 = vpack.c.b16 %v3347, %v3343
    %v3592 = vpack.c.b16 %v3348, %v3344
    %v3593 = vpack.c.b16 %v3349, %v3345
    %v3594 = vpack.c.b16 %v3350, %v3346
    %v3595 = vpack.c.b16 %v3355, %v3351
    %v3596 = vpack.c.b16 %v3356, %v3352
    %v3597 = vpack.c.b16 %v3357, %v3353
    %v3598 = vpack.c.b16 %v3358, %v3354
    %v3599 = vpack.c.b16 %v3363, %v3359
    %v3600 = vpack.c.b16 %v3364, %v3360
    %v3601 = vpack.c.b16 %v3365, %v3361
    %v3602 = vpack.c.b16 %v3366, %v3362
    %v3603 = vpack.c.b16 %v3371, %v3367
    %v3604 = vpack.c.b16 %v3372, %v3368
    %v3605 = vpack.c.b16 %v3373, %v3369
    %v3606 = vpack.c.b16 %v3374, %v3370
    %v3607 = vpack.c.b16 %v3379, %v3375
    %v3608 = vpack.c.b16 %v3380, %v3376
    %v3609 = vpack.c.b16 %v3381, %v3377
    %v3610 = vpack.c.b16 %v3382, %v3378
    %v3611 = vpack.c.b16 %v3387, %v3383
    %v3612 = vpack.c.b16 %v3388, %v3384
    %v3613 = vpack.c.b16 %v3389, %v3385
    %v3614 = vpack.c.b16 %v3390, %v3386
    %v3615 = vpack.c.b16 %v3395, %v3391
    %v3616 = vpack.c.b16 %v3396, %v3392
    %v3617 = vpack.c.b16 %v3397, %v3393
    %v3618 = vpack.c.b16 %v3398, %v3394
    %v3619 = vpack.c.b16 %v3403, %v3399
    %v3620 = vpack.c.b16 %v3404, %v3400
    %v3621 = vpack.c.b16 %v3405, %v3401
    %v3622 = vpack.c.b16 %v3406, %v3402
    %v3623 = vpack.c.b16 %v3411, %v3407
    %v3624 = vpack.c.b16 %v3412, %v3408
    %v3625 = vpack.c.b16 %v3413, %v3409
    %v3626 = vpack.c.b16 %v3414, %v3410
    %v3627 = vpack.c.b16 %v3419, %v3415
    %v3628 = vpack.c.b16 %v3420, %v3416
    %v3629 = vpack.c.b16 %v3421, %v3417
    %v3630 = vpack.c.b16 %v3422, %v3418
    %v3631 = vpack.c.b16 %v3427, %v3423
    %v3632 = vpack.c.b16 %v3428, %v3424
    %v3633 = vpack.c.b16 %v3429, %v3425
    %v3634 = vpack.c.b16 %v3430, %v3426
    %v3635 = vpack.c.b16 %v3435, %v3431
    %v3636 = vpack.c.b16 %v3436, %v3432
    %v3637 = vpack.c.b16 %v3437, %v3433
    %v3638 = vpack.c.b16 %v3438, %v3434
    %v3639 = vpack.c.b16 %v3443, %v3439
    %v3640 = vpack.c.b16 %v3444, %v3440
    %v3641 = vpack.c.b16 %v3445, %v3441
    %v3642 = vpack.c.b16 %v3446, %v3442
    %v3643 = vpack.c.b16 %v3451, %v3447
    %v3644 = vpack.c.b16 %v3452, %v3448
    %v3645 = vpack.c.b16 %v3453, %v3449
    %v3646 = vpack.c.b16 %v3454, %v3450
    %v3647 = vpack.c.b16 %v3459, %v3455
    %v3648 = vpack.c.b16 %v3460, %v3456
    %v3649 = vpack.c.b16 %v3461, %v3457
    %v3650 = vpack.c.b16 %v3462, %v3458
    %v3651 = vpack.c.b16 %v3467, %v3463
    %v3652 = vpack.c.b16 %v3468, %v3464
    %v3653 = vpack.c.b16 %v3469, %v3465
    %v3654 = vpack.c.b16 %v3470, %v3466
    %v3655 = vpack.c.b16 %v3475, %v3471
    %v3656 = vpack.c.b16 %v3476, %v3472
    %v3657 = vpack.c.b16 %v3477, %v3473
    %v3658 = vpack.c.b16 %v3478, %v3474
    %v3659 = vpack.c.b16 %v3483, %v3479
    %v3660 = vpack.c.b16 %v3484, %v3480
    %v3661 = vpack.c.b16 %v3485, %v3481
    %v3662 = vpack.c.b16 %v3486, %v3482
    %v3663 = vpack.c.b16 %v3491, %v3487
    %v3664 = vpack.c.b16 %v3492, %v3488
    %v3665 = vpack.c.b16 %v3493, %v3489
    %v3666 = vpack.c.b16 %v3494, %v3490
    %v3667 = vpack.c.b16 %v3499, %v3495
    %v3668 = vpack.c.b16 %v3500, %v3496
    %v3669 = vpack.c.b16 %v3501, %v3497
    %v3670 = vpack.c.b16 %v3502, %v3498
    %v3671 = vpack.c.b16 %v3507, %v3503
    %v3672 = vpack.c.b16 %v3508, %v3504
    %v3673 = vpack.c.b16 %v3509, %v3505
    %v3674 = vpack.c.b16 %v3510, %v3506
    %v3675 = vpack.c.b16 %v3515, %v3511
    %v3676 = vpack.c.b16 %v3516, %v3512
    %v3677 = vpack.c.b16 %v3517, %v3513
    %v3678 = vpack.c.b16 %v3518, %v3514
    %v3679 = vpack.c.b16 %v3523, %v3519
    %v3680 = vpack.c.b16 %v3524, %v3520
    %v3681 = vpack.c.b16 %v3525, %v3521
    %v3682 = vpack.c.b16 %v3526, %v3522
    %v3683 = vpack.c.b16 %v3531, %v3527
    %v3684 = vpack.c.b16 %v3532, %v3528
    %v3685 = vpack.c.b16 %v3533, %v3529
    %v3686 = vpack.c.b16 %v3534, %v3530
    %v3687 = vpack.c.b16 %v3539, %v3535
    %v3688 = vpack.c.b16 %v3540, %v3536
    %v3689 = vpack.c.b16 %v3541, %v3537
    %v3690 = vpack.c.b16 %v3542, %v3538
    %v3691 = vpack.c.b16 %v3547, %v3543
    %v3692 = vpack.c.b16 %v3548, %v3544
    %v3693 = vpack.c.b16 %v3549, %v3545
    %v3694 = vpack.c.b16 %v3550, %v3546
    %v3695 = vpack.c.b16 %v3555, %v3551
    %v3696 = vpack.c.b16 %v3556, %v3552
    %v3697 = vpack.c.b16 %v3557, %v3553
    %v3698 = vpack.c.b16 %v3558, %v3554
    %v3699 = vpack.c.b16 %v3563, %v3559
    %v3700 = vpack.c.b16 %v3564, %v3560
    %v3701 = vpack.c.b16 %v3565, %v3561
    %v3702 = vpack.c.b16 %v3566, %v3562
    %v3703 = vpack.c.b16 %v3571, %v3567
    %v3704 = vpack.c.b16 %v3572, %v3568
    %v3705 = vpack.c.b16 %v3573, %v3569
    %v3706 = vpack.c.b16 %v3574, %v3570
    %v3707 = vpack.c.b16 %v3579, %v3575
    %v3708 = vpack.c.b16 %v3580, %v3576
    %v3709 = vpack.c.b16 %v3581, %v3577
    %v3710 = vpack.c.b16 %v3582, %v3578
    %v3711 = vpack.c.b16 %v3583, %v3583
    %v3712 = vpack.c.b16 %v3584, %v3584
    %v3713 = vpack.c.b16 %v3585, %v3585
    %v3714 = vpack.c.b16 %v3586, %v3586
    %vm3839 = vcmask 949248
    %v3841 = vsel %vm3839, %v3187, 0
    %vm3843 = vcmask 1041408
    %v3845 = vsel %vm3843, %v3711, 0
    %v3848 = vsel %vm3843, %v3712, 0
    %v3851 = vsel %vm3843, %v3713, 0
    %v3854 = vsel %vm3843, %v3714, 0
    %3856 = vmatprep.subr.bf16.mxu0 %v3616
    %3857 = vmatpush1.bf16.msra.mxu0 %v3615
    %3858 = vmatprep.subr.bf16.mxu0 %v3612
    %3859 = vmatpush1.bf16.msra.mxu0 %v3611
    %3860 = vmatprep.subr.bf16.mxu0 %v3608
    %3861 = vmatpush1.bf16.msra.mxu0 %v3607
    %3862 = vmatprep.subr.bf16.mxu0 %v3604
    %3863 = vmatpush1.bf16.msra.mxu0 %v3603
    %3864 = vmatprep.subr.bf16.mxu0 %v3600
    %3865 = vmatpush1.bf16.msra.mxu0 %v3599
    %3866 = vmatprep.subr.bf16.mxu0 %v3596
    %3867 = vmatpush1.bf16.msra.mxu0 %v3595
    %3868 = vmatprep.subr.bf16.mxu0 %v3592
    %3869 = vmatpush1.bf16.msra.mxu0 %v3591
    %3870 = vmatprep.subr.bf16.mxu0 %v3588
    %3871 = vmatpush1.bf16.msra.mxu0 %v3587
    %3872 = vmatprep.subr.bf16.mxu0 %v3648
    %3873 = vmatpush2.bf16.msra.mxu0 %v3647
    %3874 = vmatprep.subr.bf16.mxu0 %v3644
    %3875 = vmatpush2.bf16.msra.mxu0 %v3643
    %3876 = vmatprep.subr.bf16.mxu0 %v3640
    %3877 = vmatpush2.bf16.msra.mxu0 %v3639
    %3878 = vmatprep.subr.bf16.mxu0 %v3636
    %3879 = vmatpush2.bf16.msra.mxu0 %v3635
    %3880 = vmatprep.subr.bf16.mxu0 %v3632
    %3881 = vmatpush2.bf16.msra.mxu0 %v3631
    %3882 = vmatprep.subr.bf16.mxu0 %v3628
    %3883 = vmatpush2.bf16.msra.mxu0 %v3627
    %3884 = vmatprep.subr.bf16.mxu0 %v3624
    %3885 = vmatpush2.bf16.msra.mxu0 %v3623
    %3886 = vmatprep.subr.bf16.mxu0 %v3620
    %3887 = vmatpush2.bf16.msra.mxu0 %v3619
    %3888 = vmatprep.mubr.bf16.mxu0 %v3185
    %3889 = vmatmul.mubr.bf16.gmra.mxu0 %v3184
    %v3890 = vpop.f32.mrf.mxu0
    %v3891 = vadd.f32 %v3192, %v3890
    %v3892 = vpop.f32.mrf.mxu0
    %v3893 = vadd.f32 %v3196, %v3892
    %v3894 = vpop.f32.mrf.mxu0
    %v3895 = vpop.f32.mrf.mxu0
    %3896 = vdwg.mxu0
    %3897 = vmatprep.subr.bf16.mxu0 %v3680
    %3898 = vmatpush1.bf16.msra.mxu0 %v3679
    %3899 = vmatprep.subr.bf16.mxu0 %v3676
    %3900 = vmatpush1.bf16.msra.mxu0 %v3675
    %3901 = vmatprep.subr.bf16.mxu0 %v3672
    %3902 = vmatpush1.bf16.msra.mxu0 %v3671
    %3903 = vmatprep.subr.bf16.mxu0 %v3668
    %3904 = vmatpush1.bf16.msra.mxu0 %v3667
    %3905 = vmatprep.subr.bf16.mxu0 %v3664
    %3906 = vmatpush1.bf16.msra.mxu0 %v3663
    %3907 = vmatprep.subr.bf16.mxu0 %v3660
    %3908 = vmatpush1.bf16.msra.mxu0 %v3659
    %3909 = vmatprep.subr.bf16.mxu0 %v3656
    %3910 = vmatpush1.bf16.msra.mxu0 %v3655
    %3911 = vmatprep.subr.bf16.mxu0 %v3652
    %3912 = vmatpush1.bf16.msra.mxu0 %v3651
    %3913 = vmatprep.subr.bf16.mxu0 %v3848
    %3914 = vmatpush2.bf16.msra.mxu0 %v3845
    %3915 = vmatprep.subr.bf16.mxu0 %v3708
    %3916 = vmatpush2.bf16.msra.mxu0 %v3707
    %3917 = vmatprep.subr.bf16.mxu0 %v3704
    %3918 = vmatpush2.bf16.msra.mxu0 %v3703
    %3919 = vmatprep.subr.bf16.mxu0 %v3700
    %3920 = vmatpush2.bf16.msra.mxu0 %v3699
    %3921 = vmatprep.subr.bf16.mxu0 %v3696
    %3922 = vmatpush2.bf16.msra.mxu0 %v3695
    %3923 = vmatprep.subr.bf16.mxu0 %v3692
    %3924 = vmatpush2.bf16.msra.mxu0 %v3691
    %3925 = vmatprep.subr.bf16.mxu0 %v3688
    %3926 = vmatpush2.bf16.msra.mxu0 %v3687
    %3927 = vmatprep.subr.bf16.mxu0 %v3684
    %3928 = vmatpush2.bf16.msra.mxu0 %v3683
    %3929 = vmatprep.mubr.bf16.mxu0 %v3841
    %3930 = vmatmul.mubr.bf16.gmra.mxu0 %v3186
    %v3931 = vpop.f32.mrf.mxu0
    %v3932 = vadd.f32 %v3891, %v3931
    %v3933 = vpop.f32.mrf.mxu0
    %v3934 = vadd.f32 %v3893, %v3933
    %v3935 = vpop.f32.mrf.mxu0
    %v3936 = vpop.f32.mrf.mxu0
    %3937 = vdwg.mxu0
    %3938 = vmatprep.subr.bf16.mxu0 %v3618
    %3939 = vmatpush1.bf16.msra.mxu0 %v3617
    %3940 = vmatprep.subr.bf16.mxu0 %v3614
    %3941 = vmatpush1.bf16.msra.mxu0 %v3613
    %3942 = vmatprep.subr.bf16.mxu0 %v3610
    %3943 = vmatpush1.bf16.msra.mxu0 %v3609
    %3944 = vmatprep.subr.bf16.mxu0 %v3606
    %3945 = vmatpush1.bf16.msra.mxu0 %v3605
    %3946 = vmatprep.subr.bf16.mxu0 %v3602
    %3947 = vmatpush1.bf16.msra.mxu0 %v3601
    %3948 = vmatprep.subr.bf16.mxu0 %v3598
    %3949 = vmatpush1.bf16.msra.mxu0 %v3597
    %3950 = vmatprep.subr.bf16.mxu0 %v3594
    %3951 = vmatpush1.bf16.msra.mxu0 %v3593
    %3952 = vmatprep.subr.bf16.mxu0 %v3590
    %3953 = vmatpush1.bf16.msra.mxu0 %v3589
    %3954 = vmatprep.subr.bf16.mxu0 %v3650
    %3955 = vmatpush2.bf16.msra.mxu0 %v3649
    %3956 = vmatprep.subr.bf16.mxu0 %v3646
    %3957 = vmatpush2.bf16.msra.mxu0 %v3645
    %3958 = vmatprep.subr.bf16.mxu0 %v3642
    %3959 = vmatpush2.bf16.msra.mxu0 %v3641
    %3960 = vmatprep.subr.bf16.mxu0 %v3638
    %3961 = vmatpush2.bf16.msra.mxu0 %v3637
    %3962 = vmatprep.subr.bf16.mxu0 %v3634
    %3963 = vmatpush2.bf16.msra.mxu0 %v3633
    %3964 = vmatprep.subr.bf16.mxu0 %v3630
    %3965 = vmatpush2.bf16.msra.mxu0 %v3629
    %3966 = vmatprep.subr.bf16.mxu0 %v3626
    %3967 = vmatpush2.bf16.msra.mxu0 %v3625
    %3968 = vmatprep.subr.bf16.mxu0 %v3622
    %3969 = vmatpush2.bf16.msra.mxu0 %v3621
    %3970 = vmatprep.mubr.bf16.mxu0 %v3185
    %3971 = vmatmul.mubr.bf16.gmra.mxu0 %v3184
    %v3972 = vpop.f32.mrf.mxu0
    %v3973 = vadd.f32 %v3200, %v3972
    %v3974 = vpop.f32.mrf.mxu0
    %v3975 = vadd.f32 %v3204, %v3974
    %v3976 = vpop.f32.mrf.mxu0
    %v3977 = vpop.f32.mrf.mxu0
    %3978 = vdwg.mxu0
    %3979 = vmatprep.subr.bf16.mxu0 %v3682
    %3980 = vmatpush1.bf16.msra.mxu0 %v3681
    %3981 = vmatprep.subr.bf16.mxu0 %v3678
    %3982 = vmatpush1.bf16.msra.mxu0 %v3677
    %3983 = vmatprep.subr.bf16.mxu0 %v3674
    %3984 = vmatpush1.bf16.msra.mxu0 %v3673
    %3985 = vmatprep.subr.bf16.mxu0 %v3670
    %3986 = vmatpush1.bf16.msra.mxu0 %v3669
    %3987 = vmatprep.subr.bf16.mxu0 %v3666
    %3988 = vmatpush1.bf16.msra.mxu0 %v3665
    %3989 = vmatprep.subr.bf16.mxu0 %v3662
    %3990 = vmatpush1.bf16.msra.mxu0 %v3661
    %3991 = vmatprep.subr.bf16.mxu0 %v3658
    %3992 = vmatpush1.bf16.msra.mxu0 %v3657
    %3993 = vmatprep.subr.bf16.mxu0 %v3654
    %3994 = vmatpush1.bf16.msra.mxu0 %v3653
    %3995 = vmatprep.subr.bf16.mxu0 %v3854
    %3996 = vmatpush2.bf16.msra.mxu0 %v3851
    %3997 = vmatprep.subr.bf16.mxu0 %v3710
    %3998 = vmatpush2.bf16.msra.mxu0 %v3709
    %3999 = vmatprep.subr.bf16.mxu0 %v3706
    %4000 = vmatpush2.bf16.msra.mxu0 %v3705
    %4001 = vmatprep.subr.bf16.mxu0 %v3702
    %4002 = vmatpush2.bf16.msra.mxu0 %v3701
    %4003 = vmatprep.subr.bf16.mxu0 %v3698
    %4004 = vmatpush2.bf16.msra.mxu0 %v3697
    %4005 = vmatprep.subr.bf16.mxu0 %v3694
    %4006 = vmatpush2.bf16.msra.mxu0 %v3693
    %4007 = vmatprep.subr.bf16.mxu0 %v3690
    %4008 = vmatpush2.bf16.msra.mxu0 %v3689
    %4009 = vmatprep.subr.bf16.mxu0 %v3686
    %4010 = vmatpush2.bf16.msra.mxu0 %v3685
    %4011 = vmatprep.mubr.bf16.mxu0 %v3841
    %4012 = vmatmul.mubr.bf16.gmra.mxu0 %v3186
    %v4013 = vpop.f32.mrf.mxu0
    %v4014 = vadd.f32 %v3973, %v4013
    %v4015 = vpop.f32.mrf.mxu0
    %v4016 = vadd.f32 %v3975, %v4015
    %v4017 = vpop.f32.mrf.mxu0
    %v4018 = vpop.f32.mrf.mxu0
    %4019 = vdwg.mxu0
    %v4020 = vmax.f32 %v3932, 0.0
    %v4021 = vmax.f32 %v3934, 0.0
    %v4022 = vmax.f32 %v4014, 0.0
    %v4023 = vmax.f32 %v4016, 0.0
    %v4024 = vld [vmem:[%s9] sm:$0xff]
    %v4025 = vld [vmem:[%s9 + $0x8] sm:$0xff]
    %v4026 = vld [vmem:[%s9 + $0x10] sm:$0xff]
    %v4027 = vld [vmem:[%s9 + $0x18] sm:$0xff]
    %v4028 = vld [vmem:[%s9 + $0x20] sm:$0xff]
    %v4029 = vld [vmem:[%s9 + $0x28] sm:$0xff]
    %v4030 = vld [vmem:[%s9 + $0x30] sm:$0xff]
    %v4031 = vld [vmem:[%s9 + $0x38] sm:$0xff]
    %v4032 = vld [vmem:[%s9 + $0x40] sm:$0xff]
    %v4033 = vld [vmem:[%s9 + $0x48] sm:$0xff]
    %v4034 = vld [vmem:[%s9 + $0x50] sm:$0xff]
    %v4035 = vld [vmem:[%s9 + $0x58] sm:$0xff]
    %v4036 = vld [vmem:[%s9 + $0x60] sm:$0xff]
    %v4037 = vld [vmem:[%s9 + $0x68] sm:$0xff]
    %v4038 = vld [vmem:[%s9 + $0x70] sm:$0xff]
    %v4039 = vld [vmem:[%s9 + $0x78] sm:$0xff]
    %v4040 = vld [vmem:[%s9 + $0x80] sm:$0xff]
    %v4041 = vld [vmem:[%s9 + $0x88] sm:$0xff]
    %v4042 = vld [vmem:[%s9 + $0x90] sm:$0xff]
    %v4043 = vld [vmem:[%s9 + $0x98] sm:$0xff]
    %v4044 = vld [vmem:[%s9 + $0xa0] sm:$0xff]
    %v4045 = vld [vmem:[%s9 + $0xa8] sm:$0xff]
    %v4046 = vld [vmem:[%s9 + $0xb0] sm:$0xff]
    %v4047 = vld [vmem:[%s9 + $0xb8] sm:$0xff]
    %v4048 = vld [vmem:[%s9 + $0xc0] sm:$0xff]
    %v4049 = vld [vmem:[%s9 + $0xc8] sm:$0xff]
    %v4050 = vld [vmem:[%s9 + $0xd0] sm:$0xff]
    %v4051 = vld [vmem:[%s9 + $0xd8] sm:$0xff]
    %v4052 = vld [vmem:[%s9 + $0xe0] sm:$0xff]
    %v4053 = vld [vmem:[%s9 + $0xe8] sm:$0xff]
    %v4054 = vld [vmem:[%s9 + $0xf0] sm:$0xff]
    %v4055 = vld [vmem:[%s9 + $0xf8] sm:$0xff]
    %v4056 = vld [vmem:[%s9 + $0x100] sm:$0xff]
    %v4057 = vld [vmem:[%s9 + $0x108] sm:$0xff]
    %v4058 = vld [vmem:[%s9 + $0x110] sm:$0xff]
    %v4059 = vld [vmem:[%s9 + $0x118] sm:$0xff]
    %v4060 = vld [vmem:[%s9 + $0x120] sm:$0xff]
    %v4061 = vld [vmem:[%s9 + $0x128] sm:$0xff]
    %v4062 = vld [vmem:[%s9 + $0x130] sm:$0xff]
    %v4063 = vld [vmem:[%s9 + $0x138] sm:$0xff]
    %v4064 = vld [vmem:[%s9 + $0x140] sm:$0xff]
    %v4065 = vld [vmem:[%s9 + $0x148] sm:$0xff]
    %v4066 = vld [vmem:[%s9 + $0x150] sm:$0xff]
    %v4067 = vld [vmem:[%s9 + $0x158] sm:$0xff]
    %v4068 = vld [vmem:[%s9 + $0x160] sm:$0xff]
    %v4069 = vld [vmem:[%s9 + $0x168] sm:$0xff]
    %v4070 = vld [vmem:[%s9 + $0x170] sm:$0xff]
    %v4071 = vld [vmem:[%s9 + $0x178] sm:$0xff]
    %v4072 = vld [vmem:[%s9 + $0x180] sm:$0xff]
    %v4073 = vld [vmem:[%s9 + $0x188] sm:$0xff]
    %v4074 = vld [vmem:[%s9 + $0x190] sm:$0xff]
    %v4075 = vld [vmem:[%s9 + $0x198] sm:$0xff]
    %v4076 = vld [vmem:[%s9 + $0x1a0] sm:$0xff]
    %v4077 = vld [vmem:[%s9 + $0x1a8] sm:$0xff]
    %v4078 = vld [vmem:[%s9 + $0x1b0] sm:$0xff]
    %v4079 = vld [vmem:[%s9 + $0x1b8] sm:$0xff]
    %v4080 = vld [vmem:[%s9 + $0x1c0] sm:$0xff]
    %v4081 = vld [vmem:[%s9 + $0x1c8] sm:$0xff]
    %v4082 = vld [vmem:[%s9 + $0x1d0] sm:$0xff]
    %v4083 = vld [vmem:[%s9 + $0x1d8] sm:$0xff]
    %v4084 = vld [vmem:[%s9 + $0x1e0] sm:$0xff]
    %v4085 = vld [vmem:[%s9 + $0x1e8] sm:$0xff]
    %v4086 = vld [vmem:[%s9 + $0x1f0] sm:$0xff]
    %v4087 = vld [vmem:[%s9 + $0x1f8] sm:$0xff]
    %v4088 = vld [vmem:[%s9 + $0x200] sm:$0xff]
    %v4089 = vld [vmem:[%s9 + $0x208] sm:$0xff]
    %v4090 = vld [vmem:[%s9 + $0x210] sm:$0xff]
    %v4091 = vld [vmem:[%s9 + $0x218] sm:$0xff]
    %v4092 = vld [vmem:[%s9 + $0x220] sm:$0xff]
    %v4093 = vld [vmem:[%s9 + $0x228] sm:$0xff]
    %v4094 = vld [vmem:[%s9 + $0x230] sm:$0xff]
    %v4095 = vld [vmem:[%s9 + $0x238] sm:$0xff]
    %v4096 = vld [vmem:[%s9 + $0x240] sm:$0xff]
    %v4097 = vld [vmem:[%s9 + $0x248] sm:$0xff]
    %v4098 = vld [vmem:[%s9 + $0x250] sm:$0xff]
    %v4099 = vld [vmem:[%s9 + $0x258] sm:$0xff]
    %v4100 = vld [vmem:[%s9 + $0x260] sm:$0xff]
    %v4101 = vld [vmem:[%s9 + $0x268] sm:$0xff]
    %v4102 = vld [vmem:[%s9 + $0x270] sm:$0xff]
    %v4103 = vld [vmem:[%s9 + $0x278] sm:$0xff]
    %v4104 = vld [vmem:[%s9 + $0x280] sm:$0xff]
    %v4105 = vld [vmem:[%s9 + $0x288] sm:$0xff]
    %v4106 = vld [vmem:[%s9 + $0x290] sm:$0xff]
    %v4107 = vld [vmem:[%s9 + $0x298] sm:$0xff]
    %v4108 = vld [vmem:[%s9 + $0x2a0] sm:$0xff]
    %v4109 = vld [vmem:[%s9 + $0x2a8] sm:$0xff]
    %v4110 = vld [vmem:[%s9 + $0x2b0] sm:$0xff]
    %v4111 = vld [vmem:[%s9 + $0x2b8] sm:$0xff]
    %v4112 = vld [vmem:[%s9 + $0x2c0] sm:$0xff]
    %v4113 = vld [vmem:[%s9 + $0x2c8] sm:$0xff]
    %v4114 = vld [vmem:[%s9 + $0x2d0] sm:$0xff]
    %v4115 = vld [vmem:[%s9 + $0x2d8] sm:$0xff]
    %v4116 = vld [vmem:[%s9 + $0x2e0] sm:$0xff]
    %v4117 = vld [vmem:[%s9 + $0x2e8] sm:$0xff]
    %v4118 = vld [vmem:[%s9 + $0x2f0] sm:$0xff]
    %v4119 = vld [vmem:[%s9 + $0x2f8] sm:$0xff]
    %v4120 = vld [vmem:[%s9 + $0x300] sm:$0xff]
    %v4121 = vld [vmem:[%s9 + $0x308] sm:$0xff]
    %v4122 = vld [vmem:[%s9 + $0x310] sm:$0xff]
    %v4123 = vld [vmem:[%s9 + $0x318] sm:$0xff]
    %v4124 = vld [vmem:[%s9 + $0x320] sm:$0xff]
    %v4125 = vld [vmem:[%s9 + $0x328] sm:$0xff]
    %v4126 = vld [vmem:[%s9 + $0x330] sm:$0xff]
    %v4127 = vld [vmem:[%s9 + $0x338] sm:$0xff]
    %v4128 = vld [vmem:[%s9 + $0x340] sm:$0xff]
    %v4129 = vld [vmem:[%s9 + $0x348] sm:$0xff]
    %v4130 = vld [vmem:[%s9 + $0x350] sm:$0xff]
    %v4131 = vld [vmem:[%s9 + $0x358] sm:$0xff]
    %v4132 = vld [vmem:[%s9 + $0x360] sm:$0xff]
    %v4133 = vld [vmem:[%s9 + $0x368] sm:$0xff]
    %v4134 = vld [vmem:[%s9 + $0x370] sm:$0xff]
    %v4135 = vld [vmem:[%s9 + $0x378] sm:$0xff]
    %v4136 = vld [vmem:[%s9 + $0x380] sm:$0x11]
    %v4137 = vld [vmem:[%s9 + $0x388] sm:$0x11]
    %v4138 = vld [vmem:[%s10] sm:$0xf]
    %v4139 = vpack.c.bf16 %v4020, %v4020
    %v4140 = vpack.c.bf16 %v4021, %v4021
    %v4141 = vpack.c.bf16 %v4022, %v4022
    %v4142 = vpack.c.bf16 %v4023, %v4023
    %v4144 = vlaneseq
    %v4145 = vshrl.u32 %v4144, 7
    %v4146 = vsub.s32 0, %v4145
    %v4147 = vrot.slane %v4138, %v4146
    %v4148 = vlaneseq
    %v4149 = vshrl.u32 %v4148, 7
    %v4150 = vsub.s32 1, %v4149
    %v4151 = vrot.slane %v4138, %v4150
    %v4152 = vlaneseq
    %v4153 = vshrl.u32 %v4152, 7
    %v4154 = vsub.s32 2, %v4153
    %v4155 = vrot.slane %v4138, %v4154
    %v4156 = vlaneseq
    %v4157 = vshrl.u32 %v4156, 7
    %v4158 = vsub.s32 3, %v4157
    %v4159 = vrot.slane %v4138, %v4158
    %v4278 = vunpack.c.l.b16 %v4024
    %v4279 = vunpack.c.h.b16 %v4024
    %v4280 = vunpack.c.l.b16 %v4025
    %v4281 = vunpack.c.h.b16 %v4025
    %v4282 = vunpack.c.l.b16 %v4026
    %v4283 = vunpack.c.h.b16 %v4026
    %v4284 = vunpack.c.l.b16 %v4027
    %v4285 = vunpack.c.h.b16 %v4027
    %v4286 = vunpack.c.l.b16 %v4028
    %v4287 = vunpack.c.h.b16 %v4028
    %v4288 = vunpack.c.l.b16 %v4029
    %v4289 = vunpack.c.h.b16 %v4029
    %v4290 = vunpack.c.l.b16 %v4030
    %v4291 = vunpack.c.h.b16 %v4030
    %v4292 = vunpack.c.l.b16 %v4031
    %v4293 = vunpack.c.h.b16 %v4031
    %v4294 = vunpack.c.l.b16 %v4032
    %v4295 = vunpack.c.h.b16 %v4032
    %v4296 = vunpack.c.l.b16 %v4033
    %v4297 = vunpack.c.h.b16 %v4033
    %v4298 = vunpack.c.l.b16 %v4034
    %v4299 = vunpack.c.h.b16 %v4034
    %v4300 = vunpack.c.l.b16 %v4035
    %v4301 = vunpack.c.h.b16 %v4035
    %v4302 = vunpack.c.l.b16 %v4036
    %v4303 = vunpack.c.h.b16 %v4036
    %v4304 = vunpack.c.l.b16 %v4037
    %v4305 = vunpack.c.h.b16 %v4037
    %v4306 = vunpack.c.l.b16 %v4038
    %v4307 = vunpack.c.h.b16 %v4038
    %v4308 = vunpack.c.l.b16 %v4039
    %v4309 = vunpack.c.h.b16 %v4039
    %v4310 = vunpack.c.l.b16 %v4040
    %v4311 = vunpack.c.h.b16 %v4040
    %v4312 = vunpack.c.l.b16 %v4041
    %v4313 = vunpack.c.h.b16 %v4041
    %v4314 = vunpack.c.l.b16 %v4042
    %v4315 = vunpack.c.h.b16 %v4042
    %v4316 = vunpack.c.l.b16 %v4043
    %v4317 = vunpack.c.h.b16 %v4043
    %v4318 = vunpack.c.l.b16 %v4044
    %v4319 = vunpack.c.h.b16 %v4044
    %v4320 = vunpack.c.l.b16 %v4045
    %v4321 = vunpack.c.h.b16 %v4045
    %v4322 = vunpack.c.l.b16 %v4046
    %v4323 = vunpack.c.h.b16 %v4046
    %v4324 = vunpack.c.l.b16 %v4047
    %v4325 = vunpack.c.h.b16 %v4047
    %v4326 = vunpack.c.l.b16 %v4048
    %v4327 = vunpack.c.h.b16 %v4048
    %v4328 = vunpack.c.l.b16 %v4049
    %v4329 = vunpack.c.h.b16 %v4049
    %v4330 = vunpack.c.l.b16 %v4050
    %v4331 = vunpack.c.h.b16 %v4050
    %v4332 = vunpack.c.l.b16 %v4051
    %v4333 = vunpack.c.h.b16 %v4051
    %v4334 = vunpack.c.l.b16 %v4052
    %v4335 = vunpack.c.h.b16 %v4052
    %v4336 = vunpack.c.l.b16 %v4053
    %v4337 = vunpack.c.h.b16 %v4053
    %v4338 = vunpack.c.l.b16 %v4054
    %v4339 = vunpack.c.h.b16 %v4054
    %v4340 = vunpack.c.l.b16 %v4055
    %v4341 = vunpack.c.h.b16 %v4055
    %v4342 = vunpack.c.l.b16 %v4056
    %v4343 = vunpack.c.h.b16 %v4056
    %v4344 = vunpack.c.l.b16 %v4057
    %v4345 = vunpack.c.h.b16 %v4057
    %v4346 = vunpack.c.l.b16 %v4058
    %v4347 = vunpack.c.h.b16 %v4058
    %v4348 = vunpack.c.l.b16 %v4059
    %v4349 = vunpack.c.h.b16 %v4059
    %v4350 = vunpack.c.l.b16 %v4060
    %v4351 = vunpack.c.h.b16 %v4060
    %v4352 = vunpack.c.l.b16 %v4061
    %v4353 = vunpack.c.h.b16 %v4061
    %v4354 = vunpack.c.l.b16 %v4062
    %v4355 = vunpack.c.h.b16 %v4062
    %v4356 = vunpack.c.l.b16 %v4063
    %v4357 = vunpack.c.h.b16 %v4063
    %v4358 = vunpack.c.l.b16 %v4064
    %v4359 = vunpack.c.h.b16 %v4064
    %v4360 = vunpack.c.l.b16 %v4065
    %v4361 = vunpack.c.h.b16 %v4065
    %v4362 = vunpack.c.l.b16 %v4066
    %v4363 = vunpack.c.h.b16 %v4066
    %v4364 = vunpack.c.l.b16 %v4067
    %v4365 = vunpack.c.h.b16 %v4067
    %v4366 = vunpack.c.l.b16 %v4068
    %v4367 = vunpack.c.h.b16 %v4068
    %v4368 = vunpack.c.l.b16 %v4069
    %v4369 = vunpack.c.h.b16 %v4069
    %v4370 = vunpack.c.l.b16 %v4070
    %v4371 = vunpack.c.h.b16 %v4070
    %v4372 = vunpack.c.l.b16 %v4071
    %v4373 = vunpack.c.h.b16 %v4071
    %v4374 = vunpack.c.l.b16 %v4072
    %v4375 = vunpack.c.h.b16 %v4072
    %v4376 = vunpack.c.l.b16 %v4073
    %v4377 = vunpack.c.h.b16 %v4073
    %v4378 = vunpack.c.l.b16 %v4074
    %v4379 = vunpack.c.h.b16 %v4074
    %v4380 = vunpack.c.l.b16 %v4075
    %v4381 = vunpack.c.h.b16 %v4075
    %v4382 = vunpack.c.l.b16 %v4076
    %v4383 = vunpack.c.h.b16 %v4076
    %v4384 = vunpack.c.l.b16 %v4077
    %v4385 = vunpack.c.h.b16 %v4077
    %v4386 = vunpack.c.l.b16 %v4078
    %v4387 = vunpack.c.h.b16 %v4078
    %v4388 = vunpack.c.l.b16 %v4079
    %v4389 = vunpack.c.h.b16 %v4079
    %v4390 = vunpack.c.l.b16 %v4080
    %v4391 = vunpack.c.h.b16 %v4080
    %v4392 = vunpack.c.l.b16 %v4081
    %v4393 = vunpack.c.h.b16 %v4081
    %v4394 = vunpack.c.l.b16 %v4082
    %v4395 = vunpack.c.h.b16 %v4082
    %v4396 = vunpack.c.l.b16 %v4083
    %v4397 = vunpack.c.h.b16 %v4083
    %v4398 = vunpack.c.l.b16 %v4084
    %v4399 = vunpack.c.h.b16 %v4084
    %v4400 = vunpack.c.l.b16 %v4085
    %v4401 = vunpack.c.h.b16 %v4085
    %v4402 = vunpack.c.l.b16 %v4086
    %v4403 = vunpack.c.h.b16 %v4086
    %v4404 = vunpack.c.l.b16 %v4087
    %v4405 = vunpack.c.h.b16 %v4087
    %v4406 = vunpack.c.l.b16 %v4088
    %v4407 = vunpack.c.h.b16 %v4088
    %v4408 = vunpack.c.l.b16 %v4089
    %v4409 = vunpack.c.h.b16 %v4089
    %v4410 = vunpack.c.l.b16 %v4090
    %v4411 = vunpack.c.h.b16 %v4090
    %v4412 = vunpack.c.l.b16 %v4091
    %v4413 = vunpack.c.h.b16 %v4091
    %v4414 = vunpack.c.l.b16 %v4092
    %v4415 = vunpack.c.h.b16 %v4092
    %v4416 = vunpack.c.l.b16 %v4093
    %v4417 = vunpack.c.h.b16 %v4093
    %v4418 = vunpack.c.l.b16 %v4094
    %v4419 = vunpack.c.h.b16 %v4094
    %v4420 = vunpack.c.l.b16 %v4095
    %v4421 = vunpack.c.h.b16 %v4095
    %v4422 = vunpack.c.l.b16 %v4096
    %v4423 = vunpack.c.h.b16 %v4096
    %v4424 = vunpack.c.l.b16 %v4097
    %v4425 = vunpack.c.h.b16 %v4097
    %v4426 = vunpack.c.l.b16 %v4098
    %v4427 = vunpack.c.h.b16 %v4098
    %v4428 = vunpack.c.l.b16 %v4099
    %v4429 = vunpack.c.h.b16 %v4099
    %v4430 = vunpack.c.l.b16 %v4100
    %v4431 = vunpack.c.h.b16 %v4100
    %v4432 = vunpack.c.l.b16 %v4101
    %v4433 = vunpack.c.h.b16 %v4101
    %v4434 = vunpack.c.l.b16 %v4102
    %v4435 = vunpack.c.h.b16 %v4102
    %v4436 = vunpack.c.l.b16 %v4103
    %v4437 = vunpack.c.h.b16 %v4103
    %v4438 = vunpack.c.l.b16 %v4104
    %v4439 = vunpack.c.h.b16 %v4104
    %v4440 = vunpack.c.l.b16 %v4105
    %v4441 = vunpack.c.h.b16 %v4105
    %v4442 = vunpack.c.l.b16 %v4106
    %v4443 = vunpack.c.h.b16 %v4106
    %v4444 = vunpack.c.l.b16 %v4107
    %v4445 = vunpack.c.h.b16 %v4107
    %v4446 = vunpack.c.l.b16 %v4108
    %v4447 = vunpack.c.h.b16 %v4108
    %v4448 = vunpack.c.l.b16 %v4109
    %v4449 = vunpack.c.h.b16 %v4109
    %v4450 = vunpack.c.l.b16 %v4110
    %v4451 = vunpack.c.h.b16 %v4110
    %v4452 = vunpack.c.l.b16 %v4111
    %v4453 = vunpack.c.h.b16 %v4111
    %v4454 = vunpack.c.l.b16 %v4112
    %v4455 = vunpack.c.h.b16 %v4112
    %v4456 = vunpack.c.l.b16 %v4113
    %v4457 = vunpack.c.h.b16 %v4113
    %v4458 = vunpack.c.l.b16 %v4114
    %v4459 = vunpack.c.h.b16 %v4114
    %v4460 = vunpack.c.l.b16 %v4115
    %v4461 = vunpack.c.h.b16 %v4115
    %v4462 = vunpack.c.l.b16 %v4116
    %v4463 = vunpack.c.h.b16 %v4116
    %v4464 = vunpack.c.l.b16 %v4117
    %v4465 = vunpack.c.h.b16 %v4117
    %v4466 = vunpack.c.l.b16 %v4118
    %v4467 = vunpack.c.h.b16 %v4118
    %v4468 = vunpack.c.l.b16 %v4119
    %v4469 = vunpack.c.h.b16 %v4119
    %v4470 = vunpack.c.l.b16 %v4120
    %v4471 = vunpack.c.h.b16 %v4120
    %v4472 = vunpack.c.l.b16 %v4121
    %v4473 = vunpack.c.h.b16 %v4121
    %v4474 = vunpack.c.l.b16 %v4122
    %v4475 = vunpack.c.h.b16 %v4122
    %v4476 = vunpack.c.l.b16 %v4123
    %v4477 = vunpack.c.h.b16 %v4123
    %v4478 = vunpack.c.l.b16 %v4124
    %v4479 = vunpack.c.h.b16 %v4124
    %v4480 = vunpack.c.l.b16 %v4125
    %v4481 = vunpack.c.h.b16 %v4125
    %v4482 = vunpack.c.l.b16 %v4126
    %v4483 = vunpack.c.h.b16 %v4126
    %v4484 = vunpack.c.l.b16 %v4127
    %v4485 = vunpack.c.h.b16 %v4127
    %v4486 = vunpack.c.l.b16 %v4128
    %v4487 = vunpack.c.h.b16 %v4128
    %v4488 = vunpack.c.l.b16 %v4129
    %v4489 = vunpack.c.h.b16 %v4129
    %v4490 = vunpack.c.l.b16 %v4130
    %v4491 = vunpack.c.h.b16 %v4130
    %v4492 = vunpack.c.l.b16 %v4131
    %v4493 = vunpack.c.h.b16 %v4131
    %v4494 = vunpack.c.l.b16 %v4132
    %v4495 = vunpack.c.h.b16 %v4132
    %v4496 = vunpack.c.l.b16 %v4133
    %v4497 = vunpack.c.h.b16 %v4133
    %v4498 = vunpack.c.l.b16 %v4134
    %v4499 = vunpack.c.h.b16 %v4134
    %v4500 = vunpack.c.l.b16 %v4135
    %v4501 = vunpack.c.h.b16 %v4135
    %v4502 = vunpack.c.l.b16 %v4136
    %v4503 = vunpack.c.h.b16 %v4136
    %v4504 = vunpack.c.l.b16 %v4137
    %v4505 = vunpack.c.h.b16 %v4137
    %v4506 = vpack.c.b16 %v4282, %v4278
    %v4507 = vpack.c.b16 %v4283, %v4279
    %v4508 = vpack.c.b16 %v4284, %v4280
    %v4509 = vpack.c.b16 %v4285, %v4281
    %v4510 = vpack.c.b16 %v4290, %v4286
    %v4511 = vpack.c.b16 %v4291, %v4287
    %v4512 = vpack.c.b16 %v4292, %v4288
    %v4513 = vpack.c.b16 %v4293, %v4289
    %v4514 = vpack.c.b16 %v4298, %v4294
    %v4515 = vpack.c.b16 %v4299, %v4295
    %v4516 = vpack.c.b16 %v4300, %v4296
    %v4517 = vpack.c.b16 %v4301, %v4297
    %v4518 = vpack.c.b16 %v4306, %v4302
    %v4519 = vpack.c.b16 %v4307, %v4303
    %v4520 = vpack.c.b16 %v4308, %v4304
    %v4521 = vpack.c.b16 %v4309, %v4305
    %v4522 = vpack.c.b16 %v4314, %v4310
    %v4523 = vpack.c.b16 %v4315, %v4311
    %v4524 = vpack.c.b16 %v4316, %v4312
    %v4525 = vpack.c.b16 %v4317, %v4313
    %v4526 = vpack.c.b16 %v4322, %v4318
    %v4527 = vpack.c.b16 %v4323, %v4319
    %v4528 = vpack.c.b16 %v4324, %v4320
    %v4529 = vpack.c.b16 %v4325, %v4321
    %v4530 = vpack.c.b16 %v4330, %v4326
    %v4531 = vpack.c.b16 %v4331, %v4327
    %v4532 = vpack.c.b16 %v4332, %v4328
    %v4533 = vpack.c.b16 %v4333, %v4329
    %v4534 = vpack.c.b16 %v4338, %v4334
    %v4535 = vpack.c.b16 %v4339, %v4335
    %v4536 = vpack.c.b16 %v4340, %v4336
    %v4537 = vpack.c.b16 %v4341, %v4337
    %v4538 = vpack.c.b16 %v4346, %v4342
    %v4539 = vpack.c.b16 %v4347, %v4343
    %v4540 = vpack.c.b16 %v4348, %v4344
    %v4541 = vpack.c.b16 %v4349, %v4345
    %v4542 = vpack.c.b16 %v4354, %v4350
    %v4543 = vpack.c.b16 %v4355, %v4351
    %v4544 = vpack.c.b16 %v4356, %v4352
    %v4545 = vpack.c.b16 %v4357, %v4353
    %v4546 = vpack.c.b16 %v4362, %v4358
    %v4547 = vpack.c.b16 %v4363, %v4359
    %v4548 = vpack.c.b16 %v4364, %v4360
    %v4549 = vpack.c.b16 %v4365, %v4361
    %v4550 = vpack.c.b16 %v4370, %v4366
    %v4551 = vpack.c.b16 %v4371, %v4367
    %v4552 = vpack.c.b16 %v4372, %v4368
    %v4553 = vpack.c.b16 %v4373, %v4369
    %v4554 = vpack.c.b16 %v4378, %v4374
    %v4555 = vpack.c.b16 %v4379, %v4375
    %v4556 = vpack.c.b16 %v4380, %v4376
    %v4557 = vpack.c.b16 %v4381, %v4377
    %v4558 = vpack.c.b16 %v4386, %v4382
    %v4559 = vpack.c.b16 %v4387, %v4383
    %v4560 = vpack.c.b16 %v4388, %v4384
    %v4561 = vpack.c.b16 %v4389, %v4385
    %v4562 = vpack.c.b16 %v4394, %v4390
    %v4563 = vpack.c.b16 %v4395, %v4391
    %v4564 = vpack.c.b16 %v4396, %v4392
    %v4565 = vpack.c.b16 %v4397, %v4393
    %v4566 = vpack.c.b16 %v4402, %v4398
    %v4567 = vpack.c.b16 %v4403, %v4399
    %v4568 = vpack.c.b16 %v4404, %v4400
    %v4569 = vpack.c.b16 %v4405, %v4401
    %v4570 = vpack.c.b16 %v4410, %v4406
    %v4571 = vpack.c.b16 %v4411, %v4407
    %v4572 = vpack.c.b16 %v4412, %v4408
    %v4573 = vpack.c.b16 %v4413, %v4409
    %v4574 = vpack.c.b16 %v4418, %v4414
    %v4575 = vpack.c.b16 %v4419, %v4415
    %v4576 = vpack.c.b16 %v4420, %v4416
    %v4577 = vpack.c.b16 %v4421, %v4417
    %v4578 = vpack.c.b16 %v4426, %v4422
    %v4579 = vpack.c.b16 %v4427, %v4423
    %v4580 = vpack.c.b16 %v4428, %v4424
    %v4581 = vpack.c.b16 %v4429, %v4425
    %v4582 = vpack.c.b16 %v4434, %v4430
    %v4583 = vpack.c.b16 %v4435, %v4431
    %v4584 = vpack.c.b16 %v4436, %v4432
    %v4585 = vpack.c.b16 %v4437, %v4433
    %v4586 = vpack.c.b16 %v4442, %v4438
    %v4587 = vpack.c.b16 %v4443, %v4439
    %v4588 = vpack.c.b16 %v4444, %v4440
    %v4589 = vpack.c.b16 %v4445, %v4441
    %v4590 = vpack.c.b16 %v4450, %v4446
    %v4591 = vpack.c.b16 %v4451, %v4447
    %v4592 = vpack.c.b16 %v4452, %v4448
    %v4593 = vpack.c.b16 %v4453, %v4449
    %v4594 = vpack.c.b16 %v4458, %v4454
    %v4595 = vpack.c.b16 %v4459, %v4455
    %v4596 = vpack.c.b16 %v4460, %v4456
    %v4597 = vpack.c.b16 %v4461, %v4457
    %v4598 = vpack.c.b16 %v4466, %v4462
    %v4599 = vpack.c.b16 %v4467, %v4463
    %v4600 = vpack.c.b16 %v4468, %v4464
    %v4601 = vpack.c.b16 %v4469, %v4465
    %v4602 = vpack.c.b16 %v4474, %v4470
    %v4603 = vpack.c.b16 %v4475, %v4471
    %v4604 = vpack.c.b16 %v4476, %v4472
    %v4605 = vpack.c.b16 %v4477, %v4473
    %v4606 = vpack.c.b16 %v4482, %v4478
    %v4607 = vpack.c.b16 %v4483, %v4479
    %v4608 = vpack.c.b16 %v4484, %v4480
    %v4609 = vpack.c.b16 %v4485, %v4481
    %v4610 = vpack.c.b16 %v4490, %v4486
    %v4611 = vpack.c.b16 %v4491, %v4487
    %v4612 = vpack.c.b16 %v4492, %v4488
    %v4613 = vpack.c.b16 %v4493, %v4489
    %v4614 = vpack.c.b16 %v4498, %v4494
    %v4615 = vpack.c.b16 %v4499, %v4495
    %v4616 = vpack.c.b16 %v4500, %v4496
    %v4617 = vpack.c.b16 %v4501, %v4497
    %v4618 = vpack.c.b16 %v4502, %v4502
    %v4619 = vpack.c.b16 %v4503, %v4503
    %v4620 = vpack.c.b16 %v4504, %v4504
    %v4621 = vpack.c.b16 %v4505, %v4505
    %vm4734 = vcmask 539648
    %v4736 = vsel %vm4734, %v4142, 0
    %vm4738 = vcmask 1040384
    %v4740 = vsel %vm4738, %v4618, 0
    %v4743 = vsel %vm4738, %v4619, 0
    %v4746 = vsel %vm4738, %v4620, 0
    %v4749 = vsel %vm4738, %v4621, 0
    %4751 = vmatprep.subr.bf16.mxu0 %v4535
    %4752 = vmatpush1.bf16.msra.mxu0 %v4534
    %4753 = vmatprep.subr.bf16.mxu0 %v4531
    %4754 = vmatpush1.bf16.msra.mxu0 %v4530
    %4755 = vmatprep.subr.bf16.mxu0 %v4527
    %4756 = vmatpush1.bf16.msra.mxu0 %v4526
    %4757 = vmatprep.subr.bf16.mxu0 %v4523
    %4758 = vmatpush1.bf16.msra.mxu0 %v4522
    %4759 = vmatprep.subr.bf16.mxu0 %v4519
    %4760 = vmatpush1.bf16.msra.mxu0 %v4518
    %4761 = vmatprep.subr.bf16.mxu0 %v4515
    %4762 = vmatpush1.bf16.msra.mxu0 %v4514
    %4763 = vmatprep.subr.bf16.mxu0 %v4511
    %4764 = vmatpush1.bf16.msra.mxu0 %v4510
    %4765 = vmatprep.subr.bf16.mxu0 %v4507
    %4766 = vmatpush1.bf16.msra.mxu0 %v4506
    %4767 = vmatprep.subr.bf16.mxu0 %v4567
    %4768 = vmatpush2.bf16.msra.mxu0 %v4566
    %4769 = vmatprep.subr.bf16.mxu0 %v4563
    %4770 = vmatpush2.bf16.msra.mxu0 %v4562
    %4771 = vmatprep.subr.bf16.mxu0 %v4559
    %4772 = vmatpush2.bf16.msra.mxu0 %v4558
    %4773 = vmatprep.subr.bf16.mxu0 %v4555
    %4774 = vmatpush2.bf16.msra.mxu0 %v4554
    %4775 = vmatprep.subr.bf16.mxu0 %v4551
    %4776 = vmatpush2.bf16.msra.mxu0 %v4550
    %4777 = vmatprep.subr.bf16.mxu0 %v4547
    %4778 = vmatpush2.bf16.msra.mxu0 %v4546
    %4779 = vmatprep.subr.bf16.mxu0 %v4543
    %4780 = vmatpush2.bf16.msra.mxu0 %v4542
    %4781 = vmatprep.subr.bf16.mxu0 %v4539
    %4782 = vmatpush2.bf16.msra.mxu0 %v4538
    %4783 = vmatprep.mubr.bf16.mxu0 %v4140
    %4784 = vmatmul.mubr.bf16.gmra.mxu0 %v4139
    %v4785 = vpop.f32.mrf.mxu0
    %v4786 = vadd.f32 %v4147, %v4785
    %v4787 = vpop.f32.mrf.mxu0
    %v4788 = vadd.f32 %v4151, %v4787
    %v4789 = vpop.f32.mrf.mxu0
    %v4790 = vpop.f32.mrf.mxu0
    %4791 = vdwg.mxu0
    %4792 = vmatprep.subr.bf16.mxu0 %v4599
    %4793 = vmatpush1.bf16.msra.mxu0 %v4598
    %4794 = vmatprep.subr.bf16.mxu0 %v4595
    %4795 = vmatpush1.bf16.msra.mxu0 %v4594
    %4796 = vmatprep.subr.bf16.mxu0 %v4591
    %4797 = vmatpush1.bf16.msra.mxu0 %v4590
    %4798 = vmatprep.subr.bf16.mxu0 %v4587
    %4799 = vmatpush1.bf16.msra.mxu0 %v4586
    %4800 = vmatprep.subr.bf16.mxu0 %v4583
    %4801 = vmatpush1.bf16.msra.mxu0 %v4582
    %4802 = vmatprep.subr.bf16.mxu0 %v4579
    %4803 = vmatpush1.bf16.msra.mxu0 %v4578
    %4804 = vmatprep.subr.bf16.mxu0 %v4575
    %4805 = vmatpush1.bf16.msra.mxu0 %v4574
    %4806 = vmatprep.subr.bf16.mxu0 %v4571
    %4807 = vmatpush1.bf16.msra.mxu0 %v4570
    %4808 = vmatprep.subr.bf16.mxu0 0
    %4809 = vmatpush2.bf16.msra.mxu0 0
    %4810 = vmatprep.subr.bf16.mxu0 0
    %4811 = vmatpush2.bf16.msra.mxu0 0
    %4812 = vmatprep.subr.bf16.mxu0 0
    %4813 = vmatpush2.bf16.msra.mxu0 0
    %4814 = vmatprep.subr.bf16.mxu0 %v4743
    %4815 = vmatpush2.bf16.msra.mxu0 %v4740
    %4816 = vmatprep.subr.bf16.mxu0 %v4615
    %4817 = vmatpush2.bf16.msra.mxu0 %v4614
    %4818 = vmatprep.subr.bf16.mxu0 %v4611
    %4819 = vmatpush2.bf16.msra.mxu0 %v4610
    %4820 = vmatprep.subr.bf16.mxu0 %v4607
    %4821 = vmatpush2.bf16.msra.mxu0 %v4606
    %4822 = vmatprep.subr.bf16.mxu0 %v4603
    %4823 = vmatpush2.bf16.msra.mxu0 %v4602
    %4824 = vmatprep.mubr.bf16.mxu0 %v4736
    %4825 = vmatmul.mubr.bf16.gmra.mxu0 %v4141
    %v4826 = vpop.f32.mrf.mxu0
    %v4827 = vadd.f32 %v4786, %v4826
    %v4828 = vpop.f32.mrf.mxu0
    %v4829 = vadd.f32 %v4788, %v4828
    %v4830 = vpop.f32.mrf.mxu0
    %v4831 = vpop.f32.mrf.mxu0
    %4832 = vdwg.mxu0
    %4833 = vmatprep.subr.bf16.mxu0 %v4537
    %4834 = vmatpush1.bf16.msra.mxu0 %v4536
    %4835 = vmatprep.subr.bf16.mxu0 %v4533
    %4836 = vmatpush1.bf16.msra.mxu0 %v4532
    %4837 = vmatprep.subr.bf16.mxu0 %v4529
    %4838 = vmatpush1.bf16.msra.mxu0 %v4528
    %4839 = vmatprep.subr.bf16.mxu0 %v4525
    %4840 = vmatpush1.bf16.msra.mxu0 %v4524
    %4841 = vmatprep.subr.bf16.mxu0 %v4521
    %4842 = vmatpush1.bf16.msra.mxu0 %v4520
    %4843 = vmatprep.subr.bf16.mxu0 %v4517
    %4844 = vmatpush1.bf16.msra.mxu0 %v4516
    %4845 = vmatprep.subr.bf16.mxu0 %v4513
    %4846 = vmatpush1.bf16.msra.mxu0 %v4512
    %4847 = vmatprep.subr.bf16.mxu0 %v4509
    %4848 = vmatpush1.bf16.msra.mxu0 %v4508
    %4849 = vmatprep.subr.bf16.mxu0 %v4569
    %4850 = vmatpush2.bf16.msra.mxu0 %v4568
    %4851 = vmatprep.subr.bf16.mxu0 %v4565
    %4852 = vmatpush2.bf16.msra.mxu0 %v4564
    %4853 = vmatprep.subr.bf16.mxu0 %v4561
    %4854 = vmatpush2.bf16.msra.mxu0 %v4560
    %4855 = vmatprep.subr.bf16.mxu0 %v4557
    %4856 = vmatpush2.bf16.msra.mxu0 %v4556
    %4857 = vmatprep.subr.bf16.mxu0 %v4553
    %4858 = vmatpush2.bf16.msra.mxu0 %v4552
    %4859 = vmatprep.subr.bf16.mxu0 %v4549
    %4860 = vmatpush2.bf16.msra.mxu0 %v4548
    %4861 = vmatprep.subr.bf16.mxu0 %v4545
    %4862 = vmatpush2.bf16.msra.mxu0 %v4544
    %4863 = vmatprep.subr.bf16.mxu0 %v4541
    %4864 = vmatpush2.bf16.msra.mxu0 %v4540
    %4865 = vmatprep.mubr.bf16.mxu0 %v4140
    %4866 = vmatmul.mubr.bf16.gmra.mxu0 %v4139
    %v4867 = vpop.f32.mrf.mxu0
    %v4868 = vadd.f32 %v4155, %v4867
    %v4869 = vpop.f32.mrf.mxu0
    %v4870 = vadd.f32 %v4159, %v4869
    %v4871 = vpop.f32.mrf.mxu0
    %v4872 = vpop.f32.mrf.mxu0
    %4873 = vdwg.mxu0
    %4874 = vmatprep.subr.bf16.mxu0 %v4601
    %4875 = vmatpush1.bf16.msra.mxu0 %v4600
    %4876 = vmatprep.subr.bf16.mxu0 %v4597
    %4877 = vmatpush1.bf16.msra.mxu0 %v4596
    %4878 = vmatprep.subr.bf16.mxu0 %v4593
    %4879 = vmatpush1.bf16.msra.mxu0 %v4592
    %4880 = vmatprep.subr.bf16.mxu0 %v4589
    %4881 = vmatpush1.bf16.msra.mxu0 %v4588
    %4882 = vmatprep.subr.bf16.mxu0 %v4585
    %4883 = vmatpush1.bf16.msra.mxu0 %v4584
    %4884 = vmatprep.subr.bf16.mxu0 %v4581
    %4885 = vmatpush1.bf16.msra.mxu0 %v4580
    %4886 = vmatprep.subr.bf16.mxu0 %v4577
    %4887 = vmatpush1.bf16.msra.mxu0 %v4576
    %4888 = vmatprep.subr.bf16.mxu0 %v4573
    %4889 = vmatpush1.bf16.msra.mxu0 %v4572
    %4890 = vmatprep.subr.bf16.mxu0 0
    %4891 = vmatpush2.bf16.msra.mxu0 0
    %4892 = vmatprep.subr.bf16.mxu0 0
    %4893 = vmatpush2.bf16.msra.mxu0 0
    %4894 = vmatprep.subr.bf16.mxu0 0
    %4895 = vmatpush2.bf16.msra.mxu0 0
    %4896 = vmatprep.subr.bf16.mxu0 %v4749
    %4897 = vmatpush2.bf16.msra.mxu0 %v4746
    %4898 = vmatprep.subr.bf16.mxu0 %v4617
    %4899 = vmatpush2.bf16.msra.mxu0 %v4616
    %4900 = vmatprep.subr.bf16.mxu0 %v4613
    %4901 = vmatpush2.bf16.msra.mxu0 %v4612
    %4902 = vmatprep.subr.bf16.mxu0 %v4609
    %4903 = vmatpush2.bf16.msra.mxu0 %v4608
    %4904 = vmatprep.subr.bf16.mxu0 %v4605
    %4905 = vmatpush2.bf16.msra.mxu0 %v4604
    %4906 = vmatprep.mubr.bf16.mxu0 %v4736
    %4907 = vmatmul.mubr.bf16.gmra.mxu0 %v4141
    %v4908 = vpop.f32.mrf.mxu0
    %v4909 = vadd.f32 %v4868, %v4908
    %v4910 = vpop.f32.mrf.mxu0
    %v4911 = vadd.f32 %v4870, %v4910
    %v4912 = vpop.f32.mrf.mxu0
    %v4913 = vpop.f32.mrf.mxu0
    %4914 = vdwg.mxu0
    %v4915 = vmax.f32 %v4827, 0.0
    %v4916 = vmax.f32 %v4829, 0.0
    %v4917 = vmax.f32 %v4909, 0.0
    %v4918 = vmax.f32 %v4911, 0.0
    %v4919 = vld [vmem:[%s11] sm:$0xff]
    %v4920 = vld [vmem:[%s11 + $0x8] sm:$0xf]
    %v4921 = vld [vmem:[%s11 + $0xc] sm:$0xff]
    %v4922 = vld [vmem:[%s11 + $0x14] sm:$0xf]
    %v4923 = vld [vmem:[%s11 + $0x18] sm:$0xff]
    %v4924 = vld [vmem:[%s11 + $0x20] sm:$0xf]
    %v4925 = vld [vmem:[%s11 + $0x24] sm:$0xff]
    %v4926 = vld [vmem:[%s11 + $0x2c] sm:$0xf]
    %v4927 = vld [vmem:[%s11 + $0x30] sm:$0xff]
    %v4928 = vld [vmem:[%s11 + $0x38] sm:$0xf]
    %v4929 = vld [vmem:[%s11 + $0x3c] sm:$0xff]
    %v4930 = vld [vmem:[%s11 + $0x44] sm:$0xf]
    %v4931 = vld [vmem:[%s11 + $0x48] sm:$0xff]
    %v4932 = vld [vmem:[%s11 + $0x50] sm:$0xf]
    %v4933 = vld [vmem:[%s11 + $0x54] sm:$0xff]
    %v4934 = vld [vmem:[%s11 + $0x5c] sm:$0xf]
    %v4935 = vld [vmem:[%s11 + $0x60] sm:$0xff]
    %v4936 = vld [vmem:[%s11 + $0x68] sm:$0xf]
    %v4937 = vld [vmem:[%s11 + $0x6c] sm:$0xff]
    %v4938 = vld [vmem:[%s11 + $0x74] sm:$0xf]
    %v4939 = vld [vmem:[%s11 + $0x78] sm:$0xff]
    %v4940 = vld [vmem:[%s11 + $0x80] sm:$0xf]
    %v4941 = vld [vmem:[%s11 + $0x84] sm:$0xff]
    %v4942 = vld [vmem:[%s11 + $0x8c] sm:$0xf]
    %v4943 = vld [vmem:[%s11 + $0x90] sm:$0xff]
    %v4944 = vld [vmem:[%s11 + $0x98] sm:$0xf]
    %v4945 = vld [vmem:[%s11 + $0x9c] sm:$0xff]
    %v4946 = vld [vmem:[%s11 + $0xa4] sm:$0xf]
    %v4947 = vld [vmem:[%s11 + $0xa8] sm:$0xff]
    %v4948 = vld [vmem:[%s11 + $0xb0] sm:$0xf]
    %v4949 = vld [vmem:[%s11 + $0xb4] sm:$0xff]
    %v4950 = vld [vmem:[%s11 + $0xbc] sm:$0xf]
    %v4951 = vld [vmem:[%s11 + $0xc0] sm:$0xff]
    %v4952 = vld [vmem:[%s11 + $0xc8] sm:$0xf]
    %v4953 = vld [vmem:[%s11 + $0xcc] sm:$0xff]
    %v4954 = vld [vmem:[%s11 + $0xd4] sm:$0xf]
    %v4955 = vld [vmem:[%s11 + $0xd8] sm:$0xff]
    %v4956 = vld [vmem:[%s11 + $0xe0] sm:$0xf]
    %v4957 = vld [vmem:[%s11 + $0xe4] sm:$0xff]
    %v4958 = vld [vmem:[%s11 + $0xec] sm:$0xf]
    %v4959 = vld [vmem:[%s11 + $0xf0] sm:$0xff]
    %v4960 = vld [vmem:[%s11 + $0xf8] sm:$0xf]
    %v4961 = vld [vmem:[%s11 + $0xfc] sm:$0xff]
    %v4962 = vld [vmem:[%s11 + $0x104] sm:$0xf]
    %v4963 = vld [vmem:[%s11 + $0x108] sm:$0xff]
    %v4964 = vld [vmem:[%s11 + $0x110] sm:$0xf]
    %v4965 = vld [vmem:[%s11 + $0x114] sm:$0xff]
    %v4966 = vld [vmem:[%s11 + $0x11c] sm:$0xf]
    %v4967 = vld [vmem:[%s11 + $0x120] sm:$0xff]
    %v4968 = vld [vmem:[%s11 + $0x128] sm:$0xf]
    %v4969 = vld [vmem:[%s11 + $0x12c] sm:$0xff]
    %v4970 = vld [vmem:[%s11 + $0x134] sm:$0xf]
    %v4971 = vld [vmem:[%s11 + $0x138] sm:$0xff]
    %v4972 = vld [vmem:[%s11 + $0x140] sm:$0xf]
    %v4973 = vld [vmem:[%s11 + $0x144] sm:$0xff]
    %v4974 = vld [vmem:[%s11 + $0x14c] sm:$0xf]
    %v4975 = vld [vmem:[%s11 + $0x150] sm:$0xff]
    %v4976 = vld [vmem:[%s11 + $0x158] sm:$0xf]
    %v4977 = vld [vmem:[%s11 + $0x15c] sm:$0xff]
    %v4978 = vld [vmem:[%s11 + $0x164] sm:$0xf]
    %v4979 = vld [vmem:[%s11 + $0x168] sm:$0xff]
    %v4980 = vld [vmem:[%s11 + $0x170] sm:$0xf]
    %v4981 = vld [vmem:[%s11 + $0x174] sm:$0xff]
    %v4982 = vld [vmem:[%s11 + $0x17c] sm:$0xf]
    %v4983 = vld [vmem:[%s11 + $0x180] sm:$0xff]
    %v4984 = vld [vmem:[%s11 + $0x188] sm:$0xf]
    %v4985 = vld [vmem:[%s11 + $0x18c] sm:$0xff]
    %v4986 = vld [vmem:[%s11 + $0x194] sm:$0xf]
    %v4987 = vld [vmem:[%s11 + $0x198] sm:$0xff]
    %v4988 = vld [vmem:[%s11 + $0x1a0] sm:$0xf]
    %v4989 = vld [vmem:[%s11 + $0x1a4] sm:$0xff]
    %v4990 = vld [vmem:[%s11 + $0x1ac] sm:$0xf]
    %v4991 = vld [vmem:[%s11 + $0x1b0] sm:$0xff]
    %v4992 = vld [vmem:[%s11 + $0x1b8] sm:$0xf]
    %v4993 = vld [vmem:[%s11 + $0x1bc] sm:$0xff]
    %v4994 = vld [vmem:[%s11 + $0x1c4] sm:$0xf]
    %v4995 = vld [vmem:[%s11 + $0x1c8] sm:$0xff]
    %v4996 = vld [vmem:[%s11 + $0x1d0] sm:$0xf]
    %v4997 = vld [vmem:[%s11 + $0x1d4] sm:$0xff]
    %v4998 = vld [vmem:[%s11 + $0x1dc] sm:$0xf]
    %v4999 = vld [vmem:[%s11 + $0x1e0] sm:$0xff]
    %v5000 = vld [vmem:[%s11 + $0x1e8] sm:$0xf]
    %v5001 = vld [vmem:[%s11 + $0x1ec] sm:$0xff]
    %v5002 = vld [vmem:[%s11 + $0x1f4] sm:$0xf]
    %v5003 = vld [vmem:[%s11 + $0x1f8] sm:$0xff]
    %v5004 = vld [vmem:[%s11 + $0x200] sm:$0xf]
    %v5005 = vld [vmem:[%s11 + $0x204] sm:$0xff]
    %v5006 = vld [vmem:[%s11 + $0x20c] sm:$0xf]
    %v5007 = vld [vmem:[%s11 + $0x210] sm:$0xff]
    %v5008 = vld [vmem:[%s11 + $0x218] sm:$0xf]
    %v5009 = vld [vmem:[%s11 + $0x21c] sm:$0xff]
    %v5010 = vld [vmem:[%s11 + $0x224] sm:$0xf]
    %v5011 = vld [vmem:[%s11 + $0x228] sm:$0xff]
    %v5012 = vld [vmem:[%s11 + $0x230] sm:$0xf]
    %v5013 = vld [vmem:[%s11 + $0x234] sm:$0xff]
    %v5014 = vld [vmem:[%s11 + $0x23c] sm:$0xf]
    %v5015 = vld [vmem:[%s11 + $0x240] sm:$0xff]
    %v5016 = vld [vmem:[%s11 + $0x248] sm:$0xf]
    %v5017 = vld [vmem:[%s11 + $0x24c] sm:$0xff]
    %v5018 = vld [vmem:[%s11 + $0x254] sm:$0xf]
    %v5019 = vld [vmem:[%s12] sm:$0x7]
    %v5020 = vpack.c.bf16 %v4915, %v4915
    %v5021 = vpack.c.bf16 %v4916, %v4916
    %v5022 = vpack.c.bf16 %v4917, %v4917
    %v5023 = vpack.c.bf16 %v4918, %v4918
    %v5025 = vlaneseq
    %v5026 = vshrl.u32 %v5025, 7
    %v5027 = vsub.s32 0, %v5026
    %v5028 = vrot.slane %v5019, %v5027
    %v5029 = vlaneseq
    %v5030 = vshrl.u32 %v5029, 7
    %v5031 = vsub.s32 1, %v5030
    %v5032 = vrot.slane %v5019, %v5031
    %v5033 = vlaneseq
    %v5034 = vshrl.u32 %v5033, 7
    %v5035 = vsub.s32 2, %v5034
    %v5036 = vrot.slane %v5019, %v5035
    %v5140 = vunpack.c.l.b16 %v4919
    %v5141 = vunpack.c.h.b16 %v4919
    %v5142 = vunpack.c.l.b16 %v4920
    %v5143 = vunpack.c.l.b16 %v4921
    %v5144 = vunpack.c.h.b16 %v4921
    %v5145 = vunpack.c.l.b16 %v4922
    %v5146 = vunpack.c.l.b16 %v4923
    %v5147 = vunpack.c.h.b16 %v4923
    %v5148 = vunpack.c.l.b16 %v4924
    %v5149 = vunpack.c.l.b16 %v4925
    %v5150 = vunpack.c.h.b16 %v4925
    %v5151 = vunpack.c.l.b16 %v4926
    %v5152 = vunpack.c.l.b16 %v4927
    %v5153 = vunpack.c.h.b16 %v4927
    %v5154 = vunpack.c.l.b16 %v4928
    %v5155 = vunpack.c.l.b16 %v4929
    %v5156 = vunpack.c.h.b16 %v4929
    %v5157 = vunpack.c.l.b16 %v4930
    %v5158 = vunpack.c.l.b16 %v4931
    %v5159 = vunpack.c.h.b16 %v4931
    %v5160 = vunpack.c.l.b16 %v4932
    %v5161 = vunpack.c.l.b16 %v4933
    %v5162 = vunpack.c.h.b16 %v4933
    %v5163 = vunpack.c.l.b16 %v4934
    %v5164 = vunpack.c.l.b16 %v4935
    %v5165 = vunpack.c.h.b16 %v4935
    %v5166 = vunpack.c.l.b16 %v4936
    %v5167 = vunpack.c.l.b16 %v4937
    %v5168 = vunpack.c.h.b16 %v4937
    %v5169 = vunpack.c.l.b16 %v4938
    %v5170 = vunpack.c.l.b16 %v4939
    %v5171 = vunpack.c.h.b16 %v4939
    %v5172 = vunpack.c.l.b16 %v4940
    %v5173 = vunpack.c.l.b16 %v4941
    %v5174 = vunpack.c.h.b16 %v4941
    %v5175 = vunpack.c.l.b16 %v4942
    %v5176 = vunpack.c.l.b16 %v4943
    %v5177 = vunpack.c.h.b16 %v4943
    %v5178 = vunpack.c.l.b16 %v4944
    %v5179 = vunpack.c.l.b16 %v4945
    %v5180 = vunpack.c.h.b16 %v4945
    %v5181 = vunpack.c.l.b16 %v4946
    %v5182 = vunpack.c.l.b16 %v4947
    %v5183 = vunpack.c.h.b16 %v4947
    %v5184 = vunpack.c.l.b16 %v4948
    %v5185 = vunpack.c.l.b16 %v4949
    %v5186 = vunpack.c.h.b16 %v4949
    %v5187 = vunpack.c.l.b16 %v4950
    %v5188 = vunpack.c.l.b16 %v4951
    %v5189 = vunpack.c.h.b16 %v4951
    %v5190 = vunpack.c.l.b16 %v4952
    %v5191 = vunpack.c.l.b16 %v4953
    %v5192 = vunpack.c.h.b16 %v4953
    %v5193 = vunpack.c.l.b16 %v4954
    %v5194 = vunpack.c.l.b16 %v4955
    %v5195 = vunpack.c.h.b16 %v4955
    %v5196 = vunpack.c.l.b16 %v4956
    %v5197 = vunpack.c.l.b16 %v4957
    %v5198 = vunpack.c.h.b16 %v4957
    %v5199 = vunpack.c.l.b16 %v4958
    %v5200 = vunpack.c.l.b16 %v4959
    %v5201 = vunpack.c.h.b16 %v4959
    %v5202 = vunpack.c.l.b16 %v4960
    %v5203 = vunpack.c.l.b16 %v4961
    %v5204 = vunpack.c.h.b16 %v4961
    %v5205 = vunpack.c.l.b16 %v4962
    %v5206 = vunpack.c.l.b16 %v4963
    %v5207 = vunpack.c.h.b16 %v4963
    %v5208 = vunpack.c.l.b16 %v4964
    %v5209 = vunpack.c.l.b16 %v4965
    %v5210 = vunpack.c.h.b16 %v4965
    %v5211 = vunpack.c.l.b16 %v4966
    %v5212 = vunpack.c.l.b16 %v4967
    %v5213 = vunpack.c.h.b16 %v4967
    %v5214 = vunpack.c.l.b16 %v4968
    %v5215 = vunpack.c.l.b16 %v4969
    %v5216 = vunpack.c.h.b16 %v4969
    %v5217 = vunpack.c.l.b16 %v4970
    %v5218 = vunpack.c.l.b16 %v4971
    %v5219 = vunpack.c.h.b16 %v4971
    %v5220 = vunpack.c.l.b16 %v4972
    %v5221 = vunpack.c.l.b16 %v4973
    %v5222 = vunpack.c.h.b16 %v4973
    %v5223 = vunpack.c.l.b16 %v4974
    %v5224 = vunpack.c.l.b16 %v4975
    %v5225 = vunpack.c.h.b16 %v4975
    %v5226 = vunpack.c.l.b16 %v4976
    %v5227 = vunpack.c.l.b16 %v4977
    %v5228 = vunpack.c.h.b16 %v4977
    %v5229 = vunpack.c.l.b16 %v4978
    %v5230 = vunpack.c.l.b16 %v4979
    %v5231 = vunpack.c.h.b16 %v4979
    %v5232 = vunpack.c.l.b16 %v4980
    %v5233 = vunpack.c.l.b16 %v4981
    %v5234 = vunpack.c.h.b16 %v4981
    %v5235 = vunpack.c.l.b16 %v4982
    %v5236 = vunpack.c.l.b16 %v4983
    %v5237 = vunpack.c.h.b16 %v4983
    %v5238 = vunpack.c.l.b16 %v4984
    %v5239 = vunpack.c.l.b16 %v4985
    %v5240 = vunpack.c.h.b16 %v4985
    %v5241 = vunpack.c.l.b16 %v4986
    %v5242 = vunpack.c.l.b16 %v4987
    %v5243 = vunpack.c.h.b16 %v4987
    %v5244 = vunpack.c.l.b16 %v4988
    %v5245 = vunpack.c.l.b16 %v4989
    %v5246 = vunpack.c.h.b16 %v4989
    %v5247 = vunpack.c.l.b16 %v4990
    %v5248 = vunpack.c.l.b16 %v4991
    %v5249 = vunpack.c.h.b16 %v4991
    %v5250 = vunpack.c.l.b16 %v4992
    %v5251 = vunpack.c.l.b16 %v4993
    %v5252 = vunpack.c.h.b16 %v4993
    %v5253 = vunpack.c.l.b16 %v4994
    %v5254 = vunpack.c.l.b16 %v4995
    %v5255 = vunpack.c.h.b16 %v4995
    %v5256 = vunpack.c.l.b16 %v4996
    %v5257 = vunpack.c.l.b16 %v4997
    %v5258 = vunpack.c.h.b16 %v4997
    %v5259 = vunpack.c.l.b16 %v4998
    %v5260 = vunpack.c.l.b16 %v4999
    %v5261 = vunpack.c.h.b16 %v4999
    %v5262 = vunpack.c.l.b16 %v5000
    %v5263 = vunpack.c.l.b16 %v5001
    %v5264 = vunpack.c.h.b16 %v5001
    %v5265 = vunpack.c.l.b16 %v5002
    %v5266 = vunpack.c.l.b16 %v5003
    %v5267 = vunpack.c.h.b16 %v5003
    %v5268 = vunpack.c.l.b16 %v5004
    %v5269 = vunpack.c.l.b16 %v5005
    %v5270 = vunpack.c.h.b16 %v5005
    %v5271 = vunpack.c.l.b16 %v5006
    %v5272 = vunpack.c.l.b16 %v5007
    %v5273 = vunpack.c.h.b16 %v5007
    %v5274 = vunpack.c.l.b16 %v5008
    %v5275 = vunpack.c.l.b16 %v5009
    %v5276 = vunpack.c.h.b16 %v5009
    %v5277 = vunpack.c.l.b16 %v5010
    %v5278 = vunpack.c.l.b16 %v5011
    %v5279 = vunpack.c.h.b16 %v5011
    %v5280 = vunpack.c.l.b16 %v5012
    %v5281 = vunpack.c.l.b16 %v5013
    %v5282 = vunpack.c.h.b16 %v5013
    %v5283 = vunpack.c.l.b16 %v5014
    %v5284 = vunpack.c.l.b16 %v5015
    %v5285 = vunpack.c.h.b16 %v5015
    %v5286 = vunpack.c.l.b16 %v5016
    %v5287 = vunpack.c.l.b16 %v5017
    %v5288 = vunpack.c.h.b16 %v5017
    %v5289 = vunpack.c.l.b16 %v5018
    %v5290 = vpack.c.b16 %v5143, %v5140
    %v5291 = vpack.c.b16 %v5144, %v5141
    %v5292 = vpack.c.b16 %v5145, %v5142
    %v5293 = vpack.c.b16 %v5149, %v5146
    %v5294 = vpack.c.b16 %v5150, %v5147
    %v5295 = vpack.c.b16 %v5151, %v5148
    %v5296 = vpack.c.b16 %v5155, %v5152
    %v5297 = vpack.c.b16 %v5156, %v5153
    %v5298 = vpack.c.b16 %v5157, %v5154
    %v5299 = vpack.c.b16 %v5161, %v5158
    %v5300 = vpack.c.b16 %v5162, %v5159
    %v5301 = vpack.c.b16 %v5163, %v5160
    %v5302 = vpack.c.b16 %v5167, %v5164
    %v5303 = vpack.c.b16 %v5168, %v5165
    %v5304 = vpack.c.b16 %v5169, %v5166
    %v5305 = vpack.c.b16 %v5173, %v5170
    %v5306 = vpack.c.b16 %v5174, %v5171
    %v5307 = vpack.c.b16 %v5175, %v5172
    %v5308 = vpack.c.b16 %v5179, %v5176
    %v5309 = vpack.c.b16 %v5180, %v5177
    %v5310 = vpack.c.b16 %v5181, %v5178
    %v5311 = vpack.c.b16 %v5185, %v5182
    %v5312 = vpack.c.b16 %v5186, %v5183
    %v5313 = vpack.c.b16 %v5187, %v5184
    %v5314 = vpack.c.b16 %v5191, %v5188
    %v5315 = vpack.c.b16 %v5192, %v5189
    %v5316 = vpack.c.b16 %v5193, %v5190
    %v5317 = vpack.c.b16 %v5197, %v5194
    %v5318 = vpack.c.b16 %v5198, %v5195
    %v5319 = vpack.c.b16 %v5199, %v5196
    %v5320 = vpack.c.b16 %v5203, %v5200
    %v5321 = vpack.c.b16 %v5204, %v5201
    %v5322 = vpack.c.b16 %v5205, %v5202
    %v5323 = vpack.c.b16 %v5209, %v5206
    %v5324 = vpack.c.b16 %v5210, %v5207
    %v5325 = vpack.c.b16 %v5211, %v5208
    %v5326 = vpack.c.b16 %v5215, %v5212
    %v5327 = vpack.c.b16 %v5216, %v5213
    %v5328 = vpack.c.b16 %v5217, %v5214
    %v5329 = vpack.c.b16 %v5221, %v5218
    %v5330 = vpack.c.b16 %v5222, %v5219
    %v5331 = vpack.c.b16 %v5223, %v5220
    %v5332 = vpack.c.b16 %v5227, %v5224
    %v5333 = vpack.c.b16 %v5228, %v5225
    %v5334 = vpack.c.b16 %v5229, %v5226
    %v5335 = vpack.c.b16 %v5233, %v5230
    %v5336 = vpack.c.b16 %v5234, %v5231
    %v5337 = vpack.c.b16 %v5235, %v5232
    %v5338 = vpack.c.b16 %v5239, %v5236
    %v5339 = vpack.c.b16 %v5240, %v5237
    %v5340 = vpack.c.b16 %v5241, %v5238
    %v5341 = vpack.c.b16 %v5245, %v5242
    %v5342 = vpack.c.b16 %v5246, %v5243
    %v5343 = vpack.c.b16 %v5247, %v5244
    %v5344 = vpack.c.b16 %v5251, %v5248
    %v5345 = vpack.c.b16 %v5252, %v5249
    %v5346 = vpack.c.b16 %v5253, %v5250
    %v5347 = vpack.c.b16 %v5257, %v5254
    %v5348 = vpack.c.b16 %v5258, %v5255
    %v5349 = vpack.c.b16 %v5259, %v5256
    %v5350 = vpack.c.b16 %v5263, %v5260
    %v5351 = vpack.c.b16 %v5264, %v5261
    %v5352 = vpack.c.b16 %v5265, %v5262
    %v5353 = vpack.c.b16 %v5269, %v5266
    %v5354 = vpack.c.b16 %v5270, %v5267
    %v5355 = vpack.c.b16 %v5271, %v5268
    %v5356 = vpack.c.b16 %v5275, %v5272
    %v5357 = vpack.c.b16 %v5276, %v5273
    %v5358 = vpack.c.b16 %v5277, %v5274
    %v5359 = vpack.c.b16 %v5281, %v5278
    %v5360 = vpack.c.b16 %v5282, %v5279
    %v5361 = vpack.c.b16 %v5283, %v5280
    %v5362 = vpack.c.b16 %v5287, %v5284
    %v5363 = vpack.c.b16 %v5288, %v5285
    %v5364 = vpack.c.b16 %v5289, %v5286
    %vm5440 = vcmask 130048
    %v5442 = vsel %vm5440, %v5023, 0
    %5444 = vmatprep.subr.bf16.mxu0 %v5312
    %5445 = vmatpush1.bf16.msra.mxu0 %v5311
    %5446 = vmatprep.subr.bf16.mxu0 %v5309
    %5447 = vmatpush1.bf16.msra.mxu0 %v5308
    %5448 = vmatprep.subr.bf16.mxu0 %v5306
    %5449 = vmatpush1.bf16.msra.mxu0 %v5305
    %5450 = vmatprep.subr.bf16.mxu0 %v5303
    %5451 = vmatpush1.bf16.msra.mxu0 %v5302
    %5452 = vmatprep.subr.bf16.mxu0 %v5300
    %5453 = vmatpush1.bf16.msra.mxu0 %v5299
    %5454 = vmatprep.subr.bf16.mxu0 %v5297
    %5455 = vmatpush1.bf16.msra.mxu0 %v5296
    %5456 = vmatprep.subr.bf16.mxu0 %v5294
    %5457 = vmatpush1.bf16.msra.mxu0 %v5293
    %5458 = vmatprep.subr.bf16.mxu0 %v5291
    %5459 = vmatpush1.bf16.msra.mxu0 %v5290
    %5460 = vmatprep.subr.bf16.mxu0 %v5336
    %5461 = vmatpush2.bf16.msra.mxu0 %v5335
    %5462 = vmatprep.subr.bf16.mxu0 %v5333
    %5463 = vmatpush2.bf16.msra.mxu0 %v5332
    %5464 = vmatprep.subr.bf16.mxu0 %v5330
    %5465 = vmatpush2.bf16.msra.mxu0 %v5329
    %5466 = vmatprep.subr.bf16.mxu0 %v5327
    %5467 = vmatpush2.bf16.msra.mxu0 %v5326
    %5468 = vmatprep.subr.bf16.mxu0 %v5324
    %5469 = vmatpush2.bf16.msra.mxu0 %v5323
    %5470 = vmatprep.subr.bf16.mxu0 %v5321
    %5471 = vmatpush2.bf16.msra.mxu0 %v5320
    %5472 = vmatprep.subr.bf16.mxu0 %v5318
    %5473 = vmatpush2.bf16.msra.mxu0 %v5317
    %5474 = vmatprep.subr.bf16.mxu0 %v5315
    %5475 = vmatpush2.bf16.msra.mxu0 %v5314
    %5476 = vmatprep.mubr.bf16.mxu0 %v5021
    %5477 = vmatmul.mubr.bf16.gmra.mxu0 %v5020
    %v5478 = vpop.f32.mrf.mxu0
    %v5479 = vadd.f32 %v5028, %v5478
    %v5480 = vpop.f32.mrf.mxu0
    %v5481 = vadd.f32 %v5032, %v5480
    %v5482 = vpop.f32.mrf.mxu0
    %v5483 = vpop.f32.mrf.mxu0
    %5484 = vdwg.mxu0
    %5485 = vmatprep.subr.bf16.mxu0 %v5360
    %5486 = vmatpush1.bf16.msra.mxu0 %v5359
    %5487 = vmatprep.subr.bf16.mxu0 %v5357
    %5488 = vmatpush1.bf16.msra.mxu0 %v5356
    %5489 = vmatprep.subr.bf16.mxu0 %v5354
    %5490 = vmatpush1.bf16.msra.mxu0 %v5353
    %5491 = vmatprep.subr.bf16.mxu0 %v5351
    %5492 = vmatpush1.bf16.msra.mxu0 %v5350
    %5493 = vmatprep.subr.bf16.mxu0 %v5348
    %5494 = vmatpush1.bf16.msra.mxu0 %v5347
    %5495 = vmatprep.subr.bf16.mxu0 %v5345
    %5496 = vmatpush1.bf16.msra.mxu0 %v5344
    %5497 = vmatprep.subr.bf16.mxu0 %v5342
    %5498 = vmatpush1.bf16.msra.mxu0 %v5341
    %5499 = vmatprep.subr.bf16.mxu0 %v5339
    %5500 = vmatpush1.bf16.msra.mxu0 %v5338
    %5501 = vmatprep.subr.bf16.mxu0 0
    %5502 = vmatpush2.bf16.msra.mxu0 0
    %5503 = vmatprep.subr.bf16.mxu0 0
    %5504 = vmatpush2.bf16.msra.mxu0 0
    %5505 = vmatprep.subr.bf16.mxu0 0
    %5506 = vmatpush2.bf16.msra.mxu0 0
    %5507 = vmatprep.subr.bf16.mxu0 0
    %5508 = vmatpush2.bf16.msra.mxu0 0
    %5509 = vmatprep.subr.bf16.mxu0 0
    %5510 = vmatpush2.bf16.msra.mxu0 0
    %5511 = vmatprep.subr.bf16.mxu0 0
    %5512 = vmatpush2.bf16.msra.mxu0 0
    %5513 = vmatprep.subr.bf16.mxu0 0
    %5514 = vmatpush2.bf16.msra.mxu0 0
    %5515 = vmatprep.subr.bf16.mxu0 %v5363
    %5516 = vmatpush2.bf16.msra.mxu0 %v5362
    %5517 = vmatprep.mubr.bf16.mxu0 %v5442
    %5518 = vmatmul.mubr.bf16.gmra.mxu0 %v5022
    %v5519 = vpop.f32.mrf.mxu0
    %v5520 = vadd.f32 %v5479, %v5519
    %v5521 = vpop.f32.mrf.mxu0
    %v5522 = vadd.f32 %v5481, %v5521
    %v5523 = vpop.f32.mrf.mxu0
    %v5524 = vpop.f32.mrf.mxu0
    %5525 = vdwg.mxu0
    %5526 = vmatprep.subr.bf16.mxu0 0
    %5527 = vmatpush1.bf16.msra.mxu0 %v5313
    %5528 = vmatprep.subr.bf16.mxu0 0
    %5529 = vmatpush1.bf16.msra.mxu0 %v5310
    %5530 = vmatprep.subr.bf16.mxu0 0
    %5531 = vmatpush1.bf16.msra.mxu0 %v5307
    %5532 = vmatprep.subr.bf16.mxu0 0
    %5533 = vmatpush1.bf16.msra.mxu0 %v5304
    %5534 = vmatprep.subr.bf16.mxu0 0
    %5535 = vmatpush1.bf16.msra.mxu0 %v5301
    %5536 = vmatprep.subr.bf16.mxu0 0
    %5537 = vmatpush1.bf16.msra.mxu0 %v5298
    %5538 = vmatprep.subr.bf16.mxu0 0
    %5539 = vmatpush1.bf16.msra.mxu0 %v5295
    %5540 = vmatprep.subr.bf16.mxu0 0
    %5541 = vmatpush1.bf16.msra.mxu0 %v5292
    %5542 = vmatprep.subr.bf16.mxu0 0
    %5543 = vmatpush2.bf16.msra.mxu0 %v5337
    %5544 = vmatprep.subr.bf16.mxu0 0
    %5545 = vmatpush2.bf16.msra.mxu0 %v5334
    %5546 = vmatprep.subr.bf16.mxu0 0
    %5547 = vmatpush2.bf16.msra.mxu0 %v5331
    %5548 = vmatprep.subr.bf16.mxu0 0
    %5549 = vmatpush2.bf16.msra.mxu0 %v5328
    %5550 = vmatprep.subr.bf16.mxu0 0
    %5551 = vmatpush2.bf16.msra.mxu0 %v5325
    %5552 = vmatprep.subr.bf16.mxu0 0
    %5553 = vmatpush2.bf16.msra.mxu0 %v5322
    %5554 = vmatprep.subr.bf16.mxu0 0
    %5555 = vmatpush2.bf16.msra.mxu0 %v5319
    %5556 = vmatprep.subr.bf16.mxu0 0
    %5557 = vmatpush2.bf16.msra.mxu0 %v5316
    %5558 = vmatprep.mubr.bf16.mxu0 %v5021
    %5559 = vmatmul.mubr.bf16.gmra.mxu0 %v5020
    %v5560 = vpop.f32.mrf.mxu0
    %v5561 = vadd.f32 %v5036, %v5560
    %v5562 = vpop.f32.mrf.mxu0
    %v5563 = vpop.f32.mrf.mxu0
    %v5564 = vpop.f32.mrf.mxu0
    %5565 = vdwg.mxu0
    %5566 = vmatprep.subr.bf16.mxu0 0
    %5567 = vmatpush1.bf16.msra.mxu0 %v5361
    %5568 = vmatprep.subr.bf16.mxu0 0
    %5569 = vmatpush1.bf16.msra.mxu0 %v5358
    %5570 = vmatprep.subr.bf16.mxu0 0
    %5571 = vmatpush1.bf16.msra.mxu0 %v5355
    %5572 = vmatprep.subr.bf16.mxu0 0
    %5573 = vmatpush1.bf16.msra.mxu0 %v5352
    %5574 = vmatprep.subr.bf16.mxu0 0
    %5575 = vmatpush1.bf16.msra.mxu0 %v5349
    %5576 = vmatprep.subr.bf16.mxu0 0
    %5577 = vmatpush1.bf16.msra.mxu0 %v5346
    %5578 = vmatprep.subr.bf16.mxu0 0
    %5579 = vmatpush1.bf16.msra.mxu0 %v5343
    %5580 = vmatprep.subr.bf16.mxu0 0
    %5581 = vmatpush1.bf16.msra.mxu0 %v5340
    %5582 = vmatprep.subr.bf16.mxu0 0
    %5583 = vmatpush2.bf16.msra.mxu0 0
    %5584 = vmatprep.subr.bf16.mxu0 0
    %5585 = vmatpush2.bf16.msra.mxu0 0
    %5586 = vmatprep.subr.bf16.mxu0 0
    %5587 = vmatpush2.bf16.msra.mxu0 0
    %5588 = vmatprep.subr.bf16.mxu0 0
    %5589 = vmatpush2.bf16.msra.mxu0 0
    %5590 = vmatprep.subr.bf16.mxu0 0
    %5591 = vmatpush2.bf16.msra.mxu0 0
    %5592 = vmatprep.subr.bf16.mxu0 0
    %5593 = vmatpush2.bf16.msra.mxu0 0
    %5594 = vmatprep.subr.bf16.mxu0 0
    %5595 = vmatpush2.bf16.msra.mxu0 0
    %5596 = vmatprep.subr.bf16.mxu0 0
    %5597 = vmatpush2.bf16.msra.mxu0 %v5364
    %5598 = vmatprep.mubr.bf16.mxu0 %v5442
    %5599 = vmatmul.mubr.bf16.gmra.mxu0 %v5022
    %v5600 = vpop.f32.mrf.mxu0
    %v5601 = vadd.f32 %v5561, %v5600
    %v5602 = vpop.f32.mrf.mxu0
    %v5603 = vpop.f32.mrf.mxu0
    %v5604 = vpop.f32.mrf.mxu0
    %5605 = vdwg.mxu0
    %v5606 = vmax.f32 %v5520, 0.0
    %v5607 = vmax.f32 %v5522, 0.0
    %v5608 = vmax.f32 %v5601, 0.0
    %v5609 = vld [vmem:[%s13] sm:$0xff]
    %v5610 = vld [vmem:[%s13 + $0x8] sm:$0xf]
    %v5611 = vld [vmem:[%s13 + $0xc] sm:$0xff]
    %v5612 = vld [vmem:[%s13 + $0x14] sm:$0xf]
    %v5613 = vld [vmem:[%s13 + $0x18] sm:$0xff]
    %v5614 = vld [vmem:[%s13 + $0x20] sm:$0xf]
    %v5615 = vld [vmem:[%s13 + $0x24] sm:$0xff]
    %v5616 = vld [vmem:[%s13 + $0x2c] sm:$0xf]
    %v5617 = vld [vmem:[%s13 + $0x30] sm:$0xff]
    %v5618 = vld [vmem:[%s13 + $0x38] sm:$0xf]
    %v5619 = vld [vmem:[%s13 + $0x3c] sm:$0xff]
    %v5620 = vld [vmem:[%s13 + $0x44] sm:$0xf]
    %v5621 = vld [vmem:[%s13 + $0x48] sm:$0xff]
    %v5622 = vld [vmem:[%s13 + $0x50] sm:$0xf]
    %v5623 = vld [vmem:[%s13 + $0x54] sm:$0xff]
    %v5624 = vld [vmem:[%s13 + $0x5c] sm:$0xf]
    %v5625 = vld [vmem:[%s13 + $0x60] sm:$0xff]
    %v5626 = vld [vmem:[%s13 + $0x68] sm:$0xf]
    %v5627 = vld [vmem:[%s13 + $0x6c] sm:$0xff]
    %v5628 = vld [vmem:[%s13 + $0x74] sm:$0xf]
    %v5629 = vld [vmem:[%s13 + $0x78] sm:$0xff]
    %v5630 = vld [vmem:[%s13 + $0x80] sm:$0xf]
    %v5631 = vld [vmem:[%s13 + $0x84] sm:$0xff]
    %v5632 = vld [vmem:[%s13 + $0x8c] sm:$0xf]
    %v5633 = vld [vmem:[%s13 + $0x90] sm:$0xff]
    %v5634 = vld [vmem:[%s13 + $0x98] sm:$0xf]
    %v5635 = vld [vmem:[%s13 + $0x9c] sm:$0xff]
    %v5636 = vld [vmem:[%s13 + $0xa4] sm:$0xf]
    %v5637 = vld [vmem:[%s13 + $0xa8] sm:$0xff]
    %v5638 = vld [vmem:[%s13 + $0xb0] sm:$0xf]
    %v5639 = vld [vmem:[%s13 + $0xb4] sm:$0xff]
    %v5640 = vld [vmem:[%s13 + $0xbc] sm:$0xf]
    %v5641 = vld [vmem:[%s13 + $0xc0] sm:$0xff]
    %v5642 = vld [vmem:[%s13 + $0xc8] sm:$0xf]
    %v5643 = vld [vmem:[%s13 + $0xcc] sm:$0xff]
    %v5644 = vld [vmem:[%s13 + $0xd4] sm:$0xf]
    %v5645 = vld [vmem:[%s13 + $0xd8] sm:$0xff]
    %v5646 = vld [vmem:[%s13 + $0xe0] sm:$0xf]
    %v5647 = vld [vmem:[%s13 + $0xe4] sm:$0xff]
    %v5648 = vld [vmem:[%s13 + $0xec] sm:$0xf]
    %v5649 = vld [vmem:[%s13 + $0xf0] sm:$0xff]
    %v5650 = vld [vmem:[%s13 + $0xf8] sm:$0xf]
    %v5651 = vld [vmem:[%s13 + $0xfc] sm:$0xff]
    %v5652 = vld [vmem:[%s13 + $0x104] sm:$0xf]
    %v5653 = vld [vmem:[%s13 + $0x108] sm:$0xff]
    %v5654 = vld [vmem:[%s13 + $0x110] sm:$0xf]
    %v5655 = vld [vmem:[%s13 + $0x114] sm:$0xff]
    %v5656 = vld [vmem:[%s13 + $0x11c] sm:$0xf]
    %v5657 = vld [vmem:[%s13 + $0x120] sm:$0xff]
    %v5658 = vld [vmem:[%s13 + $0x128] sm:$0xf]
    %v5659 = vld [vmem:[%s13 + $0x12c] sm:$0xff]
    %v5660 = vld [vmem:[%s13 + $0x134] sm:$0xf]
    %v5661 = vld [vmem:[%s13 + $0x138] sm:$0xff]
    %v5662 = vld [vmem:[%s13 + $0x140] sm:$0xf]
    %v5663 = vld [vmem:[%s13 + $0x144] sm:$0xff]
    %v5664 = vld [vmem:[%s13 + $0x14c] sm:$0xf]
    %v5665 = vld [vmem:[%s13 + $0x150] sm:$0xff]
    %v5666 = vld [vmem:[%s13 + $0x158] sm:$0xf]
    %v5667 = vld [vmem:[%s13 + $0x15c] sm:$0xff]
    %v5668 = vld [vmem:[%s13 + $0x164] sm:$0xf]
    %v5669 = vld [vmem:[%s13 + $0x168] sm:$0xff]
    %v5670 = vld [vmem:[%s13 + $0x170] sm:$0xf]
    %v5671 = vld [vmem:[%s13 + $0x174] sm:$0xff]
    %v5672 = vld [vmem:[%s13 + $0x17c] sm:$0xf]
    %v5673 = vld [vmem:[%s13 + $0x180] sm:$0xff]
    %v5674 = vld [vmem:[%s13 + $0x188] sm:$0xf]
    %v5675 = vld [vmem:[%s13 + $0x18c] sm:$0xff]
    %v5676 = vld [vmem:[%s13 + $0x194] sm:$0xf]
    %v5677 = vld [vmem:[%s13 + $0x198] sm:$0xff]
    %v5678 = vld [vmem:[%s13 + $0x1a0] sm:$0xf]
    %v5679 = vld [vmem:[%s13 + $0x1a4] sm:$0xff]
    %v5680 = vld [vmem:[%s13 + $0x1ac] sm:$0xf]
    %v5681 = vld [vmem:[%s13 + $0x1b0] sm:$0xff]
    %v5682 = vld [vmem:[%s13 + $0x1b8] sm:$0xf]
    %v5683 = vld [vmem:[%s13 + $0x1bc] sm:$0xff]
    %v5684 = vld [vmem:[%s13 + $0x1c4] sm:$0xf]
    %v5685 = vld [vmem:[%s13 + $0x1c8] sm:$0xff]
    %v5686 = vld [vmem:[%s13 + $0x1d0] sm:$0xf]
    %v5687 = vld [vmem:[%s13 + $0x1d4] sm:$0xff]
    %v5688 = vld [vmem:[%s13 + $0x1dc] sm:$0xf]
    %v5689 = vld [vmem:[%s13 + $0x1e0] sm:$0xff]
    %v5690 = vld [vmem:[%s13 + $0x1e8] sm:$0xf]
    %v5691 = vld [vmem:[%s13 + $0x1ec] sm:$0xff]
    %v5692 = vld [vmem:[%s13 + $0x1f4] sm:$0xf]
    %v5693 = vld [vmem:[%s13 + $0x1f8] sm:$0xff]
    %v5694 = vld [vmem:[%s13 + $0x200] sm:$0xf]
    %v5695 = vld [vmem:[%s13 + $0x204] sm:$0x77]
    %v5696 = vld [vmem:[%s13 + $0x20c] sm:$0x7]
    %v5697 = vld [vmem:[%s14] sm:$0x7]
    %v5698 = vpack.c.bf16 %v5606, %v5606
    %v5699 = vpack.c.bf16 %v5607, %v5607
    %v5700 = vpack.c.bf16 %v5608, %v5608
    %v5702 = vlaneseq
    %v5703 = vshrl.u32 %v5702, 7
    %v5704 = vsub.s32 0, %v5703
    %v5705 = vrot.slane %v5697, %v5704
    %v5706 = vlaneseq
    %v5707 = vshrl.u32 %v5706, 7
    %v5708 = vsub.s32 1, %v5707
    %v5709 = vrot.slane %v5697, %v5708
    %v5710 = vlaneseq
    %v5711 = vshrl.u32 %v5710, 7
    %v5712 = vsub.s32 2, %v5711
    %v5713 = vrot.slane %v5697, %v5712
    %v5805 = vunpack.c.l.b16 %v5609
    %v5806 = vunpack.c.h.b16 %v5609
    %v5807 = vunpack.c.l.b16 %v5610
    %v5808 = vunpack.c.l.b16 %v5611
    %v5809 = vunpack.c.h.b16 %v5611
    %v5810 = vunpack.c.l.b16 %v5612
    %v5811 = vunpack.c.l.b16 %v5613
    %v5812 = vunpack.c.h.b16 %v5613
    %v5813 = vunpack.c.l.b16 %v5614
    %v5814 = vunpack.c.l.b16 %v5615
    %v5815 = vunpack.c.h.b16 %v5615
    %v5816 = vunpack.c.l.b16 %v5616
    %v5817 = vunpack.c.l.b16 %v5617
    %v5818 = vunpack.c.h.b16 %v5617
    %v5819 = vunpack.c.l.b16 %v5618
    %v5820 = vunpack.c.l.b16 %v5619
    %v5821 = vunpack.c.h.b16 %v5619
    %v5822 = vunpack.c.l.b16 %v5620
    %v5823 = vunpack.c.l.b16 %v5621
    %v5824 = vunpack.c.h.b16 %v5621
    %v5825 = vunpack.c.l.b16 %v5622
    %v5826 = vunpack.c.l.b16 %v5623
    %v5827 = vunpack.c.h.b16 %v5623
    %v5828 = vunpack.c.l.b16 %v5624
    %v5829 = vunpack.c.l.b16 %v5625
    %v5830 = vunpack.c.h.b16 %v5625
    %v5831 = vunpack.c.l.b16 %v5626
    %v5832 = vunpack.c.l.b16 %v5627
    %v5833 = vunpack.c.h.b16 %v5627
    %v5834 = vunpack.c.l.b16 %v5628
    %v5835 = vunpack.c.l.b16 %v5629
    %v5836 = vunpack.c.h.b16 %v5629
    %v5837 = vunpack.c.l.b16 %v5630
    %v5838 = vunpack.c.l.b16 %v5631
    %v5839 = vunpack.c.h.b16 %v5631
    %v5840 = vunpack.c.l.b16 %v5632
    %v5841 = vunpack.c.l.b16 %v5633
    %v5842 = vunpack.c.h.b16 %v5633
    %v5843 = vunpack.c.l.b16 %v5634
    %v5844 = vunpack.c.l.b16 %v5635
    %v5845 = vunpack.c.h.b16 %v5635
    %v5846 = vunpack.c.l.b16 %v5636
    %v5847 = vunpack.c.l.b16 %v5637
    %v5848 = vunpack.c.h.b16 %v5637
    %v5849 = vunpack.c.l.b16 %v5638
    %v5850 = vunpack.c.l.b16 %v5639
    %v5851 = vunpack.c.h.b16 %v5639
    %v5852 = vunpack.c.l.b16 %v5640
    %v5853 = vunpack.c.l.b16 %v5641
    %v5854 = vunpack.c.h.b16 %v5641
    %v5855 = vunpack.c.l.b16 %v5642
    %v5856 = vunpack.c.l.b16 %v5643
    %v5857 = vunpack.c.h.b16 %v5643
    %v5858 = vunpack.c.l.b16 %v5644
    %v5859 = vunpack.c.l.b16 %v5645
    %v5860 = vunpack.c.h.b16 %v5645
    %v5861 = vunpack.c.l.b16 %v5646
    %v5862 = vunpack.c.l.b16 %v5647
    %v5863 = vunpack.c.h.b16 %v5647
    %v5864 = vunpack.c.l.b16 %v5648
    %v5865 = vunpack.c.l.b16 %v5649
    %v5866 = vunpack.c.h.b16 %v5649
    %v5867 = vunpack.c.l.b16 %v5650
    %v5868 = vunpack.c.l.b16 %v5651
    %v5869 = vunpack.c.h.b16 %v5651
    %v5870 = vunpack.c.l.b16 %v5652
    %v5871 = vunpack.c.l.b16 %v5653
    %v5872 = vunpack.c.h.b16 %v5653
    %v5873 = vunpack.c.l.b16 %v5654
    %v5874 = vunpack.c.l.b16 %v5655
    %v5875 = vunpack.c.h.b16 %v5655
    %v5876 = vunpack.c.l.b16 %v5656
    %v5877 = vunpack.c.l.b16 %v5657
    %v5878 = vunpack.c.h.b16 %v5657
    %v5879 = vunpack.c.l.b16 %v5658
    %v5880 = vunpack.c.l.b16 %v5659
    %v5881 = vunpack.c.h.b16 %v5659
    %v5882 = vunpack.c.l.b16 %v5660
    %v5883 = vunpack.c.l.b16 %v5661
    %v5884 = vunpack.c.h.b16 %v5661
    %v5885 = vunpack.c.l.b16 %v5662
    %v5886 = vunpack.c.l.b16 %v5663
    %v5887 = vunpack.c.h.b16 %v5663
    %v5888 = vunpack.c.l.b16 %v5664
    %v5889 = vunpack.c.l.b16 %v5665
    %v5890 = vunpack.c.h.b16 %v5665
    %v5891 = vunpack.c.l.b16 %v5666
    %v5892 = vunpack.c.l.b16 %v5667
    %v5893 = vunpack.c.h.b16 %v5667
    %v5894 = vunpack.c.l.b16 %v5668
    %v5895 = vunpack.c.l.b16 %v5669
    %v5896 = vunpack.c.h.b16 %v5669
    %v5897 = vunpack.c.l.b16 %v5670
    %v5898 = vunpack.c.l.b16 %v5671
    %v5899 = vunpack.c.h.b16 %v5671
    %v5900 = vunpack.c.l.b16 %v5672
    %v5901 = vunpack.c.l.b16 %v5673
    %v5902 = vunpack.c.h.b16 %v5673
    %v5903 = vunpack.c.l.b16 %v5674
    %v5904 = vunpack.c.l.b16 %v5675
    %v5905 = vunpack.c.h.b16 %v5675
    %v5906 = vunpack.c.l.b16 %v5676
    %v5907 = vunpack.c.l.b16 %v5677
    %v5908 = vunpack.c.h.b16 %v5677
    %v5909 = vunpack.c.l.b16 %v5678
    %v5910 = vunpack.c.l.b16 %v5679
    %v5911 = vunpack.c.h.b16 %v5679
    %v5912 = vunpack.c.l.b16 %v5680
    %v5913 = vunpack.c.l.b16 %v5681
    %v5914 = vunpack.c.h.b16 %v5681
    %v5915 = vunpack.c.l.b16 %v5682
    %v5916 = vunpack.c.l.b16 %v5683
    %v5917 = vunpack.c.h.b16 %v5683
    %v5918 = vunpack.c.l.b16 %v5684
    %v5919 = vunpack.c.l.b16 %v5685
    %v5920 = vunpack.c.h.b16 %v5685
    %v5921 = vunpack.c.l.b16 %v5686
    %v5922 = vunpack.c.l.b16 %v5687
    %v5923 = vunpack.c.h.b16 %v5687
    %v5924 = vunpack.c.l.b16 %v5688
    %v5925 = vunpack.c.l.b16 %v5689
    %v5926 = vunpack.c.h.b16 %v5689
    %v5927 = vunpack.c.l.b16 %v5690
    %v5928 = vunpack.c.l.b16 %v5691
    %v5929 = vunpack.c.h.b16 %v5691
    %v5930 = vunpack.c.l.b16 %v5692
    %v5931 = vunpack.c.l.b16 %v5693
    %v5932 = vunpack.c.h.b16 %v5693
    %v5933 = vunpack.c.l.b16 %v5694
    %v5934 = vunpack.c.l.b16 %v5695
    %v5935 = vunpack.c.h.b16 %v5695
    %v5936 = vunpack.c.l.b16 %v5696
    %v5937 = vpack.c.b16 %v5808, %v5805
    %v5938 = vpack.c.b16 %v5809, %v5806
    %v5939 = vpack.c.b16 %v5810, %v5807
    %v5940 = vpack.c.b16 %v5814, %v5811
    %v5941 = vpack.c.b16 %v5815, %v5812
    %v5942 = vpack.c.b16 %v5816, %v5813
    %v5943 = vpack.c.b16 %v5820, %v5817
    %v5944 = vpack.c.b16 %v5821, %v5818
    %v5945 = vpack.c.b16 %v5822, %v5819
    %v5946 = vpack.c.b16 %v5826, %v5823
    %v5947 = vpack.c.b16 %v5827, %v5824
    %v5948 = vpack.c.b16 %v5828, %v5825
    %v5949 = vpack.c.b16 %v5832, %v5829
    %v5950 = vpack.c.b16 %v5833, %v5830
    %v5951 = vpack.c.b16 %v5834, %v5831
    %v5952 = vpack.c.b16 %v5838, %v5835
    %v5953 = vpack.c.b16 %v5839, %v5836
    %v5954 = vpack.c.b16 %v5840, %v5837
    %v5955 = vpack.c.b16 %v5844, %v5841
    %v5956 = vpack.c.b16 %v5845, %v5842
    %v5957 = vpack.c.b16 %v5846, %v5843
    %v5958 = vpack.c.b16 %v5850, %v5847
    %v5959 = vpack.c.b16 %v5851, %v5848
    %v5960 = vpack.c.b16 %v5852, %v5849
    %v5961 = vpack.c.b16 %v5856, %v5853
    %v5962 = vpack.c.b16 %v5857, %v5854
    %v5963 = vpack.c.b16 %v5858, %v5855
    %v5964 = vpack.c.b16 %v5862, %v5859
    %v5965 = vpack.c.b16 %v5863, %v5860
    %v5966 = vpack.c.b16 %v5864, %v5861
    %v5967 = vpack.c.b16 %v5868, %v5865
    %v5968 = vpack.c.b16 %v5869, %v5866
    %v5969 = vpack.c.b16 %v5870, %v5867
    %v5970 = vpack.c.b16 %v5874, %v5871
    %v5971 = vpack.c.b16 %v5875, %v5872
    %v5972 = vpack.c.b16 %v5876, %v5873
    %v5973 = vpack.c.b16 %v5880, %v5877
    %v5974 = vpack.c.b16 %v5881, %v5878
    %v5975 = vpack.c.b16 %v5882, %v5879
    %v5976 = vpack.c.b16 %v5886, %v5883
    %v5977 = vpack.c.b16 %v5887, %v5884
    %v5978 = vpack.c.b16 %v5888, %v5885
    %v5979 = vpack.c.b16 %v5892, %v5889
    %v5980 = vpack.c.b16 %v5893, %v5890
    %v5981 = vpack.c.b16 %v5894, %v5891
    %v5982 = vpack.c.b16 %v5898, %v5895
    %v5983 = vpack.c.b16 %v5899, %v5896
    %v5984 = vpack.c.b16 %v5900, %v5897
    %v5985 = vpack.c.b16 %v5904, %v5901
    %v5986 = vpack.c.b16 %v5905, %v5902
    %v5987 = vpack.c.b16 %v5906, %v5903
    %v5988 = vpack.c.b16 %v5910, %v5907
    %v5989 = vpack.c.b16 %v5911, %v5908
    %v5990 = vpack.c.b16 %v5912, %v5909
    %v5991 = vpack.c.b16 %v5916, %v5913
    %v5992 = vpack.c.b16 %v5917, %v5914
    %v5993 = vpack.c.b16 %v5918, %v5915
    %v5994 = vpack.c.b16 %v5922, %v5919
    %v5995 = vpack.c.b16 %v5923, %v5920
    %v5996 = vpack.c.b16 %v5924, %v5921
    %v5997 = vpack.c.b16 %v5928, %v5925
    %v5998 = vpack.c.b16 %v5929, %v5926
    %v5999 = vpack.c.b16 %v5930, %v5927
    %v6000 = vpack.c.b16 %v5934, %v5931
    %v6001 = vpack.c.b16 %v5935, %v5932
    %v6002 = vpack.c.b16 %v5936, %v5933
    %vm6066 = vcmask 769024
    %v6068 = vsel %vm6066, %v5700, 0
    %vm6070 = vcmask 1046528
    %v6072 = vsel %vm6070, %v6000, 0
    %v6075 = vsel %vm6070, %v6001, 0
    %v6078 = vsel %vm6070, %v6002, 0
    %6080 = vmatprep.subr.bf16.mxu0 %v5959
    %6081 = vmatpush1.bf16.msra.mxu0 %v5958
    %6082 = vmatprep.subr.bf16.mxu0 %v5956
    %6083 = vmatpush1.bf16.msra.mxu0 %v5955
    %6084 = vmatprep.subr.bf16.mxu0 %v5953
    %6085 = vmatpush1.bf16.msra.mxu0 %v5952
    %6086 = vmatprep.subr.bf16.mxu0 %v5950
    %6087 = vmatpush1.bf16.msra.mxu0 %v5949
    %6088 = vmatprep.subr.bf16.mxu0 %v5947
    %6089 = vmatpush1.bf16.msra.mxu0 %v5946
    %6090 = vmatprep.subr.bf16.mxu0 %v5944
    %6091 = vmatpush1.bf16.msra.mxu0 %v5943
    %6092 = vmatprep.subr.bf16.mxu0 %v5941
    %6093 = vmatpush1.bf16.msra.mxu0 %v5940
    %6094 = vmatprep.subr.bf16.mxu0 %v5938
    %6095 = vmatpush1.bf16.msra.mxu0 %v5937
    %6096 = vmatprep.subr.bf16.mxu0 %v5983
    %6097 = vmatpush2.bf16.msra.mxu0 %v5982
    %6098 = vmatprep.subr.bf16.mxu0 %v5980
    %6099 = vmatpush2.bf16.msra.mxu0 %v5979
    %6100 = vmatprep.subr.bf16.mxu0 %v5977
    %6101 = vmatpush2.bf16.msra.mxu0 %v5976
    %6102 = vmatprep.subr.bf16.mxu0 %v5974
    %6103 = vmatpush2.bf16.msra.mxu0 %v5973
    %6104 = vmatprep.subr.bf16.mxu0 %v5971
    %6105 = vmatpush2.bf16.msra.mxu0 %v5970
    %6106 = vmatprep.subr.bf16.mxu0 %v5968
    %6107 = vmatpush2.bf16.msra.mxu0 %v5967
    %6108 = vmatprep.subr.bf16.mxu0 %v5965
    %6109 = vmatpush2.bf16.msra.mxu0 %v5964
    %6110 = vmatprep.subr.bf16.mxu0 %v5962
    %6111 = vmatpush2.bf16.msra.mxu0 %v5961
    %6112 = vmatprep.mubr.bf16.mxu0 %v5699
    %6113 = vmatmul.mubr.bf16.gmra.mxu0 %v5698
    %v6114 = vpop.f32.mrf.mxu0
    %v6115 = vadd.f32 %v5705, %v6114
    %v6116 = vpop.f32.mrf.mxu0
    %v6117 = vadd.f32 %v5709, %v6116
    %v6118 = vpop.f32.mrf.mxu0
    %v6119 = vpop.f32.mrf.mxu0
    %6120 = vdwg.mxu0
    %6121 = vmatprep.subr.bf16.mxu0 0
    %6122 = vmatpush1.bf16.msra.mxu0 0
    %6123 = vmatprep.subr.bf16.mxu0 0
    %6124 = vmatpush1.bf16.msra.mxu0 0
    %6125 = vmatprep.subr.bf16.mxu0 %v6075
    %6126 = vmatpush1.bf16.msra.mxu0 %v6072
    %6127 = vmatprep.subr.bf16.mxu0 %v5998
    %6128 = vmatpush1.bf16.msra.mxu0 %v5997
    %6129 = vmatprep.subr.bf16.mxu0 %v5995
    %6130 = vmatpush1.bf16.msra.mxu0 %v5994
    %6131 = vmatprep.subr.bf16.mxu0 %v5992
    %6132 = vmatpush1.bf16.msra.mxu0 %v5991
    %6133 = vmatprep.subr.bf16.mxu0 %v5989
    %6134 = vmatpush1.bf16.msra.mxu0 %v5988
    %6135 = vmatprep.subr.bf16.mxu0 %v5986
    %6136 = vmatpush1.bf16.msra.mxu0 %v5985
    %6137 = vmatprep.subr.bf16.mxu0 0
    %6138 = vmatpush2.bf16.msra.mxu0 0
    %6139 = vmatprep.subr.bf16.mxu0 0
    %6140 = vmatpush2.bf16.msra.mxu0 0
    %6141 = vmatprep.subr.bf16.mxu0 0
    %6142 = vmatpush2.bf16.msra.mxu0 0
    %6143 = vmatprep.subr.bf16.mxu0 0
    %6144 = vmatpush2.bf16.msra.mxu0 0
    %6145 = vmatprep.subr.bf16.mxu0 0
    %6146 = vmatpush2.bf16.msra.mxu0 0
    %6147 = vmatprep.subr.bf16.mxu0 0
    %6148 = vmatpush2.bf16.msra.mxu0 0
    %6149 = vmatprep.subr.bf16.mxu0 0
    %6150 = vmatpush2.bf16.msra.mxu0 0
    %6151 = vmatprep.subr.bf16.mxu0 0
    %6152 = vmatpush2.bf16.msra.mxu0 0
    %6153 = vmatprep.mubr.bf16.mxu0 0
    %6154 = vmatmul.mubr.bf16.gmra.mxu0 %v6068
    %v6155 = vpop.f32.mrf.mxu0
    %v6156 = vadd.f32 %v6115, %v6155
    %v6157 = vpop.f32.mrf.mxu0
    %v6158 = vadd.f32 %v6117, %v6157
    %v6159 = vpop.f32.mrf.mxu0
    %v6160 = vpop.f32.mrf.mxu0
    %6161 = vdwg.mxu0
    %6162 = vmatprep.subr.bf16.mxu0 0
    %6163 = vmatpush1.bf16.msra.mxu0 %v5960
    %6164 = vmatprep.subr.bf16.mxu0 0
    %6165 = vmatpush1.bf16.msra.mxu0 %v5957
    %6166 = vmatprep.subr.bf16.mxu0 0
    %6167 = vmatpush1.bf16.msra.mxu0 %v5954
    %6168 = vmatprep.subr.bf16.mxu0 0
    %6169 = vmatpush1.bf16.msra.mxu0 %v5951
    %6170 = vmatprep.subr.bf16.mxu0 0
    %6171 = vmatpush1.bf16.msra.mxu0 %v5948
    %6172 = vmatprep.subr.bf16.mxu0 0
    %6173 = vmatpush1.bf16.msra.mxu0 %v5945
    %6174 = vmatprep.subr.bf16.mxu0 0
    %6175 = vmatpush1.bf16.msra.mxu0 %v5942
    %6176 = vmatprep.subr.bf16.mxu0 0
    %6177 = vmatpush1.bf16.msra.mxu0 %v5939
    %6178 = vmatprep.subr.bf16.mxu0 0
    %6179 = vmatpush2.bf16.msra.mxu0 %v5984
    %6180 = vmatprep.subr.bf16.mxu0 0
    %6181 = vmatpush2.bf16.msra.mxu0 %v5981
    %6182 = vmatprep.subr.bf16.mxu0 0
    %6183 = vmatpush2.bf16.msra.mxu0 %v5978
    %6184 = vmatprep.subr.bf16.mxu0 0
    %6185 = vmatpush2.bf16.msra.mxu0 %v5975
    %6186 = vmatprep.subr.bf16.mxu0 0
    %6187 = vmatpush2.bf16.msra.mxu0 %v5972
    %6188 = vmatprep.subr.bf16.mxu0 0
    %6189 = vmatpush2.bf16.msra.mxu0 %v5969
    %6190 = vmatprep.subr.bf16.mxu0 0
    %6191 = vmatpush2.bf16.msra.mxu0 %v5966
    %6192 = vmatprep.subr.bf16.mxu0 0
    %6193 = vmatpush2.bf16.msra.mxu0 %v5963
    %6194 = vmatprep.mubr.bf16.mxu0 %v5699
    %6195 = vmatmul.mubr.bf16.gmra.mxu0 %v5698
    %v6196 = vpop.f32.mrf.mxu0
    %v6197 = vadd.f32 %v5713, %v6196
    %v6198 = vpop.f32.mrf.mxu0
    %v6199 = vpop.f32.mrf.mxu0
    %v6200 = vpop.f32.mrf.mxu0
    %6201 = vdwg.mxu0
    %6202 = vmatprep.subr.bf16.mxu0 0
    %6203 = vmatpush1.bf16.msra.mxu0 0
    %6204 = vmatprep.subr.bf16.mxu0 0
    %6205 = vmatpush1.bf16.msra.mxu0 0
    %6206 = vmatprep.subr.bf16.mxu0 0
    %6207 = vmatpush1.bf16.msra.mxu0 %v6078
    %6208 = vmatprep.subr.bf16.mxu0 0
    %6209 = vmatpush1.bf16.msra.mxu0 %v5999
    %6210 = vmatprep.subr.bf16.mxu0 0
    %6211 = vmatpush1.bf16.msra.mxu0 %v5996
    %6212 = vmatprep.subr.bf16.mxu0 0
    %6213 = vmatpush1.bf16.msra.mxu0 %v5993
    %6214 = vmatprep.subr.bf16.mxu0 0
    %6215 = vmatpush1.bf16.msra.mxu0 %v5990
    %6216 = vmatprep.subr.bf16.mxu0 0
    %6217 = vmatpush1.bf16.msra.mxu0 %v5987
    %6218 = vmatprep.subr.bf16.mxu0 0
    %6219 = vmatpush2.bf16.msra.mxu0 0
    %6220 = vmatprep.subr.bf16.mxu0 0
    %6221 = vmatpush2.bf16.msra.mxu0 0
    %6222 = vmatprep.subr.bf16.mxu0 0
    %6223 = vmatpush2.bf16.msra.mxu0 0
    %6224 = vmatprep.subr.bf16.mxu0 0
    %6225 = vmatpush2.bf16.msra.mxu0 0
    %6226 = vmatprep.subr.bf16.mxu0 0
    %6227 = vmatpush2.bf16.msra.mxu0 0
    %6228 = vmatprep.subr.bf16.mxu0 0
    %6229 = vmatpush2.bf16.msra.mxu0 0
    %6230 = vmatprep.subr.bf16.mxu0 0
    %6231 = vmatpush2.bf16.msra.mxu0 0
    %6232 = vmatprep.subr.bf16.mxu0 0
    %6233 = vmatpush2.bf16.msra.mxu0 0
    %6234 = vmatprep.mubr.bf16.mxu0 0
    %6235 = vmatmul.mubr.bf16.gmra.mxu0 %v6068
    %v6236 = vpop.f32.mrf.mxu0
    %v6237 = vadd.f32 %v6197, %v6236
    %v6238 = vpop.f32.mrf.mxu0
    %v6239 = vpop.f32.mrf.mxu0
    %v6240 = vpop.f32.mrf.mxu0
    %6241 = vdwg.mxu0
    %v6242 = vmax.f32 %v6156, 0.0
    %v6243 = vmax.f32 %v6158, 0.0
    %v6244 = vmax.f32 %v6237, 0.0
    %v6245 = vld [vmem:[%s15] sm:$0xff]
    %v6246 = vld [vmem:[%s15 + $0x8] sm:$0xff]
    %v6247 = vld [vmem:[%s15 + $0x10] sm:$0xff]
    %v6248 = vld [vmem:[%s15 + $0x18] sm:$0xff]
    %v6249 = vld [vmem:[%s15 + $0x20] sm:$0xff]
    %v6250 = vld [vmem:[%s15 + $0x28] sm:$0xff]
    %v6251 = vld [vmem:[%s15 + $0x30] sm:$0xff]
    %v6252 = vld [vmem:[%s15 + $0x38] sm:$0xff]
    %v6253 = vld [vmem:[%s15 + $0x40] sm:$0xff]
    %v6254 = vld [vmem:[%s15 + $0x48] sm:$0xff]
    %v6255 = vld [vmem:[%s15 + $0x50] sm:$0xff]
    %v6256 = vld [vmem:[%s15 + $0x58] sm:$0xff]
    %v6257 = vld [vmem:[%s15 + $0x60] sm:$0xff]
    %v6258 = vld [vmem:[%s15 + $0x68] sm:$0xff]
    %v6259 = vld [vmem:[%s15 + $0x70] sm:$0xff]
    %v6260 = vld [vmem:[%s15 + $0x78] sm:$0xff]
    %v6261 = vld [vmem:[%s15 + $0x80] sm:$0xff]
    %v6262 = vld [vmem:[%s15 + $0x88] sm:$0xff]
    %v6263 = vld [vmem:[%s15 + $0x90] sm:$0xff]
    %v6264 = vld [vmem:[%s15 + $0x98] sm:$0xff]
    %v6265 = vld [vmem:[%s15 + $0xa0] sm:$0xff]
    %v6266 = vld [vmem:[%s15 + $0xa8] sm:$0xff]
    %v6267 = vld [vmem:[%s15 + $0xb0] sm:$0xff]
    %v6268 = vld [vmem:[%s15 + $0xb8] sm:$0xff]
    %v6269 = vld [vmem:[%s15 + $0xc0] sm:$0xff]
    %v6270 = vld [vmem:[%s15 + $0xc8] sm:$0xff]
    %v6271 = vld [vmem:[%s15 + $0xd0] sm:$0xff]
    %v6272 = vld [vmem:[%s15 + $0xd8] sm:$0xff]
    %v6273 = vld [vmem:[%s15 + $0xe0] sm:$0xff]
    %v6274 = vld [vmem:[%s15 + $0xe8] sm:$0xff]
    %v6275 = vld [vmem:[%s15 + $0xf0] sm:$0xff]
    %v6276 = vld [vmem:[%s15 + $0xf8] sm:$0xff]
    %v6277 = vld [vmem:[%s15 + $0x100] sm:$0xff]
    %v6278 = vld [vmem:[%s15 + $0x108] sm:$0xff]
    %v6279 = vld [vmem:[%s15 + $0x110] sm:$0xff]
    %v6280 = vld [vmem:[%s15 + $0x118] sm:$0xff]
    %v6281 = vld [vmem:[%s15 + $0x120] sm:$0xff]
    %v6282 = vld [vmem:[%s15 + $0x128] sm:$0x33]
    %v6283 = vld [vmem:[%s16] sm:$0x3]
    %v6284 = vpack.c.bf16 %v6242, %v6242
    %v6285 = vpack.c.bf16 %v6243, %v6243
    %v6286 = vpack.c.bf16 %v6244, %v6244
    %v6288 = vlaneseq
    %v6289 = vshrl.u32 %v6288, 7
    %v6290 = vsub.s32 0, %v6289
    %v6291 = vrot.slane %v6283, %v6290
    %v6292 = vlaneseq
    %v6293 = vshrl.u32 %v6292, 7
    %v6294 = vsub.s32 1, %v6293
    %v6295 = vrot.slane %v6283, %v6294
    %v6336 = vunpack.c.l.b16 %v6245
    %v6337 = vunpack.c.h.b16 %v6245
    %v6338 = vunpack.c.l.b16 %v6246
    %v6339 = vunpack.c.h.b16 %v6246
    %v6340 = vunpack.c.l.b16 %v6247
    %v6341 = vunpack.c.h.b16 %v6247
    %v6342 = vunpack.c.l.b16 %v6248
    %v6343 = vunpack.c.h.b16 %v6248
    %v6344 = vunpack.c.l.b16 %v6249
    %v6345 = vunpack.c.h.b16 %v6249
    %v6346 = vunpack.c.l.b16 %v6250
    %v6347 = vunpack.c.h.b16 %v6250
    %v6348 = vunpack.c.l.b16 %v6251
    %v6349 = vunpack.c.h.b16 %v6251
    %v6350 = vunpack.c.l.b16 %v6252
    %v6351 = vunpack.c.h.b16 %v6252
    %v6352 = vunpack.c.l.b16 %v6253
    %v6353 = vunpack.c.h.b16 %v6253
    %v6354 = vunpack.c.l.b16 %v6254
    %v6355 = vunpack.c.h.b16 %v6254
    %v6356 = vunpack.c.l.b16 %v6255
    %v6357 = vunpack.c.h.b16 %v6255
    %v6358 = vunpack.c.l.b16 %v6256
    %v6359 = vunpack.c.h.b16 %v6256
    %v6360 = vunpack.c.l.b16 %v6257
    %v6361 = vunpack.c.h.b16 %v6257
    %v6362 = vunpack.c.l.b16 %v6258
    %v6363 = vunpack.c.h.b16 %v6258
    %v6364 = vunpack.c.l.b16 %v6259
    %v6365 = vunpack.c.h.b16 %v6259
    %v6366 = vunpack.c.l.b16 %v6260
    %v6367 = vunpack.c.h.b16 %v6260
    %v6368 = vunpack.c.l.b16 %v6261
    %v6369 = vunpack.c.h.b16 %v6261
    %v6370 = vunpack.c.l.b16 %v6262
    %v6371 = vunpack.c.h.b16 %v6262
    %v6372 = vunpack.c.l.b16 %v6263
    %v6373 = vunpack.c.h.b16 %v6263
    %v6374 = vunpack.c.l.b16 %v6264
    %v6375 = vunpack.c.h.b16 %v6264
    %v6376 = vunpack.c.l.b16 %v6265
    %v6377 = vunpack.c.h.b16 %v6265
    %v6378 = vunpack.c.l.b16 %v6266
    %v6379 = vunpack.c.h.b16 %v6266
    %v6380 = vunpack.c.l.b16 %v6267
    %v6381 = vunpack.c.h.b16 %v6267
    %v6382 = vunpack.c.l.b16 %v6268
    %v6383 = vunpack.c.h.b16 %v6268
    %v6384 = vunpack.c.l.b16 %v6269
    %v6385 = vunpack.c.h.b16 %v6269
    %v6386 = vunpack.c.l.b16 %v6270
    %v6387 = vunpack.c.h.b16 %v6270
    %v6388 = vunpack.c.l.b16 %v6271
    %v6389 = vunpack.c.h.b16 %v6271
    %v6390 = vunpack.c.l.b16 %v6272
    %v6391 = vunpack.c.h.b16 %v6272
    %v6392 = vunpack.c.l.b16 %v6273
    %v6393 = vunpack.c.h.b16 %v6273
    %v6394 = vunpack.c.l.b16 %v6274
    %v6395 = vunpack.c.h.b16 %v6274
    %v6396 = vunpack.c.l.b16 %v6275
    %v6397 = vunpack.c.h.b16 %v6275
    %v6398 = vunpack.c.l.b16 %v6276
    %v6399 = vunpack.c.h.b16 %v6276
    %v6400 = vunpack.c.l.b16 %v6277
    %v6401 = vunpack.c.h.b16 %v6277
    %v6402 = vunpack.c.l.b16 %v6278
    %v6403 = vunpack.c.h.b16 %v6278
    %v6404 = vunpack.c.l.b16 %v6279
    %v6405 = vunpack.c.h.b16 %v6279
    %v6406 = vunpack.c.l.b16 %v6280
    %v6407 = vunpack.c.h.b16 %v6280
    %v6408 = vunpack.c.l.b16 %v6281
    %v6409 = vunpack.c.h.b16 %v6281
    %v6410 = vunpack.c.l.b16 %v6282
    %v6411 = vunpack.c.h.b16 %v6282
    %v6412 = vpack.c.b16 %v6338, %v6336
    %v6413 = vpack.c.b16 %v6339, %v6337
    %v6414 = vpack.c.b16 %v6342, %v6340
    %v6415 = vpack.c.b16 %v6343, %v6341
    %v6416 = vpack.c.b16 %v6346, %v6344
    %v6417 = vpack.c.b16 %v6347, %v6345
    %v6418 = vpack.c.b16 %v6350, %v6348
    %v6419 = vpack.c.b16 %v6351, %v6349
    %v6420 = vpack.c.b16 %v6354, %v6352
    %v6421 = vpack.c.b16 %v6355, %v6353
    %v6422 = vpack.c.b16 %v6358, %v6356
    %v6423 = vpack.c.b16 %v6359, %v6357
    %v6424 = vpack.c.b16 %v6362, %v6360
    %v6425 = vpack.c.b16 %v6363, %v6361
    %v6426 = vpack.c.b16 %v6366, %v6364
    %v6427 = vpack.c.b16 %v6367, %v6365
    %v6428 = vpack.c.b16 %v6370, %v6368
    %v6429 = vpack.c.b16 %v6371, %v6369
    %v6430 = vpack.c.b16 %v6374, %v6372
    %v6431 = vpack.c.b16 %v6375, %v6373
    %v6432 = vpack.c.b16 %v6378, %v6376
    %v6433 = vpack.c.b16 %v6379, %v6377
    %v6434 = vpack.c.b16 %v6382, %v6380
    %v6435 = vpack.c.b16 %v6383, %v6381
    %v6436 = vpack.c.b16 %v6386, %v6384
    %v6437 = vpack.c.b16 %v6387, %v6385
    %v6438 = vpack.c.b16 %v6390, %v6388
    %v6439 = vpack.c.b16 %v6391, %v6389
    %v6440 = vpack.c.b16 %v6394, %v6392
    %v6441 = vpack.c.b16 %v6395, %v6393
    %v6442 = vpack.c.b16 %v6398, %v6396
    %v6443 = vpack.c.b16 %v6399, %v6397
    %v6444 = vpack.c.b16 %v6402, %v6400
    %v6445 = vpack.c.b16 %v6403, %v6401
    %v6446 = vpack.c.b16 %v6406, %v6404
    %v6447 = vpack.c.b16 %v6407, %v6405
    %v6448 = vpack.c.b16 %v6410, %v6408
    %v6449 = vpack.c.b16 %v6411, %v6409
    %vm6486 = vcmask 359424
    %v6488 = vsel %vm6486, %v6286, 0
    %vm6490 = vcmask 1045504
    %v6492 = vsel %vm6490, %v6448, 0
    %v6495 = vsel %vm6490, %v6449, 0
    %6497 = vmatprep.subr.bf16.mxu0 %v6427
    %6498 = vmatpush1.bf16.msra.mxu0 %v6426
    %6499 = vmatprep.subr.bf16.mxu0 %v6425
    %6500 = vmatpush1.bf16.msra.mxu0 %v6424
    %6501 = vmatprep.subr.bf16.mxu0 %v6423
    %6502 = vmatpush1.bf16.msra.mxu0 %v6422
    %6503 = vmatprep.subr.bf16.mxu0 %v6421
    %6504 = vmatpush1.bf16.msra.mxu0 %v6420
    %6505 = vmatprep.subr.bf16.mxu0 %v6419
    %6506 = vmatpush1.bf16.msra.mxu0 %v6418
    %6507 = vmatprep.subr.bf16.mxu0 %v6417
    %6508 = vmatpush1.bf16.msra.mxu0 %v6416
    %6509 = vmatprep.subr.bf16.mxu0 %v6415
    %6510 = vmatpush1.bf16.msra.mxu0 %v6414
    %6511 = vmatprep.subr.bf16.mxu0 %v6413
    %6512 = vmatpush1.bf16.msra.mxu0 %v6412
    %6513 = vmatprep.subr.bf16.mxu0 %v6443
    %6514 = vmatpush2.bf16.msra.mxu0 %v6442
    %6515 = vmatprep.subr.bf16.mxu0 %v6441
    %6516 = vmatpush2.bf16.msra.mxu0 %v6440
    %6517 = vmatprep.subr.bf16.mxu0 %v6439
    %6518 = vmatpush2.bf16.msra.mxu0 %v6438
    %6519 = vmatprep.subr.bf16.mxu0 %v6437
    %6520 = vmatpush2.bf16.msra.mxu0 %v6436
    %6521 = vmatprep.subr.bf16.mxu0 %v6435
    %6522 = vmatpush2.bf16.msra.mxu0 %v6434
    %6523 = vmatprep.subr.bf16.mxu0 %v6433
    %6524 = vmatpush2.bf16.msra.mxu0 %v6432
    %6525 = vmatprep.subr.bf16.mxu0 %v6431
    %6526 = vmatpush2.bf16.msra.mxu0 %v6430
    %6527 = vmatprep.subr.bf16.mxu0 %v6429
    %6528 = vmatpush2.bf16.msra.mxu0 %v6428
    %6529 = vmatprep.mubr.bf16.mxu0 %v6285
    %6530 = vmatmul.mubr.bf16.gmra.mxu0 %v6284
    %v6531 = vpop.f32.mrf.mxu0
    %v6532 = vadd.f32 %v6291, %v6531
    %v6533 = vpop.f32.mrf.mxu0
    %v6534 = vadd.f32 %v6295, %v6533
    %v6535 = vpop.f32.mrf.mxu0
    %v6536 = vpop.f32.mrf.mxu0
    %6537 = vdwg.mxu0
    %6538 = vmatprep.subr.bf16.mxu0 0
    %6539 = vmatpush1.bf16.msra.mxu0 0
    %6540 = vmatprep.subr.bf16.mxu0 0
    %6541 = vmatpush1.bf16.msra.mxu0 0
    %6542 = vmatprep.subr.bf16.mxu0 0
    %6543 = vmatpush1.bf16.msra.mxu0 0
    %6544 = vmatprep.subr.bf16.mxu0 0
    %6545 = vmatpush1.bf16.msra.mxu0 0
    %6546 = vmatprep.subr.bf16.mxu0 0
    %6547 = vmatpush1.bf16.msra.mxu0 0
    %6548 = vmatprep.subr.bf16.mxu0 %v6495
    %6549 = vmatpush1.bf16.msra.mxu0 %v6492
    %6550 = vmatprep.subr.bf16.mxu0 %v6447
    %6551 = vmatpush1.bf16.msra.mxu0 %v6446
    %6552 = vmatprep.subr.bf16.mxu0 %v6445
    %6553 = vmatpush1.bf16.msra.mxu0 %v6444
    %6554 = vmatprep.subr.bf16.mxu0 0
    %6555 = vmatpush2.bf16.msra.mxu0 0
    %6556 = vmatprep.subr.bf16.mxu0 0
    %6557 = vmatpush2.bf16.msra.mxu0 0
    %6558 = vmatprep.subr.bf16.mxu0 0
    %6559 = vmatpush2.bf16.msra.mxu0 0
    %6560 = vmatprep.subr.bf16.mxu0 0
    %6561 = vmatpush2.bf16.msra.mxu0 0
    %6562 = vmatprep.subr.bf16.mxu0 0
    %6563 = vmatpush2.bf16.msra.mxu0 0
    %6564 = vmatprep.subr.bf16.mxu0 0
    %6565 = vmatpush2.bf16.msra.mxu0 0
    %6566 = vmatprep.subr.bf16.mxu0 0
    %6567 = vmatpush2.bf16.msra.mxu0 0
    %6568 = vmatprep.subr.bf16.mxu0 0
    %6569 = vmatpush2.bf16.msra.mxu0 0
    %6570 = vmatprep.mubr.bf16.mxu0 0
    %6571 = vmatmul.mubr.bf16.gmra.mxu0 %v6488
    %v6572 = vpop.f32.mrf.mxu0
    %v6573 = vadd.f32 %v6532, %v6572
    %v6574 = vpop.f32.mrf.mxu0
    %v6575 = vadd.f32 %v6534, %v6574
    %v6576 = vpop.f32.mrf.mxu0
    %v6577 = vpop.f32.mrf.mxu0
    %6578 = vdwg.mxu0
    %v6579 = vmax.f32 %v6573, 0.0
    %v6580 = vmax.f32 %v6575, 0.0
    %v6581 = vld [vmem:[%s17] sm:$0xff]
    %v6582 = vld [vmem:[%s17 + $0x8] sm:$0xff]
    %v6583 = vld [vmem:[%s17 + $0x10] sm:$0xff]
    %v6584 = vld [vmem:[%s17 + $0x18] sm:$0xff]
    %v6585 = vld [vmem:[%s17 + $0x20] sm:$0xff]
    %v6586 = vld [vmem:[%s17 + $0x28] sm:$0xff]
    %v6587 = vld [vmem:[%s17 + $0x30] sm:$0xff]
    %v6588 = vld [vmem:[%s17 + $0x38] sm:$0xff]
    %v6589 = vld [vmem:[%s17 + $0x40] sm:$0xff]
    %v6590 = vld [vmem:[%s17 + $0x48] sm:$0xff]
    %v6591 = vld [vmem:[%s17 + $0x50] sm:$0xff]
    %v6592 = vld [vmem:[%s17 + $0x58] sm:$0xff]
    %v6593 = vld [vmem:[%s17 + $0x60] sm:$0xff]
    %v6594 = vld [vmem:[%s17 + $0x68] sm:$0xff]
    %v6595 = vld [vmem:[%s17 + $0x70] sm:$0xff]
    %v6596 = vld [vmem:[%s17 + $0x78] sm:$0xff]
    %v6597 = vld [vmem:[%s17 + $0x80] sm:$0xff]
    %v6598 = vld [vmem:[%s17 + $0x88] sm:$0xff]
    %v6599 = vld [vmem:[%s17 + $0x90] sm:$0xff]
    %v6600 = vld [vmem:[%s17 + $0x98] sm:$0xff]
    %v6601 = vld [vmem:[%s17 + $0xa0] sm:$0xff]
    %v6602 = vld [vmem:[%s17 + $0xa8] sm:$0xff]
    %v6603 = vld [vmem:[%s17 + $0xb0] sm:$0xff]
    %v6604 = vld [vmem:[%s17 + $0xb8] sm:$0xff]
    %v6605 = vld [vmem:[%s17 + $0xc0] sm:$0xff]
    %v6606 = vld [vmem:[%s18] sm:$0x3]
    %v6607 = vpack.c.bf16 %v6579, %v6579
    %v6608 = vpack.c.bf16 %v6580, %v6580
    %v6610 = vlaneseq
    %v6611 = vshrl.u32 %v6610, 7
    %v6612 = vsub.s32 0, %v6611
    %v6613 = vrot.slane %v6606, %v6612
    %v6614 = vlaneseq
    %v6615 = vshrl.u32 %v6614, 7
    %v6616 = vsub.s32 1, %v6615
    %v6617 = vrot.slane %v6606, %v6616
    %v6645 = vunpack.c.l.b16 %v6581
    %v6646 = vunpack.c.h.b16 %v6581
    %v6647 = vunpack.c.l.b16 %v6582
    %v6648 = vunpack.c.h.b16 %v6582
    %v6649 = vunpack.c.l.b16 %v6583
    %v6650 = vunpack.c.h.b16 %v6583
    %v6651 = vunpack.c.l.b16 %v6584
    %v6652 = vunpack.c.h.b16 %v6584
    %v6653 = vunpack.c.l.b16 %v6585
    %v6654 = vunpack.c.h.b16 %v6585
    %v6655 = vunpack.c.l.b16 %v6586
    %v6656 = vunpack.c.h.b16 %v6586
    %v6657 = vunpack.c.l.b16 %v6587
    %v6658 = vunpack.c.h.b16 %v6587
    %v6659 = vunpack.c.l.b16 %v6588
    %v6660 = vunpack.c.h.b16 %v6588
    %v6661 = vunpack.c.l.b16 %v6589
    %v6662 = vunpack.c.h.b16 %v6589
    %v6663 = vunpack.c.l.b16 %v6590
    %v6664 = vunpack.c.h.b16 %v6590
    %v6665 = vunpack.c.l.b16 %v6591
    %v6666 = vunpack.c.h.b16 %v6591
    %v6667 = vunpack.c.l.b16 %v6592
    %v6668 = vunpack.c.h.b16 %v6592
    %v6669 = vunpack.c.l.b16 %v6593
    %v6670 = vunpack.c.h.b16 %v6593
    %v6671 = vunpack.c.l.b16 %v6594
    %v6672 = vunpack.c.h.b16 %v6594
    %v6673 = vunpack.c.l.b16 %v6595
    %v6674 = vunpack.c.h.b16 %v6595
    %v6675 = vunpack.c.l.b16 %v6596
    %v6676 = vunpack.c.h.b16 %v6596
    %v6677 = vunpack.c.l.b16 %v6597
    %v6678 = vunpack.c.h.b16 %v6597
    %v6679 = vunpack.c.l.b16 %v6598
    %v6680 = vunpack.c.h.b16 %v6598
    %v6681 = vunpack.c.l.b16 %v6599
    %v6682 = vunpack.c.h.b16 %v6599
    %v6683 = vunpack.c.l.b16 %v6600
    %v6684 = vunpack.c.h.b16 %v6600
    %v6685 = vunpack.c.l.b16 %v6601
    %v6686 = vunpack.c.h.b16 %v6601
    %v6687 = vunpack.c.l.b16 %v6602
    %v6688 = vunpack.c.h.b16 %v6602
    %v6689 = vunpack.c.l.b16 %v6603
    %v6690 = vunpack.c.h.b16 %v6603
    %v6691 = vunpack.c.l.b16 %v6604
    %v6692 = vunpack.c.h.b16 %v6604
    %v6693 = vunpack.c.l.b16 %v6605
    %v6694 = vunpack.c.h.b16 %v6605
    %v6695 = vpack.c.b16 %v6647, %v6645
    %v6696 = vpack.c.b16 %v6648, %v6646
    %v6697 = vpack.c.b16 %v6651, %v6649
    %v6698 = vpack.c.b16 %v6652, %v6650
    %v6699 = vpack.c.b16 %v6655, %v6653
    %v6700 = vpack.c.b16 %v6656, %v6654
    %v6701 = vpack.c.b16 %v6659, %v6657
    %v6702 = vpack.c.b16 %v6660, %v6658
    %v6703 = vpack.c.b16 %v6663, %v6661
    %v6704 = vpack.c.b16 %v6664, %v6662
    %v6705 = vpack.c.b16 %v6667, %v6665
    %v6706 = vpack.c.b16 %v6668, %v6666
    %v6707 = vpack.c.b16 %v6671, %v6669
    %v6708 = vpack.c.b16 %v6672, %v6670
    %v6709 = vpack.c.b16 %v6675, %v6673
    %v6710 = vpack.c.b16 %v6676, %v6674
    %v6711 = vpack.c.b16 %v6679, %v6677
    %v6712 = vpack.c.b16 %v6680, %v6678
    %v6713 = vpack.c.b16 %v6683, %v6681
    %v6714 = vpack.c.b16 %v6684, %v6682
    %v6715 = vpack.c.b16 %v6687, %v6685
    %v6716 = vpack.c.b16 %v6688, %v6686
    %v6717 = vpack.c.b16 %v6691, %v6689
    %v6718 = vpack.c.b16 %v6692, %v6690
    %v6719 = vpack.c.b16 %v6693, %v6693
    %v6720 = vpack.c.b16 %v6694, %v6694
    %vm6745 = vcmask 588800
    %v6747 = vsel %vm6745, %v6608, 0
    %v6750 = vsel %vm1548, %v6719, 0
    %v6753 = vsel %vm1548, %v6720, 0
    %6755 = vmatprep.subr.bf16.mxu0 %v6710
    %6756 = vmatpush1.bf16.msra.mxu0 %v6709
    %6757 = vmatprep.subr.bf16.mxu0 %v6708
    %6758 = vmatpush1.bf16.msra.mxu0 %v6707
    %6759 = vmatprep.subr.bf16.mxu0 %v6706
    %6760 = vmatpush1.bf16.msra.mxu0 %v6705
    %6761 = vmatprep.subr.bf16.mxu0 %v6704
    %6762 = vmatpush1.bf16.msra.mxu0 %v6703
    %6763 = vmatprep.subr.bf16.mxu0 %v6702
    %6764 = vmatpush1.bf16.msra.mxu0 %v6701
    %6765 = vmatprep.subr.bf16.mxu0 %v6700
    %6766 = vmatpush1.bf16.msra.mxu0 %v6699
    %6767 = vmatprep.subr.bf16.mxu0 %v6698
    %6768 = vmatpush1.bf16.msra.mxu0 %v6697
    %6769 = vmatprep.subr.bf16.mxu0 %v6696
    %6770 = vmatpush1.bf16.msra.mxu0 %v6695
    %6771 = vmatprep.subr.bf16.mxu0 0
    %6772 = vmatpush2.bf16.msra.mxu0 0
    %6773 = vmatprep.subr.bf16.mxu0 0
    %6774 = vmatpush2.bf16.msra.mxu0 0
    %6775 = vmatprep.subr.bf16.mxu0 0
    %6776 = vmatpush2.bf16.msra.mxu0 0
    %6777 = vmatprep.subr.bf16.mxu0 %v6753
    %6778 = vmatpush2.bf16.msra.mxu0 %v6750
    %6779 = vmatprep.subr.bf16.mxu0 %v6718
    %6780 = vmatpush2.bf16.msra.mxu0 %v6717
    %6781 = vmatprep.subr.bf16.mxu0 %v6716
    %6782 = vmatpush2.bf16.msra.mxu0 %v6715
    %6783 = vmatprep.subr.bf16.mxu0 %v6714
    %6784 = vmatpush2.bf16.msra.mxu0 %v6713
    %6785 = vmatprep.subr.bf16.mxu0 %v6712
    %6786 = vmatpush2.bf16.msra.mxu0 %v6711
    %6787 = vmatprep.mubr.bf16.mxu0 %v6747
    %6788 = vmatmul.mubr.bf16.gmra.mxu0 %v6607
    %v6789 = vpop.f32.mrf.mxu0
    %v6790 = vadd.f32 %v6613, %v6789
    %v6791 = vpop.f32.mrf.mxu0
    %v6792 = vadd.f32 %v6617, %v6791
    %v6793 = vpop.f32.mrf.mxu0
    %v6794 = vpop.f32.mrf.mxu0
    %6795 = vdwg.mxu0
    %v6796 = vmax.f32 %v6790, 0.0
    %v6797 = vmax.f32 %v6792, 0.0
    %v6798 = vld [vmem:[%s19] sm:$0xf]
    %v6799 = vld [vmem:[%s19 + $0x4] sm:$0xf]
    %v6800 = vld [vmem:[%s19 + $0x8] sm:$0xf]
    %v6801 = vld [vmem:[%s19 + $0xc] sm:$0xf]
    %v6802 = vld [vmem:[%s19 + $0x10] sm:$0xf]
    %v6803 = vld [vmem:[%s19 + $0x14] sm:$0xf]
    %v6804 = vld [vmem:[%s19 + $0x18] sm:$0xf]
    %v6805 = vld [vmem:[%s19 + $0x1c] sm:$0xf]
    %v6806 = vld [vmem:[%s19 + $0x20] sm:$0xf]
    %v6807 = vld [vmem:[%s19 + $0x24] sm:$0xf]
    %v6808 = vld [vmem:[%s19 + $0x28] sm:$0xf]
    %v6809 = vld [vmem:[%s19 + $0x2c] sm:$0xf]
    %v6810 = vld [vmem:[%s19 + $0x30] sm:$0xf]
    %v6811 = vld [vmem:[%s19 + $0x34] sm:$0xf]
    %v6812 = vld [vmem:[%s19 + $0x38] sm:$0xf]
    %v6813 = vld [vmem:[%s19 + $0x3c] sm:$0xf]
    %v6814 = vld [vmem:[%s19 + $0x40] sm:$0xf]
    %v6815 = vld [vmem:[%s19 + $0x44] sm:$0xf]
    %v6816 = vld [vmem:[%s19 + $0x48] sm:$0x7]
    %v6817 = vld [vmem:[%s20] sm:$0x1]
    %v6818 = vpack.c.bf16 %v6796, %v6796
    %v6819 = vpack.c.bf16 %v6797, %v6797
    %v6821 = vlaneseq
    %v6822 = vshrl.u32 %v6821, 7
    %v6823 = vsub.s32 0, %v6822
    %v6824 = vrot.slane %v6817, %v6823
    %v6845 = vunpack.c.l.b16 %v6798
    %v6846 = vunpack.c.l.b16 %v6799
    %v6847 = vunpack.c.l.b16 %v6800
    %v6848 = vunpack.c.l.b16 %v6801
    %v6849 = vunpack.c.l.b16 %v6802
    %v6850 = vunpack.c.l.b16 %v6803
    %v6851 = vunpack.c.l.b16 %v6804
    %v6852 = vunpack.c.l.b16 %v6805
    %v6853 = vunpack.c.l.b16 %v6806
    %v6854 = vunpack.c.l.b16 %v6807
    %v6855 = vunpack.c.l.b16 %v6808
    %v6856 = vunpack.c.l.b16 %v6809
    %v6857 = vunpack.c.l.b16 %v6810
    %v6858 = vunpack.c.l.b16 %v6811
    %v6859 = vunpack.c.l.b16 %v6812
    %v6860 = vunpack.c.l.b16 %v6813
    %v6861 = vunpack.c.l.b16 %v6814
    %v6862 = vunpack.c.l.b16 %v6815
    %v6863 = vunpack.c.l.b16 %v6816
    %v6864 = vpack.c.b16 %v6846, %v6845
    %v6865 = vpack.c.b16 %v6848, %v6847
    %v6866 = vpack.c.b16 %v6850, %v6849
    %v6867 = vpack.c.b16 %v6852, %v6851
    %v6868 = vpack.c.b16 %v6854, %v6853
    %v6869 = vpack.c.b16 %v6856, %v6855
    %v6870 = vpack.c.b16 %v6858, %v6857
    %v6871 = vpack.c.b16 %v6860, %v6859
    %v6872 = vpack.c.b16 %v6862, %v6861
    %v6873 = vpack.c.b16 %v6863, %v6863
    %vm6883 = vcmask 179200
    %v6885 = vsel %vm6883, %v6819, 0
    %v6888 = vsel %vm2794, %v6873, 0
    %6890 = vmatprep.subr.bf16.mxu0 0
    %6891 = vmatpush1.bf16.msra.mxu0 %v6871
    %6892 = vmatprep.subr.bf16.mxu0 0
    %6893 = vmatpush1.bf16.msra.mxu0 %v6870
    %6894 = vmatprep.subr.bf16.mxu0 0
    %6895 = vmatpush1.bf16.msra.mxu0 %v6869
    %6896 = vmatprep.subr.bf16.mxu0 0
    %6897 = vmatpush1.bf16.msra.mxu0 %v6868
    %6898 = vmatprep.subr.bf16.mxu0 0
    %6899 = vmatpush1.bf16.msra.mxu0 %v6867
    %6900 = vmatprep.subr.bf16.mxu0 0
    %6901 = vmatpush1.bf16.msra.mxu0 %v6866
    %6902 = vmatprep.subr.bf16.mxu0 0
    %6903 = vmatpush1.bf16.msra.mxu0 %v6865
    %6904 = vmatprep.subr.bf16.mxu0 0
    %6905 = vmatpush1.bf16.msra.mxu0 %v6864
    %6906 = vmatprep.subr.bf16.mxu0 0
    %6907 = vmatpush2.bf16.msra.mxu0 0
    %6908 = vmatprep.subr.bf16.mxu0 0
    %6909 = vmatpush2.bf16.msra.mxu0 0
    %6910 = vmatprep.subr.bf16.mxu0 0
    %6911 = vmatpush2.bf16.msra.mxu0 0
    %6912 = vmatprep.subr.bf16.mxu0 0
    %6913 = vmatpush2.bf16.msra.mxu0 0
    %6914 = vmatprep.subr.bf16.mxu0 0
    %6915 = vmatpush2.bf16.msra.mxu0 0
    %6916 = vmatprep.subr.bf16.mxu0 0
    %6917 = vmatpush2.bf16.msra.mxu0 0
    %6918 = vmatprep.subr.bf16.mxu0 0
    %6919 = vmatpush2.bf16.msra.mxu0 %v6888
    %6920 = vmatprep.subr.bf16.mxu0 0
    %6921 = vmatpush2.bf16.msra.mxu0 %v6872
    %6922 = vmatprep.mubr.bf16.mxu0 %v6885
    %6923 = vmatmul.mubr.bf16.gmra.mxu0 %v6818
    %v6924 = vpop.f32.mrf.mxu0
    %v6925 = vadd.f32 %v6824, %v6924
    %v6926 = vpop.f32.mrf.mxu0
    %v6927 = vpop.f32.mrf.mxu0
    %v6928 = vpop.f32.mrf.mxu0
    %6929 = vdwg.mxu0
    %v6930 = vmax.f32 %v6925, 0.0
    %v6931 = vld [vmem:[%s21] sm:$0xf]
    %v6932 = vld [vmem:[%s21 + $0x4] sm:$0xf]
    %v6933 = vld [vmem:[%s21 + $0x8] sm:$0xf]
    %v6934 = vld [vmem:[%s21 + $0xc] sm:$0xf]
    %v6935 = vld [vmem:[%s21 + $0x10] sm:$0xf]
    %v6936 = vld [vmem:[%s21 + $0x14] sm:$0xf]
    %v6937 = vld [vmem:[%s21 + $0x18] sm:$0xf]
    %v6938 = vld [vmem:[%s21 + $0x1c] sm:$0xf]
    %v6939 = vld [vmem:[%s21 + $0x20] sm:$0xf]
    %v6940 = vld [vmem:[%s21 + $0x24] sm:$0xf]
    %v6941 = vld [vmem:[%s21 + $0x28] sm:$0xf]
    %v6942 = vld [vmem:[%s21 + $0x2c] sm:$0xf]
    %v6943 = vld [vmem:[%s21 + $0x30] sm:$0x3]
    %v6944 = vld [vmem:[%s22] sm:$0x1]
    %v6945 = vpack.c.bf16 %v6930, %v6930
    %v6947 = vlaneseq
    %v6948 = vshrl.u32 %v6947, 7
    %v6949 = vsub.s32 0, %v6948
    %v6950 = vrot.slane %v6944, %v6949
    %v6965 = vunpack.c.l.b16 %v6931
    %v6966 = vunpack.c.l.b16 %v6932
    %v6967 = vunpack.c.l.b16 %v6933
    %v6968 = vunpack.c.l.b16 %v6934
    %v6969 = vunpack.c.l.b16 %v6935
    %v6970 = vunpack.c.l.b16 %v6936
    %v6971 = vunpack.c.l.b16 %v6937
    %v6972 = vunpack.c.l.b16 %v6938
    %v6973 = vunpack.c.l.b16 %v6939
    %v6974 = vunpack.c.l.b16 %v6940
    %v6975 = vunpack.c.l.b16 %v6941
    %v6976 = vunpack.c.l.b16 %v6942
    %v6977 = vunpack.c.l.b16 %v6943
    %v6978 = vpack.c.b16 %v6966, %v6965
    %v6979 = vpack.c.b16 %v6968, %v6967
    %v6980 = vpack.c.b16 %v6970, %v6969
    %v6981 = vpack.c.b16 %v6972, %v6971
    %v6982 = vpack.c.b16 %v6974, %v6973
    %v6983 = vpack.c.b16 %v6976, %v6975
    %v6984 = vpack.c.b16 %v6977, %v6977
    %vm6991 = vcmask 818176
    %v6993 = vsel %vm6991, %v6945, 0
    %v6996 = vsel %vm3843, %v6984, 0
    %6998 = vmatprep.subr.bf16.mxu0 0
    %6999 = vmatpush1.bf16.msra.mxu0 0
    %7000 = vmatprep.subr.bf16.mxu0 0
    %7001 = vmatpush1.bf16.msra.mxu0 %v6996
    %7002 = vmatprep.subr.bf16.mxu0 0
    %7003 = vmatpush1.bf16.msra.mxu0 %v6983
    %7004 = vmatprep.subr.bf16.mxu0 0
    %7005 = vmatpush1.bf16.msra.mxu0 %v6982
    %7006 = vmatprep.subr.bf16.mxu0 0
    %7007 = vmatpush1.bf16.msra.mxu0 %v6981
    %7008 = vmatprep.subr.bf16.mxu0 0
    %7009 = vmatpush1.bf16.msra.mxu0 %v6980
    %7010 = vmatprep.subr.bf16.mxu0 0
    %7011 = vmatpush1.bf16.msra.mxu0 %v6979
    %7012 = vmatprep.subr.bf16.mxu0 0
    %7013 = vmatpush1.bf16.msra.mxu0 %v6978
    %7014 = vmatprep.subr.bf16.mxu0 0
    %7015 = vmatpush2.bf16.msra.mxu0 0
    %7016 = vmatprep.subr.bf16.mxu0 0
    %7017 = vmatpush2.bf16.msra.mxu0 0
    %7018 = vmatprep.subr.bf16.mxu0 0
    %7019 = vmatpush2.bf16.msra.mxu0 0
    %7020 = vmatprep.subr.bf16.mxu0 0
    %7021 = vmatpush2.bf16.msra.mxu0 0
    %7022 = vmatprep.subr.bf16.mxu0 0
    %7023 = vmatpush2.bf16.msra.mxu0 0
    %7024 = vmatprep.subr.bf16.mxu0 0
    %7025 = vmatpush2.bf16.msra.mxu0 0
    %7026 = vmatprep.subr.bf16.mxu0 0
    %7027 = vmatpush2.bf16.msra.mxu0 0
    %7028 = vmatprep.subr.bf16.mxu0 0
    %7029 = vmatpush2.bf16.msra.mxu0 0
    %7030 = vmatprep.mubr.bf16.mxu0 0
    %7031 = vmatmul.mubr.bf16.gmra.mxu0 %v6993
    %v7032 = vpop.f32.mrf.mxu0
    %v7033 = vadd.f32 %v6950, %v7032
    %v7034 = vpop.f32.mrf.mxu0
    %v7035 = vpop.f32.mrf.mxu0
    %v7036 = vpop.f32.mrf.mxu0
    %7037 = vdwg.mxu0
    %v7038 = vmax.f32 %v7033, 0.0
    %v7039 = vld [vmem:[%s23] sm:$0xf]
    %v7040 = vld [vmem:[%s23 + $0x4] sm:$0xf]
    %v7041 = vld [vmem:[%s23 + $0x8] sm:$0xf]
    %v7042 = vld [vmem:[%s23 + $0xc] sm:$0xf]
    %v7043 = vld [vmem:[%s23 + $0x10] sm:$0xf]
    %v7044 = vld [vmem:[%s23 + $0x14] sm:$0xf]
    %v7045 = vld [vmem:[%s23 + $0x18] sm:$0x1]
    %v7046 = vld [vmem:[%s24] sm:$0x1]
    %v7047 = vpack.c.bf16 %v7038, %v7038
    %v7049 = vlaneseq
    %v7050 = vshrl.u32 %v7049, 7
    %v7051 = vsub.s32 0, %v7050
    %v7052 = vrot.slane %v7046, %v7051
    %v7061 = vunpack.c.l.b16 %v7039
    %v7062 = vunpack.c.l.b16 %v7040
    %v7063 = vunpack.c.l.b16 %v7041
    %v7064 = vunpack.c.l.b16 %v7042
    %v7065 = vunpack.c.l.b16 %v7043
    %v7066 = vunpack.c.l.b16 %v7044
    %v7067 = vunpack.c.l.b16 %v7045
    %v7068 = vpack.c.b16 %v7062, %v7061
    %v7069 = vpack.c.b16 %v7064, %v7063
    %v7070 = vpack.c.b16 %v7066, %v7065
    %v7071 = vpack.c.b16 %v7067, %v7067
    %vm7075 = vcmask 408576
    %v7077 = vsel %vm7075, %v7047, 0
    %v7080 = vsel %vm4738, %v7071, 0
    %7082 = vmatprep.subr.bf16.mxu0 0
    %7083 = vmatpush1.bf16.msra.mxu0 0
    %7084 = vmatprep.subr.bf16.mxu0 0
    %7085 = vmatpush1.bf16.msra.mxu0 0
    %7086 = vmatprep.subr.bf16.mxu0 0
    %7087 = vmatpush1.bf16.msra.mxu0 0
    %7088 = vmatprep.subr.bf16.mxu0 0
    %7089 = vmatpush1.bf16.msra.mxu0 0
    %7090 = vmatprep.subr.bf16.mxu0 0
    %7091 = vmatpush1.bf16.msra.mxu0 %v7080
    %7092 = vmatprep.subr.bf16.mxu0 0
    %7093 = vmatpush1.bf16.msra.mxu0 %v7070
    %7094 = vmatprep.subr.bf16.mxu0 0
    %7095 = vmatpush1.bf16.msra.mxu0 %v7069
    %7096 = vmatprep.subr.bf16.mxu0 0
    %7097 = vmatpush1.bf16.msra.mxu0 %v7068
    %7098 = vmatprep.subr.bf16.mxu0 0
    %7099 = vmatpush2.bf16.msra.mxu0 0
    %7100 = vmatprep.subr.bf16.mxu0 0
    %7101 = vmatpush2.bf16.msra.mxu0 0
    %7102 = vmatprep.subr.bf16.mxu0 0
    %7103 = vmatpush2.bf16.msra.mxu0 0
    %7104 = vmatprep.subr.bf16.mxu0 0
    %7105 = vmatpush2.bf16.msra.mxu0 0
    %7106 = vmatprep.subr.bf16.mxu0 0
    %7107 = vmatpush2.bf16.msra.mxu0 0
    %7108 = vmatprep.subr.bf16.mxu0 0
    %7109 = vmatpush2.bf16.msra.mxu0 0
    %7110 = vmatprep.subr.bf16.mxu0 0
    %7111 = vmatpush2.bf16.msra.mxu0 0
    %7112 = vmatprep.subr.bf16.mxu0 0
    %7113 = vmatpush2.bf16.msra.mxu0 0
    %7114 = vmatprep.mubr.bf16.mxu0 0
    %7115 = vmatmul.mubr.bf16.gmra.mxu0 %v7077
    %v7116 = vpop.f32.mrf.mxu0
    %v7117 = vadd.f32 %v7052, %v7116
    %v7118 = vpop.f32.mrf.mxu0
    %v7119 = vpop.f32.mrf.mxu0
    %v7120 = vpop.f32.mrf.mxu0
    %7121 = vdwg.mxu0
    %v7122 = vmax.f32 %v7117, 0.0
    %v7123 = vld [vmem:[%s25] sm:$0xf]
    %v7124 = vld [vmem:[%s25 + $0x4] sm:$0xf]
    %v7125 = vld [vmem:[%s25 + $0x8] sm:$0xf]
    %v7126 = vld [vmem:[%s25 + $0xc] sm:$0x1]
    %v7127 = vld [vmem:[%s26] sm:$0x1]
    %v7128 = vpack.c.bf16 %v7122, %v7122
    %v7130 = vlaneseq
    %v7131 = vshrl.u32 %v7130, 7
    %v7132 = vsub.s32 0, %v7131
    %v7133 = vrot.slane %v7127, %v7132
    %v7139 = vunpack.c.l.b16 %v7123
    %v7140 = vunpack.c.l.b16 %v7124
    %v7141 = vunpack.c.l.b16 %v7125
    %v7142 = vunpack.c.l.b16 %v7126
    %v7143 = vpack.c.b16 %v7140, %v7139
    %v7144 = vpack.c.b16 %v7142, %v7141
    %vm7146 = vcmask 203776
    %v7148 = vsel %vm7146, %v7128, 0
    %vm7150 = vcmask 1044480
    %v7151 = vsel %vm1548, 4294967295, 65535
    %v7152 = vsel %vm7150, %v7151, 0
    %v7154 = vand.u32 %v7144, %v7152
    %7156 = vmatprep.subr.bf16.mxu0 0
    %7157 = vmatpush1.bf16.msra.mxu0 0
    %7158 = vmatprep.subr.bf16.mxu0 0
    %7159 = vmatpush1.bf16.msra.mxu0 0
    %7160 = vmatprep.subr.bf16.mxu0 0
    %7161 = vmatpush1.bf16.msra.mxu0 0
    %7162 = vmatprep.subr.bf16.mxu0 0
    %7163 = vmatpush1.bf16.msra.mxu0 0
    %7164 = vmatprep.subr.bf16.mxu0 0
    %7165 = vmatpush1.bf16.msra.mxu0 0
    %7166 = vmatprep.subr.bf16.mxu0 0
    %7167 = vmatpush1.bf16.msra.mxu0 0
    %7168 = vmatprep.subr.bf16.mxu0 0
    %7169 = vmatpush1.bf16.msra.mxu0 %v7154
    %7170 = vmatprep.subr.bf16.mxu0 0
    %7171 = vmatpush1.bf16.msra.mxu0 %v7143
    %7172 = vmatprep.subr.bf16.mxu0 0
    %7173 = vmatpush2.bf16.msra.mxu0 0
    %7174 = vmatprep.subr.bf16.mxu0 0
    %7175 = vmatpush2.bf16.msra.mxu0 0
    %7176 = vmatprep.subr.bf16.mxu0 0
    %7177 = vmatpush2.bf16.msra.mxu0 0
    %7178 = vmatprep.subr.bf16.mxu0 0
    %7179 = vmatpush2.bf16.msra.mxu0 0
    %7180 = vmatprep.subr.bf16.mxu0 0
    %7181 = vmatpush2.bf16.msra.mxu0 0
    %7182 = vmatprep.subr.bf16.mxu0 0
    %7183 = vmatpush2.bf16.msra.mxu0 0
    %7184 = vmatprep.subr.bf16.mxu0 0
    %7185 = vmatpush2.bf16.msra.mxu0 0
    %7186 = vmatprep.subr.bf16.mxu0 0
    %7187 = vmatpush2.bf16.msra.mxu0 0
    %7188 = vmatprep.mubr.bf16.mxu0 0
    %7189 = vmatmul.mubr.bf16.gmra.mxu0 %v7148
    %v7190 = vpop.f32.mrf.mxu0
    %v7191 = vadd.f32 %v7133, %v7190
    %v7192 = vpop.f32.mrf.mxu0
    %v7193 = vpop.f32.mrf.mxu0
    %v7194 = vpop.f32.mrf.mxu0
    %7195 = vdwg.mxu0
    %vm7196 = vcmask 121856
    %7197 = vst.msk [vmem:[#allocation2] sm:$0xff] %vm7196, %v7191
    // Predicated region
    $region110: #{tpu_custom_call.1} parent=1 // pred_check
      _
    $region111: #{tpu_custom_call.1} parent=1 // pred_check_branch
      %7199 = sbr.rel (0) target = $region113
    $region112: #{tpu_custom_call.1} parent=1 // pred_region
      %s7201 = ssub.s32 128, 128
      %7202 = vsyncadd [#allocation3], %s7201
      %s7204 = sshll.u32 [#allocation2], 4
      %s7205 = int_to_ptr.vmem [resolvable:$true] %s7204
      %7207 = dma.vmem_to_hbm [thread:$0]  %s7205, 128, %s27, [#allocation3]
    $region113: #{tpu_custom_call.1} parent=1 // pred_fallthru
      _
    // Predicated region
    $region114: #{tpu_custom_call.1} parent=1 // pred_check
      _
    $region115: #{tpu_custom_call.1} parent=1 // pred_check_branch
      %7209 = sbr.rel (0) target = $region117
    $region116: #{tpu_custom_call.1} parent=1 // pred_region
      %7210 = dma.done [#allocation3], 128
    $region117: #{tpu_custom_call.1} parent=1 // pred_fallthru
      _
    %7211 = vsyncpa [#allocation3], 1

</llo_original>
